<compile_context>
chip_gen: v6e
topology: v6e:2x2x1
jax: 0.10.0
libtpu: 0.0.40
codegen_flags: <defaults>
</compile_context>

<pallas_src>
import math
import functools

import jax
import jax.numpy as jnp
from jax.experimental import pallas as pl
from jax.experimental.pallas import tpu as pltpu


MXU_DTYPE = jnp.bfloat16                     # MXU-input dtype; accumulation stays f32
_VMEM = pl.BlockSpec(memory_space=pltpu.MemorySpace.VMEM)


# ----------------------------- in-kernel helpers -----------------------------

def _mm_bf16(a_bf, w_bf):
    """MXU matmul: bf16 inputs, f32 accumulation."""
    return jnp.dot(a_bf, w_bf, preferred_element_type=jnp.float32)


def _layernorm(x, g, b, eps=1e-5):
    mean = jnp.mean(x, axis=-1, keepdims=True)
    var = jnp.mean((x - mean) ** 2, axis=-1, keepdims=True)
    return (x - mean) * jax.lax.rsqrt(var + eps) * g + b


# ----------------------------- the single fused kernel -----------------------------

def _gt_net_kernel(*refs, num_heads, layer_dims, readout_dims):
    """Entire GraphTransformerNet forward, single grid point, VMEM/vreg-resident."""
    n_layers = len(layer_dims)
    n_in = 4 + 3 * n_layers + 2
    xcat_ref, adj_ref, w_emb_ref, b_emb_ref = refs[0:4]
    layer_refs = refs[4:4 + 3 * n_layers]
    w_ro_ref, b_ro_ref = refs[4 + 3 * n_layers:n_in]
    o_ref = refs[n_in]
    attn_scr = refs[n_in + 1]                          # VMEM scratch [N, max_out_dim] f32

    adj = adj_ref[...]                                 # [N, N] f32 edge mask (dst, src)

    # --- fused embedding_h + embedding_lap_pos_enc (+ add); in_feat_dropout = identity ---
    h = _mm_bf16(xcat_ref[...].astype(MXU_DTYPE), w_emb_ref[...]) + b_emb_ref[...]

    # --- GraphTransformer layers, statically unrolled, no HBM round-trips ---
    for li, (d_in, d_out) in enumerate(layer_dims):
        wA_ref, wf2_ref, pv_ref = layer_refs[3 * li:3 * li + 3]
        hd = d_out // num_heads
        scale = 1.0 / math.sqrt(hd)

        # bf16 weight slab slices (static): wqkv | wo | wf1
        wqkv = wA_ref[0:d_in, 0:3 * d_out]
        wo = wA_ref[0:d_out, 3 * d_out:4 * d_out]
        wf1 = wA_ref[0:d_out, 4 * d_out:6 * d_out]
        # f32 bias / LayerNorm slab rows (static sublane slices, lane-dense prefixes)
        bqkv = pv_ref[0:1, 0:3 * d_out]
        bo = pv_ref[1:2, 0:d_out]
        bf1 = pv_ref[2:3, 0:2 * d_out]
        bf2 = pv_ref[3:4, 0:d_out]
        ln1g = pv_ref[4:5, 0:d_out]
        ln1b = pv_ref[5:6, 0:d_out]
        ln2g = pv_ref[6:7, 0:d_out]
        ln2b = pv_ref[7:8, 0:d_out]

        h_in1 = h                                      # residual (reference assumes d_in == d_out)

        # fused Q/K/V projection: single MXU matmul against the [d_in, 3*d_out] weight
        qkv = _mm_bf16(h_in1.astype(MXU_DTYPE), wqkv) + bqkv          # [N, 3*d_out] f32
        q_bf = qkv[:, 0:d_out].astype(MXU_DTYPE)                      # cast hoisted (once)
        kT_bf = jnp.transpose(qkv[:, d_out:2 * d_out]).astype(MXU_DTYPE)   # K transposed once
        v = qkv[:, 2 * d_out:3 * d_out]                               # stays f32 for parity

        # multi-head masked clamp/exp attention (heads statically unrolled)
        for hh in range(num_heads):
            lo, hi = hh * hd, (hh + 1) * hd
            # scores[i, j] = Q[i] . K[j] / sqrt(hd)   (dst i, src j); no per-head transpose
            scores = _mm_bf16(q_bf[:, lo:hi], kT_bf[lo:hi, :]) * scale     # [N, N]
            scores = jnp.clip(scores, -5.0, 5.0)
            e = jnp.exp(scores) * adj                                      # mask to edges
            num = jnp.dot(e, v[:, lo:hi], preferred_element_type=jnp.float32)  # f32 numerator
            den = jnp.sum(e, axis=-1, keepdims=True)                       # [N, 1] f32
            attn_scr[:, lo:hi] = num / (den + 1e-6)    # head -> static lane offset in scratch

        attn = attn_scr[:, 0:d_out]                    # [N, d_out]

        # O projection + residual + LayerNorm1
        hq = _mm_bf16(attn.astype(MXU_DTYPE), wo) + bo
        hq = h_in1 + hq
        hq = _layernorm(hq, ln1g, ln1b)

        # FFN (2-layer Linear approximation of the KAN FFN) + residual + LayerNorm2
        f = jnp.maximum(_mm_bf16(hq.astype(MXU_DTYPE), wf1) + bf1, 0.0)
        f = _mm_bf16(f.astype(MXU_DTYPE), wf2_ref[...]) + bf2
        hq2 = _layernorm(hq + f, ln2g, ln2b)

        # net-level `h = conv(g, h).relu()`
        h = jnp.maximum(hq2, 0.0)

    # --- MLPReadout: out_dim -> out_dim//2 -> out_dim//4 -> n_classes, ReLUs between ---
    d0, d1, d2 = readout_dims
    d_last = layer_dims[-1][1]
    x = jnp.maximum(
        _mm_bf16(h.astype(MXU_DTYPE), w_ro_ref[0:d_last, 0:d0]) + b_ro_ref[0:1, 0:d0], 0.0)
    x = jnp.maximum(
        _mm_bf16(x.astype(MXU_DTYPE), w_ro_ref[0:d0, d0:d0 + d1]) + b_ro_ref[1:2, 0:d1], 0.0)
    o_ref[...] = (_mm_bf16(x.astype(MXU_DTYPE), w_ro_ref[0:d1, d0 + d1:d0 + d1 + d2])
                  + b_ro_ref[2:3, 0:d2])


# ----------------------------- host wrapper -----------------------------

def graph_transformer_net_forward(params, h_feat, adj, h_lap_pos_enc, *, num_heads):
    n = h_feat.shape[0]
    hidden = params["w_emb"].shape[1]

    layer_dims = []
    d_prev = hidden
    for lp in params["layers"]:
        d_out = lp["wf2"].shape[1]
        layer_dims.append((d_prev, d_out))
        d_prev = d_out
    layer_dims = tuple(layer_dims)
    d_last = layer_dims[-1][1]
    d0, d1 = d_last // 2, d_last // 4
    n_classes = params["w_ro"].shape[1] - d0 - d1
    max_d = max(d for _, d in layer_dims)

    # concat node features with lap pos-enc so the embedding is ONE matmul in-kernel
    xcat = jnp.concatenate([h_feat, h_lap_pos_enc.astype(jnp.float32)], axis=1)

    inputs = [xcat, adj, params["w_emb"], params["b_emb"]]
    for lp in params["layers"]:
        inputs += [lp["wA"], lp["wf2"], lp["pv"]]
    inputs += [params["w_ro"], params["b_ro"]]

    kernel = functools.partial(_gt_net_kernel, num_heads=num_heads,
                               layer_dims=layer_dims,
                               readout_dims=(d0, d1, n_classes))
    return pl.pallas_call(
        kernel,
        out_shape=jax.ShapeDtypeStruct((n, n_classes), jnp.float32),
        in_specs=[_VMEM] * len(inputs),
        out_specs=_VMEM,
        scratch_shapes=[pltpu.VMEM((n, max_d), jnp.float32)],
    )(*inputs)


# ----------------------------- parameter init (packed slabs) -----------------------------

def xavier_uniform(key, fan_in, fan_out):
    limit = math.sqrt(6.0 / (fan_in + fan_out))
    return jax.random.uniform(key, (fan_in, fan_out), jnp.float32, -limit, limit)


def init_gt_layer(key, in_dim, out_dim):
    ks = jax.random.split(key, 6)
    wq = xavier_uniform(ks[0], in_dim, out_dim)
    wk = xavier_uniform(ks[1], in_dim, out_dim)
    wv = xavier_uniform(ks[2], in_dim, out_dim)
    wo = xavier_uniform(ks[3], out_dim, out_dim)
    wf1 = xavier_uniform(ks[4], out_dim, 2 * out_dim)
    wf2 = xavier_uniform(ks[5], 2 * out_dim, out_dim)

    # bf16 weight slab: [wqkv | wo | wf1], rows padded to a common height
    r = max(in_dim, out_dim)
    pad_rows = lambda w: jnp.pad(w, ((0, r - w.shape[0]), (0, 0)))
    wqkv = jnp.concatenate([wq, wk, wv], axis=1)                       # [in, 3*out]
    wA = jnp.concatenate([pad_rows(wqkv), pad_rows(wo), pad_rows(wf1)],
                         axis=1).astype(MXU_DTYPE)                     # [r, 6*out]

    # f32 bias / LayerNorm slab: one row per parameter vector, width = 3*out_dim
    width = 3 * out_dim
    row = lambda v: jnp.pad(v.reshape(1, -1), ((0, 0), (0, width - v.size)))
    pv = jnp.concatenate([
        row(jnp.zeros((3 * out_dim,), jnp.float32)),   # 0: bqkv
        row(jnp.zeros((out_dim,), jnp.float32)),       # 1: bo
        row(jnp.zeros((2 * out_dim,), jnp.float32)),   # 2: bf1
        row(jnp.zeros((out_dim,), jnp.float32)),       # 3: bf2
        row(jnp.ones((out_dim,), jnp.float32)),        # 4: ln1 gamma
        row(jnp.zeros((out_dim,), jnp.float32)),       # 5: ln1 beta
        row(jnp.ones((out_dim,), jnp.float32)),        # 6: ln2 gamma
        row(jnp.zeros((out_dim,), jnp.float32)),       # 7: ln2 beta
    ], axis=0)

    return {"wA": wA, "wf2": wf2.astype(MXU_DTYPE), "pv": pv}


def init_params(key, in_dim, hidden_dim, out_dim, n_classes, pos_enc_dim, n_layers):
    ks = jax.random.split(key, 2 + n_layers + 3)

    # fused embedding: [h | lap] @ [w_h ; w_lap] + (b_h + b_lap)  (both biases zero-init)
    wh = xavier_uniform(ks[0], in_dim, hidden_dim)
    wl = xavier_uniform(ks[1], pos_enc_dim, hidden_dim)
    params = {
        "w_emb": jnp.concatenate([wh, wl], axis=0).astype(MXU_DTYPE),
        "b_emb": jnp.zeros((1, hidden_dim), jnp.float32),
        "layers": [],
    }

    dims = [(hidden_dim, hidden_dim)] * (n_layers - 1) + [(hidden_dim, out_dim)]
    for i, (di, do) in enumerate(dims):
        params["layers"].append(init_gt_layer(ks[2 + i], di, do))

    # MLPReadout: out_dim -> out_dim//2 -> out_dim//4 -> n_classes, packed into one slab
    d0, d1 = out_dim // 2, out_dim // 4
    w0 = xavier_uniform(ks[2 + n_layers + 0], out_dim, d0)
    w1 = xavier_uniform(ks[2 + n_layers + 1], d0, d1)
    w2 = xavier_uniform(ks[2 + n_layers + 2], d1, n_classes)
    params["w_ro"] = jnp.concatenate(
        [w0,
         jnp.pad(w1, ((0, out_dim - d0), (0, 0))),
         jnp.pad(w2, ((0, out_dim - d1), (0, 0)))],
        axis=1).astype(MXU_DTYPE)                                      # [out_dim, d0+d1+n_classes]
    params["b_ro"] = jnp.zeros((3, max(d0, d1, n_classes)), jnp.float32)
    return params


# ----------------------------- main -----------------------------

if __name__ == "__main__":
    N = 16            # number of graph nodes
    IN_DIM = 8        # in_dim
    HIDDEN = 32       # hidden_dim
    OUT_DIM = 32      # out_dim
    HEADS = 4         # n_heads
    POS_DIM = 4       # pos_enc_dim
    N_CLASSES = 5
    L = 2             # n_layers

    key = jax.random.PRNGKey(0)
    k_param, k_h, k_lap, k_adj = jax.random.split(key, 4)

    params = init_params(k_param, IN_DIM, HIDDEN, OUT_DIM, N_CLASSES, POS_DIM, L)

    h_feat = jax.random.normal(k_h, (N, IN_DIM), jnp.float32)
    h_lap = jax.random.normal(k_lap, (N, POS_DIM), jnp.float32)
    adj = (jax.random.uniform(k_adj, (N, N)) < 0.3).astype(jnp.float32)
    adj = jnp.maximum(adj, jnp.eye(N, dtype=jnp.float32))   # self-loops (nonzero denominator)

    fwd = jax.jit(functools.partial(graph_transformer_net_forward, num_heads=HEADS))
    out = fwd(params, h_feat, adj, h_lap)
    jax.block_until_ready(out)
    assert out.shape == (N, N_CLASSES)
    print("KERNEL_OK")
</pallas_src>

<mosaic_0001>
module attributes {stable_mosaic.version = 11 : i64} {
  func.func @_gt_net_kernel(%arg0: memref<16x12xf32, #tpu.memory_space<vmem>>, %arg1: memref<16x16xf32, #tpu.memory_space<vmem>>, %arg2: memref<12x32xbf16, #tpu.memory_space<vmem>>, %arg3: memref<1x32xf32, #tpu.memory_space<vmem>>, %arg4: memref<32x192xbf16, #tpu.memory_space<vmem>>, %arg5: memref<64x32xbf16, #tpu.memory_space<vmem>>, %arg6: memref<8x96xf32, #tpu.memory_space<vmem>>, %arg7: memref<32x192xbf16, #tpu.memory_space<vmem>>, %arg8: memref<64x32xbf16, #tpu.memory_space<vmem>>, %arg9: memref<8x96xf32, #tpu.memory_space<vmem>>, %arg10: memref<32x29xbf16, #tpu.memory_space<vmem>>, %arg11: memref<3x16xf32, #tpu.memory_space<vmem>>, %arg12: memref<16x5xf32, #tpu.memory_space<vmem>>, %arg13: memref<16x32xf32, #tpu.memory_space<vmem>>) attributes {dimension_semantics = [], scalar_prefetch = 0 : i64, scratch_operands = 1 : i64, tpu.core_type = #tpu.core_type<tc>} {
    %c0 = arith.constant 0 : index
    %c0_0 = arith.constant 0 : index
    %0 = vector.load %arg1[%c0, %c0_0] : memref<16x16xf32, #tpu.memory_space<vmem>>, vector<16x16xf32>
    %c0_1 = arith.constant 0 : index
    %c0_2 = arith.constant 0 : index
    %1 = vector.load %arg0[%c0_1, %c0_2] : memref<16x12xf32, #tpu.memory_space<vmem>>, vector<16x12xf32>
    %2 = arith.truncf %1 : vector<16x12xf32> to vector<16x12xbf16>
    %c0_3 = arith.constant 0 : index
    %c0_4 = arith.constant 0 : index
    %3 = vector.load %arg2[%c0_3, %c0_4] : memref<12x32xbf16, #tpu.memory_space<vmem>>, vector<12x32xbf16>
    %cst = arith.constant dense<0.000000e+00> : vector<16x32xf32>
    %4 = tpu.matmul %2, %3, %cst {dimension_numbers = #tpu.dot_dimension_numbers<[1], [0], [0], [1], [0, 0, 1, 1], [], []>} : vector<16x12xbf16>, vector<12x32xbf16>, vector<16x32xf32> -> vector<16x32xf32>
    %c0_5 = arith.constant 0 : index
    %c0_6 = arith.constant 0 : index
    %5 = vector.load %arg3[%c0_5, %c0_6] : memref<1x32xf32, #tpu.memory_space<vmem>>, vector<1x32xf32>
    %6 = vector.broadcast %5 : vector<1x32xf32> to vector<16x32xf32>
    %7 = arith.addf %4, %6 : vector<16x32xf32>
    %c0_7 = arith.constant 0 : index
    %c0_8 = arith.constant 0 : index
    %8 = vector.load %arg4[%c0_7, %c0_8] : memref<32x192xbf16, #tpu.memory_space<vmem>>, vector<32x96xbf16>
    %c0_9 = arith.constant 0 : index
    %c96 = arith.constant 96 : index
    %9 = vector.load %arg4[%c0_9, %c96] : memref<32x192xbf16, #tpu.memory_space<vmem>>, vector<32x32xbf16>
    %c0_10 = arith.constant 0 : index
    %c128 = arith.constant 128 : index
    %10 = vector.load %arg4[%c0_10, %c128] : memref<32x192xbf16, #tpu.memory_space<vmem>>, vector<32x64xbf16>
    %c0_11 = arith.constant 0 : index
    %c0_12 = arith.constant 0 : index
    %11 = vector.load %arg6[%c0_11, %c0_12] : memref<8x96xf32, #tpu.memory_space<vmem>>, vector<1x96xf32>
    %c1 = arith.constant 1 : index
    %c0_13 = arith.constant 0 : index
    %12 = vector.load %arg6[%c1, %c0_13] : memref<8x96xf32, #tpu.memory_space<vmem>>, vector<1x32xf32>
    %c2 = arith.constant 2 : index
    %c0_14 = arith.constant 0 : index
    %13 = vector.load %arg6[%c2, %c0_14] : memref<8x96xf32, #tpu.memory_space<vmem>>, vector<1x64xf32>
    %c3 = arith.constant 3 : index
    %c0_15 = arith.constant 0 : index
    %14 = vector.load %arg6[%c3, %c0_15] : memref<8x96xf32, #tpu.memory_space<vmem>>, vector<1x32xf32>
    %c4 = arith.constant 4 : index
    %c0_16 = arith.constant 0 : index
    %15 = vector.load %arg6[%c4, %c0_16] : memref<8x96xf32, #tpu.memory_space<vmem>>, vector<1x32xf32>
    %c5 = arith.constant 5 : index
    %c0_17 = arith.constant 0 : index
    %16 = vector.load %arg6[%c5, %c0_17] : memref<8x96xf32, #tpu.memory_space<vmem>>, vector<1x32xf32>
    %c6 = arith.constant 6 : index
    %c0_18 = arith.constant 0 : index
    %17 = vector.load %arg6[%c6, %c0_18] : memref<8x96xf32, #tpu.memory_space<vmem>>, vector<1x32xf32>
    %c7 = arith.constant 7 : index
    %c0_19 = arith.constant 0 : index
    %18 = vector.load %arg6[%c7, %c0_19] : memref<8x96xf32, #tpu.memory_space<vmem>>, vector<1x32xf32>
    %19 = arith.truncf %7 : vector<16x32xf32> to vector<16x32xbf16>
    %cst_20 = arith.constant dense<0.000000e+00> : vector<16x96xf32>
    %20 = tpu.matmul %19, %8, %cst_20 {dimension_numbers = #tpu.dot_dimension_numbers<[1], [0], [0], [1], [0, 0, 1, 1], [], []>} : vector<16x32xbf16>, vector<32x96xbf16>, vector<16x96xf32> -> vector<16x96xf32>
    %21 = vector.broadcast %11 : vector<1x96xf32> to vector<16x96xf32>
    %22 = arith.addf %20, %21 : vector<16x96xf32>
    %23 = vector.extract_strided_slice %22 {offsets = [0, 0], sizes = [16, 32], strides = [1, 1]} : vector<16x96xf32> to vector<16x32xf32>
    %24 = arith.truncf %23 : vector<16x32xf32> to vector<16x32xbf16>
    %25 = vector.extract_strided_slice %22 {offsets = [0, 32], sizes = [16, 32], strides = [1, 1]} : vector<16x96xf32> to vector<16x32xf32>
    %26 = tpu.transpose %25, [1, 0] : vector<16x32xf32> -> vector<32x16xf32>
    %27 = arith.truncf %26 : vector<32x16xf32> to vector<32x16xbf16>
    %28 = vector.extract_strided_slice %22 {offsets = [0, 64], sizes = [16, 32], strides = [1, 1]} : vector<16x96xf32> to vector<16x32xf32>
    %29 = vector.extract_strided_slice %24 {offsets = [0, 0], sizes = [16, 8], strides = [1, 1]} : vector<16x32xbf16> to vector<16x8xbf16>
    %30 = vector.extract_strided_slice %27 {offsets = [0, 0], sizes = [8, 16], strides = [1, 1]} : vector<32x16xbf16> to vector<8x16xbf16>
    %cst_21 = arith.constant dense<0.000000e+00> : vector<16x16xf32>
    %31 = tpu.matmul %29, %30, %cst_21 {dimension_numbers = #tpu.dot_dimension_numbers<[1], [0], [0], [1], [0, 0, 1, 1], [], []>} : vector<16x8xbf16>, vector<8x16xbf16>, vector<16x16xf32> -> vector<16x16xf32>
    %cst_22 = arith.constant 0.353553385 : f32
    %32 = vector.broadcast %cst_22 : f32 to vector<16x16xf32>
    %33 = arith.mulf %31, %32 : vector<16x16xf32>
    %cst_23 = arith.constant -5.000000e+00 : f32
    %cst_24 = arith.constant 5.000000e+00 : f32
    %34 = vector.broadcast %cst_23 : f32 to vector<16x16xf32>
    %35 = arith.maximumf %34, %33 : vector<16x16xf32>
    %36 = vector.broadcast %cst_24 : f32 to vector<16x16xf32>
    %37 = arith.minimumf %36, %35 : vector<16x16xf32>
    %38 = math.exp %37 : vector<16x16xf32>
    %39 = arith.mulf %38, %0 : vector<16x16xf32>
    %40 = vector.extract_strided_slice %28 {offsets = [0, 0], sizes = [16, 8], strides = [1, 1]} : vector<16x32xf32> to vector<16x8xf32>
    %cst_25 = arith.constant dense<0.000000e+00> : vector<16x8xf32>
    %41 = tpu.matmul %39, %40, %cst_25 {dimension_numbers = #tpu.dot_dimension_numbers<[1], [0], [0], [1], [0, 0, 1, 1], [], []>} : vector<16x16xf32>, vector<16x8xf32>, vector<16x8xf32> -> vector<16x8xf32>
    %cst_26 = arith.constant dense<0.000000e+00> : vector<16xf32>
    %42 = vector.multi_reduction <add>, %39, %cst_26 [1] : vector<16x16xf32> to vector<16xf32>
    %43 = vector.shape_cast %42 : vector<16xf32> to vector<16x1xf32>
    %cst_27 = arith.constant 9.99999997E-7 : f32
    %44 = vector.broadcast %cst_27 : f32 to vector<16x1xf32>
    %45 = arith.addf %43, %44 : vector<16x1xf32>
    %46 = vector.broadcast %45 : vector<16x1xf32> to vector<16x8xf32>
    %47 = arith.divf %41, %46 : vector<16x8xf32>
    %c0_28 = arith.constant 0 : index
    %c0_29 = arith.constant 0 : index
    %48 = vector.load %arg13[%c0_28, %c0_29] : memref<16x32xf32, #tpu.memory_space<vmem>>, vector<16x8xf32>
    tpu.vector_store %arg13[%c0_28, %c0_29], %47 {strides = array<i32>} : memref<16x32xf32, #tpu.memory_space<vmem>>, vector<16x8xf32>,
    %49 = vector.extract_strided_slice %24 {offsets = [0, 8], sizes = [16, 8], strides = [1, 1]} : vector<16x32xbf16> to vector<16x8xbf16>
    %50 = vector.extract_strided_slice %27 {offsets = [8, 0], sizes = [8, 16], strides = [1, 1]} : vector<32x16xbf16> to vector<8x16xbf16>
    %cst_30 = arith.constant dense<0.000000e+00> : vector<16x16xf32>
    %51 = tpu.matmul %49, %50, %cst_30 {dimension_numbers = #tpu.dot_dimension_numbers<[1], [0], [0], [1], [0, 0, 1, 1], [], []>} : vector<16x8xbf16>, vector<8x16xbf16>, vector<16x16xf32> -> vector<16x16xf32>
    %cst_31 = arith.constant 0.353553385 : f32
    %52 = vector.broadcast %cst_31 : f32 to vector<16x16xf32>
    %53 = arith.mulf %51, %52 : vector<16x16xf32>
    %cst_32 = arith.constant -5.000000e+00 : f32
    %cst_33 = arith.constant 5.000000e+00 : f32
    %54 = vector.broadcast %cst_32 : f32 to vector<16x16xf32>
    %55 = arith.maximumf %54, %53 : vector<16x16xf32>
    %56 = vector.broadcast %cst_33 : f32 to vector<16x16xf32>
    %57 = arith.minimumf %56, %55 : vector<16x16xf32>
    %58 = math.exp %57 : vector<16x16xf32>
    %59 = arith.mulf %58, %0 : vector<16x16xf32>
    %60 = vector.extract_strided_slice %28 {offsets = [0, 8], sizes = [16, 8], strides = [1, 1]} : vector<16x32xf32> to vector<16x8xf32>
    %cst_34 = arith.constant dense<0.000000e+00> : vector<16x8xf32>
    %61 = tpu.matmul %59, %60, %cst_34 {dimension_numbers = #tpu.dot_dimension_numbers<[1], [0], [0], [1], [0, 0, 1, 1], [], []>} : vector<16x16xf32>, vector<16x8xf32>, vector<16x8xf32> -> vector<16x8xf32>
    %cst_35 = arith.constant dense<0.000000e+00> : vector<16xf32>
    %62 = vector.multi_reduction <add>, %59, %cst_35 [1] : vector<16x16xf32> to vector<16xf32>
    %63 = vector.shape_cast %62 : vector<16xf32> to vector<16x1xf32>
    %cst_36 = arith.constant 9.99999997E-7 : f32
    %64 = vector.broadcast %cst_36 : f32 to vector<16x1xf32>
    %65 = arith.addf %63, %64 : vector<16x1xf32>
    %66 = vector.broadcast %65 : vector<16x1xf32> to vector<16x8xf32>
    %67 = arith.divf %61, %66 : vector<16x8xf32>
    %c0_37 = arith.constant 0 : index
    %c8 = arith.constant 8 : index
    %68 = vector.load %arg13[%c0_37, %c8] : memref<16x32xf32, #tpu.memory_space<vmem>>, vector<16x8xf32>
    tpu.vector_store %arg13[%c0_37, %c8], %67 {strides = array<i32>} : memref<16x32xf32, #tpu.memory_space<vmem>>, vector<16x8xf32>,
    %69 = vector.extract_strided_slice %24 {offsets = [0, 16], sizes = [16, 8], strides = [1, 1]} : vector<16x32xbf16> to vector<16x8xbf16>
    %70 = vector.extract_strided_slice %27 {offsets = [16, 0], sizes = [8, 16], strides = [1, 1]} : vector<32x16xbf16> to vector<8x16xbf16>
    %cst_38 = arith.constant dense<0.000000e+00> : vector<16x16xf32>
    %71 = tpu.matmul %69, %70, %cst_38 {dimension_numbers = #tpu.dot_dimension_numbers<[1], [0], [0], [1], [0, 0, 1, 1], [], []>} : vector<16x8xbf16>, vector<8x16xbf16>, vector<16x16xf32> -> vector<16x16xf32>
    %cst_39 = arith.constant 0.353553385 : f32
    %72 = vector.broadcast %cst_39 : f32 to vector<16x16xf32>
    %73 = arith.mulf %71, %72 : vector<16x16xf32>
    %cst_40 = arith.constant -5.000000e+00 : f32
    %cst_41 = arith.constant 5.000000e+00 : f32
    %74 = vector.broadcast %cst_40 : f32 to vector<16x16xf32>
    %75 = arith.maximumf %74, %73 : vector<16x16xf32>
    %76 = vector.broadcast %cst_41 : f32 to vector<16x16xf32>
    %77 = arith.minimumf %76, %75 : vector<16x16xf32>
    %78 = math.exp %77 : vector<16x16xf32>
    %79 = arith.mulf %78, %0 : vector<16x16xf32>
    %80 = vector.extract_strided_slice %28 {offsets = [0, 16], sizes = [16, 8], strides = [1, 1]} : vector<16x32xf32> to vector<16x8xf32>
    %cst_42 = arith.constant dense<0.000000e+00> : vector<16x8xf32>
    %81 = tpu.matmul %79, %80, %cst_42 {dimension_numbers = #tpu.dot_dimension_numbers<[1], [0], [0], [1], [0, 0, 1, 1], [], []>} : vector<16x16xf32>, vector<16x8xf32>, vector<16x8xf32> -> vector<16x8xf32>
    %cst_43 = arith.constant dense<0.000000e+00> : vector<16xf32>
    %82 = vector.multi_reduction <add>, %79, %cst_43 [1] : vector<16x16xf32> to vector<16xf32>
    %83 = vector.shape_cast %82 : vector<16xf32> to vector<16x1xf32>
    %cst_44 = arith.constant 9.99999997E-7 : f32
    %84 = vector.broadcast %cst_44 : f32 to vector<16x1xf32>
    %85 = arith.addf %83, %84 : vector<16x1xf32>
    %86 = vector.broadcast %85 : vector<16x1xf32> to vector<16x8xf32>
    %87 = arith.divf %81, %86 : vector<16x8xf32>
    %c0_45 = arith.constant 0 : index
    %c16 = arith.constant 16 : index
    %88 = vector.load %arg13[%c0_45, %c16] : memref<16x32xf32, #tpu.memory_space<vmem>>, vector<16x8xf32>
    tpu.vector_store %arg13[%c0_45, %c16], %87 {strides = array<i32>} : memref<16x32xf32, #tpu.memory_space<vmem>>, vector<16x8xf32>,
    %89 = vector.extract_strided_slice %24 {offsets = [0, 24], sizes = [16, 8], strides = [1, 1]} : vector<16x32xbf16> to vector<16x8xbf16>
    %90 = vector.extract_strided_slice %27 {offsets = [24, 0], sizes = [8, 16], strides = [1, 1]} : vector<32x16xbf16> to vector<8x16xbf16>
    %cst_46 = arith.constant dense<0.000000e+00> : vector<16x16xf32>
    %91 = tpu.matmul %89, %90, %cst_46 {dimension_numbers = #tpu.dot_dimension_numbers<[1], [0], [0], [1], [0, 0, 1, 1], [], []>} : vector<16x8xbf16>, vector<8x16xbf16>, vector<16x16xf32> -> vector<16x16xf32>
    %cst_47 = arith.constant 0.353553385 : f32
    %92 = vector.broadcast %cst_47 : f32 to vector<16x16xf32>
    %93 = arith.mulf %91, %92 : vector<16x16xf32>
    %cst_48 = arith.constant -5.000000e+00 : f32
    %cst_49 = arith.constant 5.000000e+00 : f32
    %94 = vector.broadcast %cst_48 : f32 to vector<16x16xf32>
    %95 = arith.maximumf %94, %93 : vector<16x16xf32>
    %96 = vector.broadcast %cst_49 : f32 to vector<16x16xf32>
    %97 = arith.minimumf %96, %95 : vector<16x16xf32>
    %98 = math.exp %97 : vector<16x16xf32>
    %99 = arith.mulf %98, %0 : vector<16x16xf32>
    %100 = vector.extract_strided_slice %28 {offsets = [0, 24], sizes = [16, 8], strides = [1, 1]} : vector<16x32xf32> to vector<16x8xf32>
    %cst_50 = arith.constant dense<0.000000e+00> : vector<16x8xf32>
    %101 = tpu.matmul %99, %100, %cst_50 {dimension_numbers = #tpu.dot_dimension_numbers<[1], [0], [0], [1], [0, 0, 1, 1], [], []>} : vector<16x16xf32>, vector<16x8xf32>, vector<16x8xf32> -> vector<16x8xf32>
    %cst_51 = arith.constant dense<0.000000e+00> : vector<16xf32>
    %102 = vector.multi_reduction <add>, %99, %cst_51 [1] : vector<16x16xf32> to vector<16xf32>
    %103 = vector.shape_cast %102 : vector<16xf32> to vector<16x1xf32>
    %cst_52 = arith.constant 9.99999997E-7 : f32
    %104 = vector.broadcast %cst_52 : f32 to vector<16x1xf32>
    %105 = arith.addf %103, %104 : vector<16x1xf32>
    %106 = vector.broadcast %105 : vector<16x1xf32> to vector<16x8xf32>
    %107 = arith.divf %101, %106 : vector<16x8xf32>
    %c0_53 = arith.constant 0 : index
    %c24 = arith.constant 24 : index
    %108 = vector.load %arg13[%c0_53, %c24] : memref<16x32xf32, #tpu.memory_space<vmem>>, vector<16x8xf32>
    tpu.vector_store %arg13[%c0_53, %c24], %107 {strides = array<i32>} : memref<16x32xf32, #tpu.memory_space<vmem>>, vector<16x8xf32>,
    %c0_54 = arith.constant 0 : index
    %c0_55 = arith.constant 0 : index
    %109 = vector.load %arg13[%c0_54, %c0_55] : memref<16x32xf32, #tpu.memory_space<vmem>>, vector<16x32xf32>
    %110 = arith.truncf %109 : vector<16x32xf32> to vector<16x32xbf16>
    %cst_56 = arith.constant dense<0.000000e+00> : vector<16x32xf32>
    %111 = tpu.matmul %110, %9, %cst_56 {dimension_numbers = #tpu.dot_dimension_numbers<[1], [0], [0], [1], [0, 0, 1, 1], [], []>} : vector<16x32xbf16>, vector<32x32xbf16>, vector<16x32xf32> -> vector<16x32xf32>
    %112 = vector.broadcast %12 : vector<1x32xf32> to vector<16x32xf32>
    %113 = arith.addf %111, %112 : vector<16x32xf32>
    %114 = arith.addf %7, %113 : vector<16x32xf32>
    %cst_57 = arith.constant dense<0.000000e+00> : vector<16xf32>
    %115 = vector.multi_reduction <add>, %114, %cst_57 [1] : vector<16x32xf32> to vector<16xf32>
    %116 = vector.shape_cast %115 : vector<16xf32> to vector<16x1xf32>
    %cst_58 = arith.constant 3.200000e+01 : f32
    %117 = vector.broadcast %cst_58 : f32 to vector<16x1xf32>
    %118 = arith.divf %116, %117 : vector<16x1xf32>
    %119 = vector.broadcast %118 : vector<16x1xf32> to vector<16x32xf32>
    %120 = arith.subf %114, %119 : vector<16x32xf32>
    %121 = arith.mulf %120, %120 : vector<16x32xf32>
    %cst_59 = arith.constant dense<0.000000e+00> : vector<16xf32>
    %122 = vector.multi_reduction <add>, %121, %cst_59 [1] : vector<16x32xf32> to vector<16xf32>
    %123 = vector.shape_cast %122 : vector<16xf32> to vector<16x1xf32>
    %cst_60 = arith.constant 3.200000e+01 : f32
    %124 = vector.broadcast %cst_60 : f32 to vector<16x1xf32>
    %125 = arith.divf %123, %124 : vector<16x1xf32>
    %126 = vector.broadcast %118 : vector<16x1xf32> to vector<16x32xf32>
    %127 = arith.subf %114, %126 : vector<16x32xf32>
    %cst_61 = arith.constant 9.99999974E-6 : f32
    %128 = vector.broadcast %cst_61 : f32 to vector<16x1xf32>
    %129 = arith.addf %125, %128 : vector<16x1xf32>
    %130 = math.rsqrt %129 : vector<16x1xf32>
    %131 = vector.broadcast %130 : vector<16x1xf32> to vector<16x32xf32>
    %132 = arith.mulf %127, %131 : vector<16x32xf32>
    %133 = vector.broadcast %15 : vector<1x32xf32> to vector<16x32xf32>
    %134 = arith.mulf %132, %133 : vector<16x32xf32>
    %135 = vector.broadcast %16 : vector<1x32xf32> to vector<16x32xf32>
    %136 = arith.addf %134, %135 : vector<16x32xf32>
    %137 = arith.truncf %136 : vector<16x32xf32> to vector<16x32xbf16>
    %cst_62 = arith.constant dense<0.000000e+00> : vector<16x64xf32>
    %138 = tpu.matmul %137, %10, %cst_62 {dimension_numbers = #tpu.dot_dimension_numbers<[1], [0], [0], [1], [0, 0, 1, 1], [], []>} : vector<16x32xbf16>, vector<32x64xbf16>, vector<16x64xf32> -> vector<16x64xf32>
    %139 = vector.broadcast %13 : vector<1x64xf32> to vector<16x64xf32>
    %140 = arith.addf %138, %139 : vector<16x64xf32>
    %cst_63 = arith.constant 0.000000e+00 : f32
    %141 = vector.broadcast %cst_63 : f32 to vector<16x64xf32>
    %142 = arith.maximumf %140, %141 : vector<16x64xf32>
    %143 = arith.truncf %142 : vector<16x64xf32> to vector<16x64xbf16>
    %c0_64 = arith.constant 0 : index
    %c0_65 = arith.constant 0 : index
    %144 = vector.load %arg5[%c0_64, %c0_65] : memref<64x32xbf16, #tpu.memory_space<vmem>>, vector<64x32xbf16>
    %cst_66 = arith.constant dense<0.000000e+00> : vector<16x32xf32>
    %145 = tpu.matmul %143, %144, %cst_66 {dimension_numbers = #tpu.dot_dimension_numbers<[1], [0], [0], [1], [0, 0, 1, 1], [], []>} : vector<16x64xbf16>, vector<64x32xbf16>, vector<16x32xf32> -> vector<16x32xf32>
    %146 = vector.broadcast %14 : vector<1x32xf32> to vector<16x32xf32>
    %147 = arith.addf %145, %146 : vector<16x32xf32>
    %148 = arith.addf %136, %147 : vector<16x32xf32>
    %cst_67 = arith.constant dense<0.000000e+00> : vector<16xf32>
    %149 = vector.multi_reduction <add>, %148, %cst_67 [1] : vector<16x32xf32> to vector<16xf32>
    %150 = vector.shape_cast %149 : vector<16xf32> to vector<16x1xf32>
    %cst_68 = arith.constant 3.200000e+01 : f32
    %151 = vector.broadcast %cst_68 : f32 to vector<16x1xf32>
    %152 = arith.divf %150, %151 : vector<16x1xf32>
    %153 = vector.broadcast %152 : vector<16x1xf32> to vector<16x32xf32>
    %154 = arith.subf %148, %153 : vector<16x32xf32>
    %155 = arith.mulf %154, %154 : vector<16x32xf32>
    %cst_69 = arith.constant dense<0.000000e+00> : vector<16xf32>
    %156 = vector.multi_reduction <add>, %155, %cst_69 [1] : vector<16x32xf32> to vector<16xf32>
    %157 = vector.shape_cast %156 : vector<16xf32> to vector<16x1xf32>
    %cst_70 = arith.constant 3.200000e+01 : f32
    %158 = vector.broadcast %cst_70 : f32 to vector<16x1xf32>
    %159 = arith.divf %157, %158 : vector<16x1xf32>
    %160 = vector.broadcast %152 : vector<16x1xf32> to vector<16x32xf32>
    %161 = arith.subf %148, %160 : vector<16x32xf32>
    %cst_71 = arith.constant 9.99999974E-6 : f32
    %162 = vector.broadcast %cst_71 : f32 to vector<16x1xf32>
    %163 = arith.addf %159, %162 : vector<16x1xf32>
    %164 = math.rsqrt %163 : vector<16x1xf32>
    %165 = vector.broadcast %164 : vector<16x1xf32> to vector<16x32xf32>
    %166 = arith.mulf %161, %165 : vector<16x32xf32>
    %167 = vector.broadcast %17 : vector<1x32xf32> to vector<16x32xf32>
    %168 = arith.mulf %166, %167 : vector<16x32xf32>
    %169 = vector.broadcast %18 : vector<1x32xf32> to vector<16x32xf32>
    %170 = arith.addf %168, %169 : vector<16x32xf32>
    %cst_72 = arith.constant 0.000000e+00 : f32
    %171 = vector.broadcast %cst_72 : f32 to vector<16x32xf32>
    %172 = arith.maximumf %170, %171 : vector<16x32xf32>
    %c0_73 = arith.constant 0 : index
    %c0_74 = arith.constant 0 : index
    %173 = vector.load %arg7[%c0_73, %c0_74] : memref<32x192xbf16, #tpu.memory_space<vmem>>, vector<32x96xbf16>
    %c0_75 = arith.constant 0 : index
    %c96_76 = arith.constant 96 : index
    %174 = vector.load %arg7[%c0_75, %c96_76] : memref<32x192xbf16, #tpu.memory_space<vmem>>, vector<32x32xbf16>
    %c0_77 = arith.constant 0 : index
    %c128_78 = arith.constant 128 : index
    %175 = vector.load %arg7[%c0_77, %c128_78] : memref<32x192xbf16, #tpu.memory_space<vmem>>, vector<32x64xbf16>
    %c0_79 = arith.constant 0 : index
    %c0_80 = arith.constant 0 : index
    %176 = vector.load %arg9[%c0_79, %c0_80] : memref<8x96xf32, #tpu.memory_space<vmem>>, vector<1x96xf32>
    %c1_81 = arith.constant 1 : index
    %c0_82 = arith.constant 0 : index
    %177 = vector.load %arg9[%c1_81, %c0_82] : memref<8x96xf32, #tpu.memory_space<vmem>>, vector<1x32xf32>
    %c2_83 = arith.constant 2 : index
    %c0_84 = arith.constant 0 : index
    %178 = vector.load %arg9[%c2_83, %c0_84] : memref<8x96xf32, #tpu.memory_space<vmem>>, vector<1x64xf32>
    %c3_85 = arith.constant 3 : index
    %c0_86 = arith.constant 0 : index
    %179 = vector.load %arg9[%c3_85, %c0_86] : memref<8x96xf32, #tpu.memory_space<vmem>>, vector<1x32xf32>
    %c4_87 = arith.constant 4 : index
    %c0_88 = arith.constant 0 : index
    %180 = vector.load %arg9[%c4_87, %c0_88] : memref<8x96xf32, #tpu.memory_space<vmem>>, vector<1x32xf32>
    %c5_89 = arith.constant 5 : index
    %c0_90 = arith.constant 0 : index
    %181 = vector.load %arg9[%c5_89, %c0_90] : memref<8x96xf32, #tpu.memory_space<vmem>>, vector<1x32xf32>
    %c6_91 = arith.constant 6 : index
    %c0_92 = arith.constant 0 : index
    %182 = vector.load %arg9[%c6_91, %c0_92] : memref<8x96xf32, #tpu.memory_space<vmem>>, vector<1x32xf32>
    %c7_93 = arith.constant 7 : index
    %c0_94 = arith.constant 0 : index
    %183 = vector.load %arg9[%c7_93, %c0_94] : memref<8x96xf32, #tpu.memory_space<vmem>>, vector<1x32xf32>
    %184 = arith.truncf %172 : vector<16x32xf32> to vector<16x32xbf16>
    %cst_95 = arith.constant dense<0.000000e+00> : vector<16x96xf32>
    %185 = tpu.matmul %184, %173, %cst_95 {dimension_numbers = #tpu.dot_dimension_numbers<[1], [0], [0], [1], [0, 0, 1, 1], [], []>} : vector<16x32xbf16>, vector<32x96xbf16>, vector<16x96xf32> -> vector<16x96xf32>
    %186 = vector.broadcast %176 : vector<1x96xf32> to vector<16x96xf32>
    %187 = arith.addf %185, %186 : vector<16x96xf32>
    %188 = vector.extract_strided_slice %187 {offsets = [0, 0], sizes = [16, 32], strides = [1, 1]} : vector<16x96xf32> to vector<16x32xf32>
    %189 = arith.truncf %188 : vector<16x32xf32> to vector<16x32xbf16>
    %190 = vector.extract_strided_slice %187 {offsets = [0, 32], sizes = [16, 32], strides = [1, 1]} : vector<16x96xf32> to vector<16x32xf32>
    %191 = tpu.transpose %190, [1, 0] : vector<16x32xf32> -> vector<32x16xf32>
    %192 = arith.truncf %191 : vector<32x16xf32> to vector<32x16xbf16>
    %193 = vector.extract_strided_slice %187 {offsets = [0, 64], sizes = [16, 32], strides = [1, 1]} : vector<16x96xf32> to vector<16x32xf32>
    %194 = vector.extract_strided_slice %189 {offsets = [0, 0], sizes = [16, 8], strides = [1, 1]} : vector<16x32xbf16> to vector<16x8xbf16>
    %195 = vector.extract_strided_slice %192 {offsets = [0, 0], sizes = [8, 16], strides = [1, 1]} : vector<32x16xbf16> to vector<8x16xbf16>
    %cst_96 = arith.constant dense<0.000000e+00> : vector<16x16xf32>
    %196 = tpu.matmul %194, %195, %cst_96 {dimension_numbers = #tpu.dot_dimension_numbers<[1], [0], [0], [1], [0, 0, 1, 1], [], []>} : vector<16x8xbf16>, vector<8x16xbf16>, vector<16x16xf32> -> vector<16x16xf32>
    %cst_97 = arith.constant 0.353553385 : f32
    %197 = vector.broadcast %cst_97 : f32 to vector<16x16xf32>
    %198 = arith.mulf %196, %197 : vector<16x16xf32>
    %cst_98 = arith.constant -5.000000e+00 : f32
    %cst_99 = arith.constant 5.000000e+00 : f32
    %199 = vector.broadcast %cst_98 : f32 to vector<16x16xf32>
    %200 = arith.maximumf %199, %198 : vector<16x16xf32>
    %201 = vector.broadcast %cst_99 : f32 to vector<16x16xf32>
    %202 = arith.minimumf %201, %200 : vector<16x16xf32>
    %203 = math.exp %202 : vector<16x16xf32>
    %204 = arith.mulf %203, %0 : vector<16x16xf32>
    %205 = vector.extract_strided_slice %193 {offsets = [0, 0], sizes = [16, 8], strides = [1, 1]} : vector<16x32xf32> to vector<16x8xf32>
    %cst_100 = arith.constant dense<0.000000e+00> : vector<16x8xf32>
    %206 = tpu.matmul %204, %205, %cst_100 {dimension_numbers = #tpu.dot_dimension_numbers<[1], [0], [0], [1], [0, 0, 1, 1], [], []>} : vector<16x16xf32>, vector<16x8xf32>, vector<16x8xf32> -> vector<16x8xf32>
    %cst_101 = arith.constant dense<0.000000e+00> : vector<16xf32>
    %207 = vector.multi_reduction <add>, %204, %cst_101 [1] : vector<16x16xf32> to vector<16xf32>
    %208 = vector.shape_cast %207 : vector<16xf32> to vector<16x1xf32>
    %cst_102 = arith.constant 9.99999997E-7 : f32
    %209 = vector.broadcast %cst_102 : f32 to vector<16x1xf32>
    %210 = arith.addf %208, %209 : vector<16x1xf32>
    %211 = vector.broadcast %210 : vector<16x1xf32> to vector<16x8xf32>
    %212 = arith.divf %206, %211 : vector<16x8xf32>
    %c0_103 = arith.constant 0 : index
    %c0_104 = arith.constant 0 : index
    %213 = vector.load %arg13[%c0_103, %c0_104] : memref<16x32xf32, #tpu.memory_space<vmem>>, vector<16x8xf32>
    tpu.vector_store %arg13[%c0_103, %c0_104], %212 {strides = array<i32>} : memref<16x32xf32, #tpu.memory_space<vmem>>, vector<16x8xf32>,
    %214 = vector.extract_strided_slice %189 {offsets = [0, 8], sizes = [16, 8], strides = [1, 1]} : vector<16x32xbf16> to vector<16x8xbf16>
    %215 = vector.extract_strided_slice %192 {offsets = [8, 0], sizes = [8, 16], strides = [1, 1]} : vector<32x16xbf16> to vector<8x16xbf16>
    %cst_105 = arith.constant dense<0.000000e+00> : vector<16x16xf32>
    %216 = tpu.matmul %214, %215, %cst_105 {dimension_numbers = #tpu.dot_dimension_numbers<[1], [0], [0], [1], [0, 0, 1, 1], [], []>} : vector<16x8xbf16>, vector<8x16xbf16>, vector<16x16xf32> -> vector<16x16xf32>
    %cst_106 = arith.constant 0.353553385 : f32
    %217 = vector.broadcast %cst_106 : f32 to vector<16x16xf32>
    %218 = arith.mulf %216, %217 : vector<16x16xf32>
    %cst_107 = arith.constant -5.000000e+00 : f32
    %cst_108 = arith.constant 5.000000e+00 : f32
    %219 = vector.broadcast %cst_107 : f32 to vector<16x16xf32>
    %220 = arith.maximumf %219, %218 : vector<16x16xf32>
    %221 = vector.broadcast %cst_108 : f32 to vector<16x16xf32>
    %222 = arith.minimumf %221, %220 : vector<16x16xf32>
    %223 = math.exp %222 : vector<16x16xf32>
    %224 = arith.mulf %223, %0 : vector<16x16xf32>
    %225 = vector.extract_strided_slice %193 {offsets = [0, 8], sizes = [16, 8], strides = [1, 1]} : vector<16x32xf32> to vector<16x8xf32>
    %cst_109 = arith.constant dense<0.000000e+00> : vector<16x8xf32>
    %226 = tpu.matmul %224, %225, %cst_109 {dimension_numbers = #tpu.dot_dimension_numbers<[1], [0], [0], [1], [0, 0, 1, 1], [], []>} : vector<16x16xf32>, vector<16x8xf32>, vector<16x8xf32> -> vector<16x8xf32>
    %cst_110 = arith.constant dense<0.000000e+00> : vector<16xf32>
    %227 = vector.multi_reduction <add>, %224, %cst_110 [1] : vector<16x16xf32> to vector<16xf32>
    %228 = vector.shape_cast %227 : vector<16xf32> to vector<16x1xf32>
    %cst_111 = arith.constant 9.99999997E-7 : f32
    %229 = vector.broadcast %cst_111 : f32 to vector<16x1xf32>
    %230 = arith.addf %228, %229 : vector<16x1xf32>
    %231 = vector.broadcast %230 : vector<16x1xf32> to vector<16x8xf32>
    %232 = arith.divf %226, %231 : vector<16x8xf32>
    %c0_112 = arith.constant 0 : index
    %c8_113 = arith.constant 8 : index
    %233 = vector.load %arg13[%c0_112, %c8_113] : memref<16x32xf32, #tpu.memory_space<vmem>>, vector<16x8xf32>
    tpu.vector_store %arg13[%c0_112, %c8_113], %232 {strides = array<i32>} : memref<16x32xf32, #tpu.memory_space<vmem>>, vector<16x8xf32>,
    %234 = vector.extract_strided_slice %189 {offsets = [0, 16], sizes = [16, 8], strides = [1, 1]} : vector<16x32xbf16> to vector<16x8xbf16>
    %235 = vector.extract_strided_slice %192 {offsets = [16, 0], sizes = [8, 16], strides = [1, 1]} : vector<32x16xbf16> to vector<8x16xbf16>
    %cst_114 = arith.constant dense<0.000000e+00> : vector<16x16xf32>
    %236 = tpu.matmul %234, %235, %cst_114 {dimension_numbers = #tpu.dot_dimension_numbers<[1], [0], [0], [1], [0, 0, 1, 1], [], []>} : vector<16x8xbf16>, vector<8x16xbf16>, vector<16x16xf32> -> vector<16x16xf32>
    %cst_115 = arith.constant 0.353553385 : f32
    %237 = vector.broadcast %cst_115 : f32 to vector<16x16xf32>
    %238 = arith.mulf %236, %237 : vector<16x16xf32>
    %cst_116 = arith.constant -5.000000e+00 : f32
    %cst_117 = arith.constant 5.000000e+00 : f32
    %239 = vector.broadcast %cst_116 : f32 to vector<16x16xf32>
    %240 = arith.maximumf %239, %238 : vector<16x16xf32>
    %241 = vector.broadcast %cst_117 : f32 to vector<16x16xf32>
    %242 = arith.minimumf %241, %240 : vector<16x16xf32>
    %243 = math.exp %242 : vector<16x16xf32>
    %244 = arith.mulf %243, %0 : vector<16x16xf32>
    %245 = vector.extract_strided_slice %193 {offsets = [0, 16], sizes = [16, 8], strides = [1, 1]} : vector<16x32xf32> to vector<16x8xf32>
    %cst_118 = arith.constant dense<0.000000e+00> : vector<16x8xf32>
    %246 = tpu.matmul %244, %245, %cst_118 {dimension_numbers = #tpu.dot_dimension_numbers<[1], [0], [0], [1], [0, 0, 1, 1], [], []>} : vector<16x16xf32>, vector<16x8xf32>, vector<16x8xf32> -> vector<16x8xf32>
    %cst_119 = arith.constant dense<0.000000e+00> : vector<16xf32>
    %247 = vector.multi_reduction <add>, %244, %cst_119 [1] : vector<16x16xf32> to vector<16xf32>
    %248 = vector.shape_cast %247 : vector<16xf32> to vector<16x1xf32>
    %cst_120 = arith.constant 9.99999997E-7 : f32
    %249 = vector.broadcast %cst_120 : f32 to vector<16x1xf32>
    %250 = arith.addf %248, %249 : vector<16x1xf32>
    %251 = vector.broadcast %250 : vector<16x1xf32> to vector<16x8xf32>
    %252 = arith.divf %246, %251 : vector<16x8xf32>
    %c0_121 = arith.constant 0 : index
    %c16_122 = arith.constant 16 : index
    %253 = vector.load %arg13[%c0_121, %c16_122] : memref<16x32xf32, #tpu.memory_space<vmem>>, vector<16x8xf32>
    tpu.vector_store %arg13[%c0_121, %c16_122], %252 {strides = array<i32>} : memref<16x32xf32, #tpu.memory_space<vmem>>, vector<16x8xf32>,
    %254 = vector.extract_strided_slice %189 {offsets = [0, 24], sizes = [16, 8], strides = [1, 1]} : vector<16x32xbf16> to vector<16x8xbf16>
    %255 = vector.extract_strided_slice %192 {offsets = [24, 0], sizes = [8, 16], strides = [1, 1]} : vector<32x16xbf16> to vector<8x16xbf16>
    %cst_123 = arith.constant dense<0.000000e+00> : vector<16x16xf32>
    %256 = tpu.matmul %254, %255, %cst_123 {dimension_numbers = #tpu.dot_dimension_numbers<[1], [0], [0], [1], [0, 0, 1, 1], [], []>} : vector<16x8xbf16>, vector<8x16xbf16>, vector<16x16xf32> -> vector<16x16xf32>
    %cst_124 = arith.constant 0.353553385 : f32
    %257 = vector.broadcast %cst_124 : f32 to vector<16x16xf32>
    %258 = arith.mulf %256, %257 : vector<16x16xf32>
    %cst_125 = arith.constant -5.000000e+00 : f32
    %cst_126 = arith.constant 5.000000e+00 : f32
    %259 = vector.broadcast %cst_125 : f32 to vector<16x16xf32>
    %260 = arith.maximumf %259, %258 : vector<16x16xf32>
    %261 = vector.broadcast %cst_126 : f32 to vector<16x16xf32>
    %262 = arith.minimumf %261, %260 : vector<16x16xf32>
    %263 = math.exp %262 : vector<16x16xf32>
    %264 = arith.mulf %263, %0 : vector<16x16xf32>
    %265 = vector.extract_strided_slice %193 {offsets = [0, 24], sizes = [16, 8], strides = [1, 1]} : vector<16x32xf32> to vector<16x8xf32>
    %cst_127 = arith.constant dense<0.000000e+00> : vector<16x8xf32>
    %266 = tpu.matmul %264, %265, %cst_127 {dimension_numbers = #tpu.dot_dimension_numbers<[1], [0], [0], [1], [0, 0, 1, 1], [], []>} : vector<16x16xf32>, vector<16x8xf32>, vector<16x8xf32> -> vector<16x8xf32>
    %cst_128 = arith.constant dense<0.000000e+00> : vector<16xf32>
    %267 = vector.multi_reduction <add>, %264, %cst_128 [1] : vector<16x16xf32> to vector<16xf32>
    %268 = vector.shape_cast %267 : vector<16xf32> to vector<16x1xf32>
    %cst_129 = arith.constant 9.99999997E-7 : f32
    %269 = vector.broadcast %cst_129 : f32 to vector<16x1xf32>
    %270 = arith.addf %268, %269 : vector<16x1xf32>
    %271 = vector.broadcast %270 : vector<16x1xf32> to vector<16x8xf32>
    %272 = arith.divf %266, %271 : vector<16x8xf32>
    %c0_130 = arith.constant 0 : index
    %c24_131 = arith.constant 24 : index
    %273 = vector.load %arg13[%c0_130, %c24_131] : memref<16x32xf32, #tpu.memory_space<vmem>>, vector<16x8xf32>
    tpu.vector_store %arg13[%c0_130, %c24_131], %272 {strides = array<i32>} : memref<16x32xf32, #tpu.memory_space<vmem>>, vector<16x8xf32>,
    %c0_132 = arith.constant 0 : index
    %c0_133 = arith.constant 0 : index
    %274 = vector.load %arg13[%c0_132, %c0_133] : memref<16x32xf32, #tpu.memory_space<vmem>>, vector<16x32xf32>
    %275 = arith.truncf %274 : vector<16x32xf32> to vector<16x32xbf16>
    %cst_134 = arith.constant dense<0.000000e+00> : vector<16x32xf32>
    %276 = tpu.matmul %275, %174, %cst_134 {dimension_numbers = #tpu.dot_dimension_numbers<[1], [0], [0], [1], [0, 0, 1, 1], [], []>} : vector<16x32xbf16>, vector<32x32xbf16>, vector<16x32xf32> -> vector<16x32xf32>
    %277 = vector.broadcast %177 : vector<1x32xf32> to vector<16x32xf32>
    %278 = arith.addf %276, %277 : vector<16x32xf32>
    %279 = arith.addf %172, %278 : vector<16x32xf32>
    %cst_135 = arith.constant dense<0.000000e+00> : vector<16xf32>
    %280 = vector.multi_reduction <add>, %279, %cst_135 [1] : vector<16x32xf32> to vector<16xf32>
    %281 = vector.shape_cast %280 : vector<16xf32> to vector<16x1xf32>
    %cst_136 = arith.constant 3.200000e+01 : f32
    %282 = vector.broadcast %cst_136 : f32 to vector<16x1xf32>
    %283 = arith.divf %281, %282 : vector<16x1xf32>
    %284 = vector.broadcast %283 : vector<16x1xf32> to vector<16x32xf32>
    %285 = arith.subf %279, %284 : vector<16x32xf32>
    %286 = arith.mulf %285, %285 : vector<16x32xf32>
    %cst_137 = arith.constant dense<0.000000e+00> : vector<16xf32>
    %287 = vector.multi_reduction <add>, %286, %cst_137 [1] : vector<16x32xf32> to vector<16xf32>
    %288 = vector.shape_cast %287 : vector<16xf32> to vector<16x1xf32>
    %cst_138 = arith.constant 3.200000e+01 : f32
    %289 = vector.broadcast %cst_138 : f32 to vector<16x1xf32>
    %290 = arith.divf %288, %289 : vector<16x1xf32>
    %291 = vector.broadcast %283 : vector<16x1xf32> to vector<16x32xf32>
    %292 = arith.subf %279, %291 : vector<16x32xf32>
    %cst_139 = arith.constant 9.99999974E-6 : f32
    %293 = vector.broadcast %cst_139 : f32 to vector<16x1xf32>
    %294 = arith.addf %290, %293 : vector<16x1xf32>
    %295 = math.rsqrt %294 : vector<16x1xf32>
    %296 = vector.broadcast %295 : vector<16x1xf32> to vector<16x32xf32>
    %297 = arith.mulf %292, %296 : vector<16x32xf32>
    %298 = vector.broadcast %180 : vector<1x32xf32> to vector<16x32xf32>
    %299 = arith.mulf %297, %298 : vector<16x32xf32>
    %300 = vector.broadcast %181 : vector<1x32xf32> to vector<16x32xf32>
    %301 = arith.addf %299, %300 : vector<16x32xf32>
    %302 = arith.truncf %301 : vector<16x32xf32> to vector<16x32xbf16>
    %cst_140 = arith.constant dense<0.000000e+00> : vector<16x64xf32>
    %303 = tpu.matmul %302, %175, %cst_140 {dimension_numbers = #tpu.dot_dimension_numbers<[1], [0], [0], [1], [0, 0, 1, 1], [], []>} : vector<16x32xbf16>, vector<32x64xbf16>, vector<16x64xf32> -> vector<16x64xf32>
    %304 = vector.broadcast %178 : vector<1x64xf32> to vector<16x64xf32>
    %305 = arith.addf %303, %304 : vector<16x64xf32>
    %cst_141 = arith.constant 0.000000e+00 : f32
    %306 = vector.broadcast %cst_141 : f32 to vector<16x64xf32>
    %307 = arith.maximumf %305, %306 : vector<16x64xf32>
    %308 = arith.truncf %307 : vector<16x64xf32> to vector<16x64xbf16>
    %c0_142 = arith.constant 0 : index
    %c0_143 = arith.constant 0 : index
    %309 = vector.load %arg8[%c0_142, %c0_143] : memref<64x32xbf16, #tpu.memory_space<vmem>>, vector<64x32xbf16>
    %cst_144 = arith.constant dense<0.000000e+00> : vector<16x32xf32>
    %310 = tpu.matmul %308, %309, %cst_144 {dimension_numbers = #tpu.dot_dimension_numbers<[1], [0], [0], [1], [0, 0, 1, 1], [], []>} : vector<16x64xbf16>, vector<64x32xbf16>, vector<16x32xf32> -> vector<16x32xf32>
    %311 = vector.broadcast %179 : vector<1x32xf32> to vector<16x32xf32>
    %312 = arith.addf %310, %311 : vector<16x32xf32>
    %313 = arith.addf %301, %312 : vector<16x32xf32>
    %cst_145 = arith.constant dense<0.000000e+00> : vector<16xf32>
    %314 = vector.multi_reduction <add>, %313, %cst_145 [1] : vector<16x32xf32> to vector<16xf32>
    %315 = vector.shape_cast %314 : vector<16xf32> to vector<16x1xf32>
    %cst_146 = arith.constant 3.200000e+01 : f32
    %316 = vector.broadcast %cst_146 : f32 to vector<16x1xf32>
    %317 = arith.divf %315, %316 : vector<16x1xf32>
    %318 = vector.broadcast %317 : vector<16x1xf32> to vector<16x32xf32>
    %319 = arith.subf %313, %318 : vector<16x32xf32>
    %320 = arith.mulf %319, %319 : vector<16x32xf32>
    %cst_147 = arith.constant dense<0.000000e+00> : vector<16xf32>
    %321 = vector.multi_reduction <add>, %320, %cst_147 [1] : vector<16x32xf32> to vector<16xf32>
    %322 = vector.shape_cast %321 : vector<16xf32> to vector<16x1xf32>
    %cst_148 = arith.constant 3.200000e+01 : f32
    %323 = vector.broadcast %cst_148 : f32 to vector<16x1xf32>
    %324 = arith.divf %322, %323 : vector<16x1xf32>
    %325 = vector.broadcast %317 : vector<16x1xf32> to vector<16x32xf32>
    %326 = arith.subf %313, %325 : vector<16x32xf32>
    %cst_149 = arith.constant 9.99999974E-6 : f32
    %327 = vector.broadcast %cst_149 : f32 to vector<16x1xf32>
    %328 = arith.addf %324, %327 : vector<16x1xf32>
    %329 = math.rsqrt %328 : vector<16x1xf32>
    %330 = vector.broadcast %329 : vector<16x1xf32> to vector<16x32xf32>
    %331 = arith.mulf %326, %330 : vector<16x32xf32>
    %332 = vector.broadcast %182 : vector<1x32xf32> to vector<16x32xf32>
    %333 = arith.mulf %331, %332 : vector<16x32xf32>
    %334 = vector.broadcast %183 : vector<1x32xf32> to vector<16x32xf32>
    %335 = arith.addf %333, %334 : vector<16x32xf32>
    %cst_150 = arith.constant 0.000000e+00 : f32
    %336 = vector.broadcast %cst_150 : f32 to vector<16x32xf32>
    %337 = arith.maximumf %335, %336 : vector<16x32xf32>
    %338 = arith.truncf %337 : vector<16x32xf32> to vector<16x32xbf16>
    %c0_151 = arith.constant 0 : index
    %c0_152 = arith.constant 0 : index
    %339 = vector.load %arg10[%c0_151, %c0_152] : memref<32x29xbf16, #tpu.memory_space<vmem>>, vector<32x16xbf16>
    %cst_153 = arith.constant dense<0.000000e+00> : vector<16x16xf32>
    %340 = tpu.matmul %338, %339, %cst_153 {dimension_numbers = #tpu.dot_dimension_numbers<[1], [0], [0], [1], [0, 0, 1, 1], [], []>} : vector<16x32xbf16>, vector<32x16xbf16>, vector<16x16xf32> -> vector<16x16xf32>
    %c0_154 = arith.constant 0 : index
    %c0_155 = arith.constant 0 : index
    %341 = vector.load %arg11[%c0_154, %c0_155] : memref<3x16xf32, #tpu.memory_space<vmem>>, vector<1x16xf32>
    %342 = vector.broadcast %341 : vector<1x16xf32> to vector<16x16xf32>
    %343 = arith.addf %340, %342 : vector<16x16xf32>
    %cst_156 = arith.constant 0.000000e+00 : f32
    %344 = vector.broadcast %cst_156 : f32 to vector<16x16xf32>
    %345 = arith.maximumf %343, %344 : vector<16x16xf32>
    %346 = arith.truncf %345 : vector<16x16xf32> to vector<16x16xbf16>
    %c0_157 = arith.constant 0 : index
    %c16_158 = arith.constant 16 : index
    %347 = vector.load %arg10[%c0_157, %c16_158] : memref<32x29xbf16, #tpu.memory_space<vmem>>, vector<16x8xbf16>
    %cst_159 = arith.constant dense<0.000000e+00> : vector<16x8xf32>
    %348 = tpu.matmul %346, %347, %cst_159 {dimension_numbers = #tpu.dot_dimension_numbers<[1], [0], [0], [1], [0, 0, 1, 1], [], []>} : vector<16x16xbf16>, vector<16x8xbf16>, vector<16x8xf32> -> vector<16x8xf32>
    %c1_160 = arith.constant 1 : index
    %c0_161 = arith.constant 0 : index
    %349 = vector.load %arg11[%c1_160, %c0_161] : memref<3x16xf32, #tpu.memory_space<vmem>>, vector<1x8xf32>
    %350 = vector.broadcast %349 : vector<1x8xf32> to vector<16x8xf32>
    %351 = arith.addf %348, %350 : vector<16x8xf32>
    %cst_162 = arith.constant 0.000000e+00 : f32
    %352 = vector.broadcast %cst_162 : f32 to vector<16x8xf32>
    %353 = arith.maximumf %351, %352 : vector<16x8xf32>
    %354 = arith.truncf %353 : vector<16x8xf32> to vector<16x8xbf16>
    %c0_163 = arith.constant 0 : index
    %c24_164 = arith.constant 24 : index
    %355 = vector.load %arg10[%c0_163, %c24_164] : memref<32x29xbf16, #tpu.memory_space<vmem>>, vector<8x5xbf16>
    %cst_165 = arith.constant dense<0.000000e+00> : vector<16x5xf32>
    %356 = tpu.matmul %354, %355, %cst_165 {dimension_numbers = #tpu.dot_dimension_numbers<[1], [0], [0], [1], [0, 0, 1, 1], [], []>} : vector<16x8xbf16>, vector<8x5xbf16>, vector<16x5xf32> -> vector<16x5xf32>
    %c2_166 = arith.constant 2 : index
    %c0_167 = arith.constant 0 : index
    %357 = vector.load %arg11[%c2_166, %c0_167] : memref<3x16xf32, #tpu.memory_space<vmem>>, vector<1x5xf32>
    %358 = vector.broadcast %357 : vector<1x5xf32> to vector<16x5xf32>
    %359 = arith.addf %356, %358 : vector<16x5xf32>
    %c0_168 = arith.constant 0 : index
    %c0_169 = arith.constant 0 : index
    %360 = vector.load %arg12[%c0_168, %c0_169] : memref<16x5xf32, #tpu.memory_space<vmem>>, vector<16x5xf32>
    tpu.vector_store %arg12[%c0_168, %c0_169], %359 {strides = array<i32>} : memref<16x5xf32, #tpu.memory_space<vmem>>, vector<16x5xf32>,
    return
  }
}

</mosaic_0001>

<llo_original>
// kernel: graph_transformer_net_forward.1
$region0: #{graph_transformer_net_forward.1}
  #allocation0 [shape = 'u32[]', space=smem, size = 0x4, offset = 0x4, fixed_abs, tag = 'smem constant byte address 0x4 - core index']
  #allocation1 [shape = 'u32[144,128]{1,0:T(1,128)}', space=vmem, size = 0x12000, scoped, tag = 'internal scratch']
  #allocation2 [shape = 'f32[16,32]{1,0:T(8,128)}', space=vmem, size = 0x2000, scoped, tag = 'scratch operand']
  %s0 = inlined_call_operand.vmem [shape: f32[16,12], index: 0, kind: input, shape index: {}]
  %s1 = inlined_call_operand.vmem [shape: f32[16,16], index: 1, kind: input, shape index: {}]
  %s2 = inlined_call_operand.vmem [shape: bf16[12,32], index: 2, kind: input, shape index: {}]
  %s3 = inlined_call_operand.vmem [shape: f32[1,32], index: 3, kind: input, shape index: {}]
  %s4 = inlined_call_operand.vmem [shape: bf16[32,192], index: 4, kind: input, shape index: {}]
  %s5 = inlined_call_operand.vmem [shape: bf16[64,32], index: 5, kind: input, shape index: {}]
  %s6 = inlined_call_operand.vmem [shape: f32[8,96], index: 6, kind: input, shape index: {}]
  %s7 = inlined_call_operand.vmem [shape: bf16[32,192], index: 7, kind: input, shape index: {}]
  %s8 = inlined_call_operand.vmem [shape: bf16[64,32], index: 8, kind: input, shape index: {}]
  %s9 = inlined_call_operand.vmem [shape: f32[8,96], index: 9, kind: input, shape index: {}]
  %s10 = inlined_call_operand.vmem [shape: bf16[32,29], index: 10, kind: input, shape index: {}]
  %s11 = inlined_call_operand.vmem [shape: f32[3,16], index: 11, kind: input, shape index: {}]
  %s12 = inlined_call_operand.vmem [shape: f32[16,5], index: 12, kind: output, shape index: {}]
  %s13 = sld [smem:[#allocation0]]
  $region58: #{graph_transformer_net_forward.1} parent=0
    _
  %s15 = ssub.s32 1, %s13
  %s16 = scalar_select 0, %s15, %s13
  // Predicated region
  $region2: #{graph_transformer_net_forward.1} parent=0 // pred_check
    _
  $region3: #{graph_transformer_net_forward.1} parent=0 // pred_check_branch
    %18 = sbr.rel (0) target = $region5
  $region4: #{graph_transformer_net_forward.1} parent=0 // pred_region
    _
  $region5: #{graph_transformer_net_forward.1} parent=0 // pred_fallthru
    _
  // Predicated region
  $region6: #{graph_transformer_net_forward.1} parent=0 // pred_check
    _
  $region7: #{graph_transformer_net_forward.1} parent=0 // pred_check_branch
    %20 = sbr.rel (0) target = $region9
  $region8: #{graph_transformer_net_forward.1} parent=0 // pred_region
    _
  $region9: #{graph_transformer_net_forward.1} parent=0 // pred_fallthru
    _
  // Predicated region
  $region10: #{graph_transformer_net_forward.1} parent=0 // pred_check
    _
  $region11: #{graph_transformer_net_forward.1} parent=0 // pred_check_branch
    %22 = sbr.rel (0) target = $region13
  $region12: #{graph_transformer_net_forward.1} parent=0 // pred_region
    _
  $region13: #{graph_transformer_net_forward.1} parent=0 // pred_fallthru
    _
  // Predicated region
  $region14: #{graph_transformer_net_forward.1} parent=0 // pred_check
    _
  $region15: #{graph_transformer_net_forward.1} parent=0 // pred_check_branch
    %24 = sbr.rel (0) target = $region17
  $region16: #{graph_transformer_net_forward.1} parent=0 // pred_region
    _
  $region17: #{graph_transformer_net_forward.1} parent=0 // pred_fallthru
    _
  // Predicated region
  $region18: #{graph_transformer_net_forward.1} parent=0 // pred_check
    _
  $region19: #{graph_transformer_net_forward.1} parent=0 // pred_check_branch
    %26 = sbr.rel (0) target = $region21
  $region20: #{graph_transformer_net_forward.1} parent=0 // pred_region
    _
  $region21: #{graph_transformer_net_forward.1} parent=0 // pred_fallthru
    _
  // Predicated region
  $region22: #{graph_transformer_net_forward.1} parent=0 // pred_check
    _
  $region23: #{graph_transformer_net_forward.1} parent=0 // pred_check_branch
    %28 = sbr.rel (0) target = $region25
  $region24: #{graph_transformer_net_forward.1} parent=0 // pred_region
    _
  $region25: #{graph_transformer_net_forward.1} parent=0 // pred_fallthru
    _
  // Predicated region
  $region26: #{graph_transformer_net_forward.1} parent=0 // pred_check
    _
  $region27: #{graph_transformer_net_forward.1} parent=0 // pred_check_branch
    %30 = sbr.rel (0) target = $region29
  $region28: #{graph_transformer_net_forward.1} parent=0 // pred_region
    _
  $region29: #{graph_transformer_net_forward.1} parent=0 // pred_fallthru
    _
  // Predicated region
  $region30: #{graph_transformer_net_forward.1} parent=0 // pred_check
    _
  $region31: #{graph_transformer_net_forward.1} parent=0 // pred_check_branch
    %32 = sbr.rel (0) target = $region33
  $region32: #{graph_transformer_net_forward.1} parent=0 // pred_region
    _
  $region33: #{graph_transformer_net_forward.1} parent=0 // pred_fallthru
    _
  // Predicated region
  $region34: #{graph_transformer_net_forward.1} parent=0 // pred_check
    _
  $region35: #{graph_transformer_net_forward.1} parent=0 // pred_check_branch
    %34 = sbr.rel (0) target = $region37
  $region36: #{graph_transformer_net_forward.1} parent=0 // pred_region
    _
  $region37: #{graph_transformer_net_forward.1} parent=0 // pred_fallthru
    _
  // Predicated region
  $region38: #{graph_transformer_net_forward.1} parent=0 // pred_check
    _
  $region39: #{graph_transformer_net_forward.1} parent=0 // pred_check_branch
    %36 = sbr.rel (0) target = $region41
  $region40: #{graph_transformer_net_forward.1} parent=0 // pred_region
    _
  $region41: #{graph_transformer_net_forward.1} parent=0 // pred_fallthru
    _
  // Predicated region
  $region42: #{graph_transformer_net_forward.1} parent=0 // pred_check
    _
  $region43: #{graph_transformer_net_forward.1} parent=0 // pred_check_branch
    %38 = sbr.rel (0) target = $region45
  $region44: #{graph_transformer_net_forward.1} parent=0 // pred_region
    _
  $region45: #{graph_transformer_net_forward.1} parent=0 // pred_fallthru
    _
  // Predicated region
  $region46: #{graph_transformer_net_forward.1} parent=0 // pred_check
    _
  $region47: #{graph_transformer_net_forward.1} parent=0 // pred_check_branch
    %40 = sbr.rel (0) target = $region49
  $region48: #{graph_transformer_net_forward.1} parent=0 // pred_region
    _
  $region49: #{graph_transformer_net_forward.1} parent=0 // pred_fallthru
    _
  %v42 = vld [vmem:[%s1] sm:$0xff]
  %v43 = vld [vmem:[%s1 + $0x8] sm:$0xff]
  %v44 = vld [vmem:[%s0] sm:$0xff]
  %v45 = vld [vmem:[%s0 + $0x8] sm:$0xff]
  %v46 = vpack.c.bf16 %v45, %v44
  %v47 = vld [vmem:[%s2] sm:$0xf]
  %v48 = vld [vmem:[%s2 + $0x4] sm:$0x3]
  %v49 = vld [vmem:[%s3] sm:$0x1]
  %v51 = vlaneseq
  %v52 = vshrl.u32 %v51, 7
  %v53 = vsub.s32 0, %v52
  %v54 = vrot.slane %v49, %v53
  %v58 = vunpack.c.l.b16 %v47
  %v59 = vunpack.c.l.b16 %v48
  %v60 = vpack.c.b16 %v59, %v58
  %vm61 = vcmask 97280
  %v63 = vsel %vm61, %v46, 0
  %vm65 = vcmask 1045504
  %v67 = vsel %vm65, %v60, 0
  %69 = vmatprep.subr.bf16.mxu0 0
  %70 = vmatpush1.bf16.msra.mxu0 0
  %71 = vmatprep.subr.bf16.mxu0 0
  %72 = vmatpush1.bf16.msra.mxu0 0
  %73 = vmatprep.subr.bf16.mxu0 0
  %74 = vmatpush1.bf16.msra.mxu0 0
  %75 = vmatprep.subr.bf16.mxu0 0
  %76 = vmatpush1.bf16.msra.mxu0 0
  %77 = vmatprep.subr.bf16.mxu0 0
  %78 = vmatpush1.bf16.msra.mxu0 0
  %79 = vmatprep.subr.bf16.mxu0 0
  %80 = vmatpush1.bf16.msra.mxu0 0
  %81 = vmatprep.subr.bf16.mxu0 0
  %82 = vmatpush1.bf16.msra.mxu0 0
  %83 = vmatprep.subr.bf16.mxu0 0
  %84 = vmatpush1.bf16.msra.mxu0 %v67
  %85 = vmatprep.subr.bf16.mxu0 0
  %86 = vmatpush2.bf16.msra.mxu0 0
  %87 = vmatprep.subr.bf16.mxu0 0
  %88 = vmatpush2.bf16.msra.mxu0 0
  %89 = vmatprep.subr.bf16.mxu0 0
  %90 = vmatpush2.bf16.msra.mxu0 0
  %91 = vmatprep.subr.bf16.mxu0 0
  %92 = vmatpush2.bf16.msra.mxu0 0
  %93 = vmatprep.subr.bf16.mxu0 0
  %94 = vmatpush2.bf16.msra.mxu0 0
  %95 = vmatprep.subr.bf16.mxu0 0
  %96 = vmatpush2.bf16.msra.mxu0 0
  %97 = vmatprep.subr.bf16.mxu0 0
  %98 = vmatpush2.bf16.msra.mxu0 0
  %99 = vmatprep.subr.bf16.mxu0 0
  %100 = vmatpush2.bf16.msra.mxu0 0
  %101 = vmatprep.mubr.bf16.mxu0 0
  %102 = vmatmul.mubr.bf16.gmra.mxu0 %v63
  %v103 = vpop.f32.mrf.mxu0
  %v104 = vadd.f32 %v54, %v103
  %v105 = vpop.f32.mrf.mxu0
  %v106 = vpop.f32.mrf.mxu0
  %v107 = vadd.f32 %v54, %v106
  %v108 = vpop.f32.mrf.mxu0
  %109 = vdwg.mxu0
  %v110 = vld [vmem:[%s4] sm:$0xf]
  %v111 = vld [vmem:[%s4 + $0x8] sm:$0xf]
  %v112 = vld [vmem:[%s4 + $0x10] sm:$0xf]
  %v113 = vld [vmem:[%s4 + $0x18] sm:$0xf]
  %v114 = vld [vmem:[%s4 + $0x4] sm:$0xf]
  %v115 = vld [vmem:[%s4 + $0xc] sm:$0xf]
  %v116 = vld [vmem:[%s4 + $0x14] sm:$0xf]
  %v117 = vld [vmem:[%s4 + $0x1c] sm:$0xf]
  %v118 = vld [vmem:[%s6] sm:$0x1]
  %v119 = vld [vmem:[%s6 + $0x1] sm:$0x1]
  %v120 = vld [vmem:[%s6 + $0x2] sm:$0x1]
  %v121 = vld [vmem:[%s6 + $0x3] sm:$0x1]
  %v122 = vld [vmem:[%s6 + $0x4] sm:$0x1]
  %v123 = vld [vmem:[%s6 + $0x5] sm:$0x1]
  %v124 = vld [vmem:[%s6 + $0x6] sm:$0x1]
  %v125 = vld [vmem:[%s6 + $0x7] sm:$0x1]
  %v126 = vpack.c.bf16 %v107, %v104
  %v127 = vlaneseq
  %v128 = vshrl.u32 %v127, 7
  %v129 = vsub.s32 0, %v128
  %v130 = vrot.slane %v118, %v129
  %v135 = vunpack.c.l.b16 %v110
  %v136 = vunpack.c.l.b16 %v111
  %v137 = vunpack.c.l.b16 %v112
  %v138 = vunpack.c.l.b16 %v113
  %v139 = vpack.c.b16 %v136, %v135
  %v140 = vpack.c.b16 %v138, %v137
  %vm143 = vcmask 261120
  %v145 = vsel %vm143, %v126, 0
  %147 = vmatprep.subr.bf16.mxu0 0
  %148 = vmatpush1.bf16.msra.mxu0 0
  %149 = vmatprep.subr.bf16.mxu0 0
  %150 = vmatpush1.bf16.msra.mxu0 0
  %151 = vmatprep.subr.bf16.mxu0 0
  %152 = vmatpush1.bf16.msra.mxu0 0
  %153 = vmatprep.subr.bf16.mxu0 0
  %154 = vmatpush1.bf16.msra.mxu0 0
  %155 = vmatprep.subr.bf16.mxu0 0
  %156 = vmatpush1.bf16.msra.mxu0 0
  %157 = vmatprep.subr.bf16.mxu0 0
  %158 = vmatpush1.bf16.msra.mxu0 0
  %159 = vmatprep.subr.bf16.mxu0 0
  %160 = vmatpush1.bf16.msra.mxu0 %v140
  %161 = vmatprep.subr.bf16.mxu0 0
  %162 = vmatpush1.bf16.msra.mxu0 %v139
  %163 = vmatprep.subr.bf16.mxu0 0
  %164 = vmatpush2.bf16.msra.mxu0 0
  %165 = vmatprep.subr.bf16.mxu0 0
  %166 = vmatpush2.bf16.msra.mxu0 0
  %167 = vmatprep.subr.bf16.mxu0 0
  %168 = vmatpush2.bf16.msra.mxu0 0
  %169 = vmatprep.subr.bf16.mxu0 0
  %170 = vmatpush2.bf16.msra.mxu0 0
  %171 = vmatprep.subr.bf16.mxu0 0
  %172 = vmatpush2.bf16.msra.mxu0 0
  %173 = vmatprep.subr.bf16.mxu0 0
  %174 = vmatpush2.bf16.msra.mxu0 0
  %175 = vmatprep.subr.bf16.mxu0 0
  %176 = vmatpush2.bf16.msra.mxu0 0
  %177 = vmatprep.subr.bf16.mxu0 0
  %178 = vmatpush2.bf16.msra.mxu0 0
  %179 = vmatprep.mubr.bf16.mxu0 0
  %180 = vmatmul.mubr.bf16.gmra.mxu0 %v145
  %v181 = vpop.f32.mrf.mxu0
  %v182 = vadd.f32 %v130, %v181
  %v183 = vpop.f32.mrf.mxu0
  %v184 = vpop.f32.mrf.mxu0
  %v185 = vadd.f32 %v130, %v184
  %v186 = vpop.f32.mrf.mxu0
  %187 = vdwg.mxu0
  %v188 = vpack.c.bf16 %v185, %v182
  %191 = vrot.lane.b32.xlu0 %v182, 96
  %v192 = vpop.permute.xlu0 %191
  %193 = vrot.lane.b32.xlu0 %v185, 96
  %v194 = vpop.permute.xlu0 %193
  %197 = vxpose.xlu0.b32.start [1/16] %v192, 128
  %198 = vxpose.xlu0.b32.cont [2/16] %v194, 128
  %199 = vxpose.xlu0.b32.cont [3/16] 0.0, 128
  %200 = vxpose.xlu0.b32.cont [4/16] 0.0, 128
  %201 = vxpose.xlu0.b32.cont [5/16] 0.0, 128
  %202 = vxpose.xlu0.b32.cont [6/16] 0.0, 128
  %203 = vxpose.xlu0.b32.cont [7/16] 0.0, 128
  %204 = vxpose.xlu0.b32.cont [8/16] 0.0, 128
  %205 = vxpose.xlu0.b32.cont [9/16] 0.0, 128
  %206 = vxpose.xlu0.b32.cont [10/16] 0.0, 128
  %207 = vxpose.xlu0.b32.cont [11/16] 0.0, 128
  %208 = vxpose.xlu0.b32.cont [12/16] 0.0, 128
  %209 = vxpose.xlu0.b32.cont [13/16] 0.0, 128
  %210 = vxpose.xlu0.b32.cont [14/16] 0.0, 128
  %211 = vxpose.xlu0.b32.cont [15/16] 0.0, 128
  %212 = vxpose.xlu0.b32.end [16/16] 0.0, 128
  %v213 = vpop.trf.xlu0
  %v214 = vpop.trf.xlu0
  %v215 = vpop.trf.xlu0
  %v216 = vpop.trf.xlu0
  %v217 = vpop.trf.xlu0
  %v218 = vpop.trf.xlu0
  %v219 = vpop.trf.xlu0
  %v220 = vpop.trf.xlu0
  %v221 = vpop.trf.xlu0
  %v222 = vpop.trf.xlu0
  %v223 = vpop.trf.xlu0
  %v224 = vpop.trf.xlu0
  %v225 = vpop.trf.xlu0
  %v226 = vpop.trf.xlu0
  %v227 = vpop.trf.xlu0
  %v228 = vpop.trf.xlu0
  %v229 = vpack.c.bf16 %v214, %v213
  %v230 = vpack.c.bf16 %v216, %v215
  %vm231 = vcmask 64512
  %v233 = vsel %vm231, %v188, 0
  %vm235 = vcmask 1043456
  %v237 = vsel %vm235, %v229, 0
  %239 = vmatprep.subr.bf16.mxu0 0
  %240 = vmatpush1.bf16.msra.mxu0 0
  %241 = vmatprep.subr.bf16.mxu0 0
  %242 = vmatpush1.bf16.msra.mxu0 0
  %243 = vmatprep.subr.bf16.mxu0 0
  %244 = vmatpush1.bf16.msra.mxu0 0
  %245 = vmatprep.subr.bf16.mxu0 0
  %246 = vmatpush1.bf16.msra.mxu0 0
  %247 = vmatprep.subr.bf16.mxu0 0
  %248 = vmatpush1.bf16.msra.mxu0 0
  %249 = vmatprep.subr.bf16.mxu0 0
  %250 = vmatpush1.bf16.msra.mxu0 0
  %251 = vmatprep.subr.bf16.mxu0 0
  %252 = vmatpush1.bf16.msra.mxu0 0
  %253 = vmatprep.subr.bf16.mxu0 0
  %254 = vmatpush1.bf16.msra.mxu0 %v237
  %255 = vmatprep.subr.bf16.mxu0 0
  %256 = vmatpush2.bf16.msra.mxu0 0
  %257 = vmatprep.subr.bf16.mxu0 0
  %258 = vmatpush2.bf16.msra.mxu0 0
  %259 = vmatprep.subr.bf16.mxu0 0
  %260 = vmatpush2.bf16.msra.mxu0 0
  %261 = vmatprep.subr.bf16.mxu0 0
  %262 = vmatpush2.bf16.msra.mxu0 0
  %263 = vmatprep.subr.bf16.mxu0 0
  %264 = vmatpush2.bf16.msra.mxu0 0
  %265 = vmatprep.subr.bf16.mxu0 0
  %266 = vmatpush2.bf16.msra.mxu0 0
  %267 = vmatprep.subr.bf16.mxu0 0
  %268 = vmatpush2.bf16.msra.mxu0 0
  %269 = vmatprep.subr.bf16.mxu0 0
  %270 = vmatpush2.bf16.msra.mxu0 0
  %271 = vmatprep.mubr.bf16.mxu0 0
  %272 = vmatmul.mubr.bf16.gmra.mxu0 %v233
  %v273 = vpop.f32.mrf.mxu0
  %v274 = vadd.f32 0.0, %v273
  %v275 = vpop.f32.mrf.mxu0
  %v276 = vpop.f32.mrf.mxu0
  %v277 = vadd.f32 0.0, %v276
  %v278 = vpop.f32.mrf.mxu0
  %279 = vdwg.mxu0
  %v280 = vmul.f32 %v274, 0.35355338
  %v281 = vmul.f32 %v277, 0.35355338
  %v282 = vmax.f32 %v280, -5.0
  %v283 = vmax.f32 %v281, -5.0
  %v284 = vmin.f32 %v282, 5.0
  %v285 = vmin.f32 %v283, 5.0
  %v286 = vmul.f32 %v284, 1.442695
  %v287 = vpow.pop %v286
  %v288 = vmul.f32 %v285, 1.442695
  %v289 = vpow.pop %v288
  %v290 = vmul.f32 %v287, %v42
  %v291 = vmul.f32 %v289, %v43
  %292 = vrot.lane.b32.xlu0 %v182, 64
  %v293 = vpop.permute.xlu0 %292
  %294 = vrot.lane.b32.xlu0 %v185, 64
  %v295 = vpop.permute.xlu0 %294
  %vm298 = vcmask 130048
  %v300 = vsel %vm298, %v290, 0
  %v303 = vsel %vm298, %v291, 0
  %305 = vmatprep.subr.mxu0 0.0
  %306 = vmatpush1.msra.mxu0 0.0
  %307 = vmatprep.subr.mxu0 0.0
  %308 = vmatpush1.msra.mxu0 0.0
  %309 = vmatprep.subr.mxu0 0.0
  %310 = vmatpush1.msra.mxu0 0.0
  %311 = vmatprep.subr.mxu0 0.0
  %312 = vmatpush1.msra.mxu0 0.0
  %313 = vmatprep.subr.mxu0 0.0
  %314 = vmatpush1.msra.mxu0 0.0
  %315 = vmatprep.subr.mxu0 0.0
  %316 = vmatpush1.msra.mxu0 0.0
  %317 = vmatprep.subr.mxu0 0.0
  %318 = vmatpush1.msra.mxu0 0.0
  %319 = vmatprep.subr.mxu0 0.0
  %320 = vmatpush1.msra.mxu0 0.0
  %321 = vmatprep.subr.mxu0 0.0
  %322 = vmatpush1.msra.mxu0 0.0
  %323 = vmatprep.subr.mxu0 0.0
  %324 = vmatpush1.msra.mxu0 0.0
  %325 = vmatprep.subr.mxu0 0.0
  %326 = vmatpush1.msra.mxu0 0.0
  %327 = vmatprep.subr.mxu0 0.0
  %328 = vmatpush1.msra.mxu0 0.0
  %329 = vmatprep.subr.mxu0 0.0
  %330 = vmatpush1.msra.mxu0 0.0
  %331 = vmatprep.subr.mxu0 0.0
  %332 = vmatpush1.msra.mxu0 0.0
  %333 = vmatprep.subr.mxu0 0.0
  %334 = vmatpush1.msra.mxu0 %v295
  %335 = vmatprep.subr.mxu0 0.0
  %336 = vmatpush1.msra.mxu0 %v293
  %337 = vmatprep.subr.mxu0 0.0
  %338 = vmatpush2.msra.mxu0 0.0
  %339 = vmatprep.subr.mxu0 0.0
  %340 = vmatpush2.msra.mxu0 0.0
  %341 = vmatprep.subr.mxu0 0.0
  %342 = vmatpush2.msra.mxu0 0.0
  %343 = vmatprep.subr.mxu0 0.0
  %344 = vmatpush2.msra.mxu0 0.0
  %345 = vmatprep.subr.mxu0 0.0
  %346 = vmatpush2.msra.mxu0 0.0
  %347 = vmatprep.subr.mxu0 0.0
  %348 = vmatpush2.msra.mxu0 0.0
  %349 = vmatprep.subr.mxu0 0.0
  %350 = vmatpush2.msra.mxu0 0.0
  %351 = vmatprep.subr.mxu0 0.0
  %352 = vmatpush2.msra.mxu0 0.0
  %353 = vmatprep.subr.mxu0 0.0
  %354 = vmatpush2.msra.mxu0 0.0
  %355 = vmatprep.subr.mxu0 0.0
  %356 = vmatpush2.msra.mxu0 0.0
  %357 = vmatprep.subr.mxu0 0.0
  %358 = vmatpush2.msra.mxu0 0.0
  %359 = vmatprep.subr.mxu0 0.0
  %360 = vmatpush2.msra.mxu0 0.0
  %361 = vmatprep.subr.mxu0 0.0
  %362 = vmatpush2.msra.mxu0 0.0
  %363 = vmatprep.subr.mxu0 0.0
  %364 = vmatpush2.msra.mxu0 0.0
  %365 = vmatprep.subr.mxu0 0.0
  %366 = vmatpush2.msra.mxu0 0.0
  %367 = vmatprep.subr.mxu0 0.0
  %368 = vmatpush2.msra.mxu0 0.0
  %369 = vmatprep.mubr.f32.mxu0 0.0
  %370 = vmatmul.mubr.f32.gmra.mxu0 %v300
  %v371 = vpop.f32.mrf.mxu0
  %v372 = vadd.f32 0.0, %v371
  %v373 = vpop.f32.mrf.mxu0
  %374 = vmatprep.mubr.f32.mxu0 0.0
  %375 = vmatmul.mubr.f32.gmra.mxu0 %v303
  %v376 = vpop.f32.mrf.mxu0
  %v377 = vadd.f32 0.0, %v376
  %v378 = vpop.f32.mrf.mxu0
  %379 = vdwg.mxu0
  %v380 = vsel %vm298, %v290, 0.0
  %381 = vadd.xlane.f32.xlu0 %v380
  %v382 = vpop.xlane.xlu0 %381
  %v383 = vsel %vm298, %v291, 0.0
  %384 = vadd.xlane.f32.xlu0 %v383
  %v385 = vpop.xlane.xlu0 %384
  %v386 = vadd.f32 %v382, 1e-06
  %v387 = vadd.f32 %v385, 1e-06
  %v388 = vrcp.pop %v386
  %v389 = vmul.f32 %v372, %v388
  %v390 = vrcp.pop %v387
  %v391 = vmul.f32 %v377, %v390
  %392 = vst.msk [vmem:[#allocation2] sm:$0xff] %vm231, %v389
  %393 = vst.msk [vmem:[#allocation2 + $0x8] sm:$0xff] %vm231, %v391
  %395 = vrot.lane.b32.xlu0 %v188, 120
  %v396 = vpop.permute.xlu0 %395
  %v398 = vrot.slane %v229, 4
  %v400 = vsel %vm231, %v396, 0
  %v403 = vsel %vm235, %v398, 0
  %405 = vmatprep.subr.bf16.mxu0 0
  %406 = vmatpush1.bf16.msra.mxu0 0
  %407 = vmatprep.subr.bf16.mxu0 0
  %408 = vmatpush1.bf16.msra.mxu0 0
  %409 = vmatprep.subr.bf16.mxu0 0
  %410 = vmatpush1.bf16.msra.mxu0 0
  %411 = vmatprep.subr.bf16.mxu0 0
  %412 = vmatpush1.bf16.msra.mxu0 0
  %413 = vmatprep.subr.bf16.mxu0 0
  %414 = vmatpush1.bf16.msra.mxu0 0
  %415 = vmatprep.subr.bf16.mxu0 0
  %416 = vmatpush1.bf16.msra.mxu0 0
  %417 = vmatprep.subr.bf16.mxu0 0
  %418 = vmatpush1.bf16.msra.mxu0 0
  %419 = vmatprep.subr.bf16.mxu0 0
  %420 = vmatpush1.bf16.msra.mxu0 %v403
  %421 = vmatprep.subr.bf16.mxu0 0
  %422 = vmatpush2.bf16.msra.mxu0 0
  %423 = vmatprep.subr.bf16.mxu0 0
  %424 = vmatpush2.bf16.msra.mxu0 0
  %425 = vmatprep.subr.bf16.mxu0 0
  %426 = vmatpush2.bf16.msra.mxu0 0
  %427 = vmatprep.subr.bf16.mxu0 0
  %428 = vmatpush2.bf16.msra.mxu0 0
  %429 = vmatprep.subr.bf16.mxu0 0
  %430 = vmatpush2.bf16.msra.mxu0 0
  %431 = vmatprep.subr.bf16.mxu0 0
  %432 = vmatpush2.bf16.msra.mxu0 0
  %433 = vmatprep.subr.bf16.mxu0 0
  %434 = vmatpush2.bf16.msra.mxu0 0
  %435 = vmatprep.subr.bf16.mxu0 0
  %436 = vmatpush2.bf16.msra.mxu0 0
  %437 = vmatprep.mubr.bf16.mxu0 0
  %438 = vmatmul.mubr.bf16.gmra.mxu0 %v400
  %v439 = vpop.f32.mrf.mxu0
  %v440 = vadd.f32 0.0, %v439
  %v441 = vpop.f32.mrf.mxu0
  %v442 = vpop.f32.mrf.mxu0
  %v443 = vadd.f32 0.0, %v442
  %v444 = vpop.f32.mrf.mxu0
  %445 = vdwg.mxu0
  %v446 = vmul.f32 %v440, 0.35355338
  %v447 = vmul.f32 %v443, 0.35355338
  %v448 = vmax.f32 %v446, -5.0
  %v449 = vmax.f32 %v447, -5.0
  %v450 = vmin.f32 %v448, 5.0
  %v451 = vmin.f32 %v449, 5.0
  %v452 = vmul.f32 %v450, 1.442695
  %v453 = vpow.pop %v452
  %v454 = vmul.f32 %v451, 1.442695
  %v455 = vpow.pop %v454
  %v456 = vmul.f32 %v453, %v42
  %v457 = vmul.f32 %v455, %v43
  %458 = vrot.lane.b32.xlu0 %v182, 56
  %v459 = vpop.permute.xlu0 %458
  %460 = vrot.lane.b32.xlu0 %v185, 56
  %v461 = vpop.permute.xlu0 %460
  %v465 = vsel %vm298, %v456, 0
  %v468 = vsel %vm298, %v457, 0
  %470 = vmatprep.subr.mxu0 0.0
  %471 = vmatpush1.msra.mxu0 0.0
  %472 = vmatprep.subr.mxu0 0.0
  %473 = vmatpush1.msra.mxu0 0.0
  %474 = vmatprep.subr.mxu0 0.0
  %475 = vmatpush1.msra.mxu0 0.0
  %476 = vmatprep.subr.mxu0 0.0
  %477 = vmatpush1.msra.mxu0 0.0
  %478 = vmatprep.subr.mxu0 0.0
  %479 = vmatpush1.msra.mxu0 0.0
  %480 = vmatprep.subr.mxu0 0.0
  %481 = vmatpush1.msra.mxu0 0.0
  %482 = vmatprep.subr.mxu0 0.0
  %483 = vmatpush1.msra.mxu0 0.0
  %484 = vmatprep.subr.mxu0 0.0
  %485 = vmatpush1.msra.mxu0 0.0
  %486 = vmatprep.subr.mxu0 0.0
  %487 = vmatpush1.msra.mxu0 0.0
  %488 = vmatprep.subr.mxu0 0.0
  %489 = vmatpush1.msra.mxu0 0.0
  %490 = vmatprep.subr.mxu0 0.0
  %491 = vmatpush1.msra.mxu0 0.0
  %492 = vmatprep.subr.mxu0 0.0
  %493 = vmatpush1.msra.mxu0 0.0
  %494 = vmatprep.subr.mxu0 0.0
  %495 = vmatpush1.msra.mxu0 0.0
  %496 = vmatprep.subr.mxu0 0.0
  %497 = vmatpush1.msra.mxu0 0.0
  %498 = vmatprep.subr.mxu0 0.0
  %499 = vmatpush1.msra.mxu0 %v461
  %500 = vmatprep.subr.mxu0 0.0
  %501 = vmatpush1.msra.mxu0 %v459
  %502 = vmatprep.subr.mxu0 0.0
  %503 = vmatpush2.msra.mxu0 0.0
  %504 = vmatprep.subr.mxu0 0.0
  %505 = vmatpush2.msra.mxu0 0.0
  %506 = vmatprep.subr.mxu0 0.0
  %507 = vmatpush2.msra.mxu0 0.0
  %508 = vmatprep.subr.mxu0 0.0
  %509 = vmatpush2.msra.mxu0 0.0
  %510 = vmatprep.subr.mxu0 0.0
  %511 = vmatpush2.msra.mxu0 0.0
  %512 = vmatprep.subr.mxu0 0.0
  %513 = vmatpush2.msra.mxu0 0.0
  %514 = vmatprep.subr.mxu0 0.0
  %515 = vmatpush2.msra.mxu0 0.0
  %516 = vmatprep.subr.mxu0 0.0
  %517 = vmatpush2.msra.mxu0 0.0
  %518 = vmatprep.subr.mxu0 0.0
  %519 = vmatpush2.msra.mxu0 0.0
  %520 = vmatprep.subr.mxu0 0.0
  %521 = vmatpush2.msra.mxu0 0.0
  %522 = vmatprep.subr.mxu0 0.0
  %523 = vmatpush2.msra.mxu0 0.0
  %524 = vmatprep.subr.mxu0 0.0
  %525 = vmatpush2.msra.mxu0 0.0
  %526 = vmatprep.subr.mxu0 0.0
  %527 = vmatpush2.msra.mxu0 0.0
  %528 = vmatprep.subr.mxu0 0.0
  %529 = vmatpush2.msra.mxu0 0.0
  %530 = vmatprep.subr.mxu0 0.0
  %531 = vmatpush2.msra.mxu0 0.0
  %532 = vmatprep.subr.mxu0 0.0
  %533 = vmatpush2.msra.mxu0 0.0
  %534 = vmatprep.mubr.f32.mxu0 0.0
  %535 = vmatmul.mubr.f32.gmra.mxu0 %v465
  %v536 = vpop.f32.mrf.mxu0
  %v537 = vadd.f32 0.0, %v536
  %v538 = vpop.f32.mrf.mxu0
  %539 = vmatprep.mubr.f32.mxu0 0.0
  %540 = vmatmul.mubr.f32.gmra.mxu0 %v468
  %v541 = vpop.f32.mrf.mxu0
  %v542 = vadd.f32 0.0, %v541
  %v543 = vpop.f32.mrf.mxu0
  %544 = vdwg.mxu0
  %v545 = vsel %vm298, %v456, 0.0
  %546 = vadd.xlane.f32.xlu0 %v545
  %v547 = vpop.xlane.xlu0 %546
  %v548 = vsel %vm298, %v457, 0.0
  %549 = vadd.xlane.f32.xlu0 %v548
  %v550 = vpop.xlane.xlu0 %549
  %v551 = vadd.f32 %v547, 1e-06
  %v552 = vadd.f32 %v550, 1e-06
  %v553 = vrcp.pop %v551
  %v554 = vmul.f32 %v537, %v553
  %v555 = vrcp.pop %v552
  %v556 = vmul.f32 %v542, %v555
  %559 = vrot.lane.b32.xlu0 %v554, 8
  %v560 = vpop.permute.xlu0 %559
  %561 = vrot.lane.b32.xlu0 %v556, 8
  %v562 = vpop.permute.xlu0 %561
  %vm565 = vcmask 130112
  %566 = vst.msk [vmem:[#allocation2] sm:$0xff] %vm565, %v560
  %567 = vst.msk [vmem:[#allocation2 + $0x8] sm:$0xff] %vm565, %v562
  %568 = vrot.lane.b32.xlu0 %v188, 112
  %v569 = vpop.permute.xlu0 %568
  %v571 = vsel %vm231, %v569, 0
  %v574 = vsel %vm235, %v230, 0
  %576 = vmatprep.subr.bf16.mxu0 0
  %577 = vmatpush1.bf16.msra.mxu0 0
  %578 = vmatprep.subr.bf16.mxu0 0
  %579 = vmatpush1.bf16.msra.mxu0 0
  %580 = vmatprep.subr.bf16.mxu0 0
  %581 = vmatpush1.bf16.msra.mxu0 0
  %582 = vmatprep.subr.bf16.mxu0 0
  %583 = vmatpush1.bf16.msra.mxu0 0
  %584 = vmatprep.subr.bf16.mxu0 0
  %585 = vmatpush1.bf16.msra.mxu0 0
  %586 = vmatprep.subr.bf16.mxu0 0
  %587 = vmatpush1.bf16.msra.mxu0 0
  %588 = vmatprep.subr.bf16.mxu0 0
  %589 = vmatpush1.bf16.msra.mxu0 0
  %590 = vmatprep.subr.bf16.mxu0 0
  %591 = vmatpush1.bf16.msra.mxu0 %v574
  %592 = vmatprep.subr.bf16.mxu0 0
  %593 = vmatpush2.bf16.msra.mxu0 0
  %594 = vmatprep.subr.bf16.mxu0 0
  %595 = vmatpush2.bf16.msra.mxu0 0
  %596 = vmatprep.subr.bf16.mxu0 0
  %597 = vmatpush2.bf16.msra.mxu0 0
  %598 = vmatprep.subr.bf16.mxu0 0
  %599 = vmatpush2.bf16.msra.mxu0 0
  %600 = vmatprep.subr.bf16.mxu0 0
  %601 = vmatpush2.bf16.msra.mxu0 0
  %602 = vmatprep.subr.bf16.mxu0 0
  %603 = vmatpush2.bf16.msra.mxu0 0
  %604 = vmatprep.subr.bf16.mxu0 0
  %605 = vmatpush2.bf16.msra.mxu0 0
  %606 = vmatprep.subr.bf16.mxu0 0
  %607 = vmatpush2.bf16.msra.mxu0 0
  %608 = vmatprep.mubr.bf16.mxu0 0
  %609 = vmatmul.mubr.bf16.gmra.mxu0 %v571
  %v610 = vpop.f32.mrf.mxu0
  %v611 = vadd.f32 0.0, %v610
  %v612 = vpop.f32.mrf.mxu0
  %v613 = vpop.f32.mrf.mxu0
  %v614 = vadd.f32 0.0, %v613
  %v615 = vpop.f32.mrf.mxu0
  %616 = vdwg.mxu0
  %v617 = vmul.f32 %v611, 0.35355338
  %v618 = vmul.f32 %v614, 0.35355338
  %v619 = vmax.f32 %v617, -5.0
  %v620 = vmax.f32 %v618, -5.0
  %v621 = vmin.f32 %v619, 5.0
  %v622 = vmin.f32 %v620, 5.0
  %v623 = vmul.f32 %v621, 1.442695
  %v624 = vpow.pop %v623
  %v625 = vmul.f32 %v622, 1.442695
  %v626 = vpow.pop %v625
  %v627 = vmul.f32 %v624, %v42
  %v628 = vmul.f32 %v626, %v43
  %629 = vrot.lane.b32.xlu0 %v182, 48
  %v630 = vpop.permute.xlu0 %629
  %631 = vrot.lane.b32.xlu0 %v185, 48
  %v632 = vpop.permute.xlu0 %631
  %v636 = vsel %vm298, %v627, 0
  %v639 = vsel %vm298, %v628, 0
  %641 = vmatprep.subr.mxu0 0.0
  %642 = vmatpush1.msra.mxu0 0.0
  %643 = vmatprep.subr.mxu0 0.0
  %644 = vmatpush1.msra.mxu0 0.0
  %645 = vmatprep.subr.mxu0 0.0
  %646 = vmatpush1.msra.mxu0 0.0
  %647 = vmatprep.subr.mxu0 0.0
  %648 = vmatpush1.msra.mxu0 0.0
  %649 = vmatprep.subr.mxu0 0.0
  %650 = vmatpush1.msra.mxu0 0.0
  %651 = vmatprep.subr.mxu0 0.0
  %652 = vmatpush1.msra.mxu0 0.0
  %653 = vmatprep.subr.mxu0 0.0
  %654 = vmatpush1.msra.mxu0 0.0
  %655 = vmatprep.subr.mxu0 0.0
  %656 = vmatpush1.msra.mxu0 0.0
  %657 = vmatprep.subr.mxu0 0.0
  %658 = vmatpush1.msra.mxu0 0.0
  %659 = vmatprep.subr.mxu0 0.0
  %660 = vmatpush1.msra.mxu0 0.0
  %661 = vmatprep.subr.mxu0 0.0
  %662 = vmatpush1.msra.mxu0 0.0
  %663 = vmatprep.subr.mxu0 0.0
  %664 = vmatpush1.msra.mxu0 0.0
  %665 = vmatprep.subr.mxu0 0.0
  %666 = vmatpush1.msra.mxu0 0.0
  %667 = vmatprep.subr.mxu0 0.0
  %668 = vmatpush1.msra.mxu0 0.0
  %669 = vmatprep.subr.mxu0 0.0
  %670 = vmatpush1.msra.mxu0 %v632
  %671 = vmatprep.subr.mxu0 0.0
  %672 = vmatpush1.msra.mxu0 %v630
  %673 = vmatprep.subr.mxu0 0.0
  %674 = vmatpush2.msra.mxu0 0.0
  %675 = vmatprep.subr.mxu0 0.0
  %676 = vmatpush2.msra.mxu0 0.0
  %677 = vmatprep.subr.mxu0 0.0
  %678 = vmatpush2.msra.mxu0 0.0
  %679 = vmatprep.subr.mxu0 0.0
  %680 = vmatpush2.msra.mxu0 0.0
  %681 = vmatprep.subr.mxu0 0.0
  %682 = vmatpush2.msra.mxu0 0.0
  %683 = vmatprep.subr.mxu0 0.0
  %684 = vmatpush2.msra.mxu0 0.0
  %685 = vmatprep.subr.mxu0 0.0
  %686 = vmatpush2.msra.mxu0 0.0
  %687 = vmatprep.subr.mxu0 0.0
  %688 = vmatpush2.msra.mxu0 0.0
  %689 = vmatprep.subr.mxu0 0.0
  %690 = vmatpush2.msra.mxu0 0.0
  %691 = vmatprep.subr.mxu0 0.0
  %692 = vmatpush2.msra.mxu0 0.0
  %693 = vmatprep.subr.mxu0 0.0
  %694 = vmatpush2.msra.mxu0 0.0
  %695 = vmatprep.subr.mxu0 0.0
  %696 = vmatpush2.msra.mxu0 0.0
  %697 = vmatprep.subr.mxu0 0.0
  %698 = vmatpush2.msra.mxu0 0.0
  %699 = vmatprep.subr.mxu0 0.0
  %700 = vmatpush2.msra.mxu0 0.0
  %701 = vmatprep.subr.mxu0 0.0
  %702 = vmatpush2.msra.mxu0 0.0
  %703 = vmatprep.subr.mxu0 0.0
  %704 = vmatpush2.msra.mxu0 0.0
  %705 = vmatprep.mubr.f32.mxu0 0.0
  %706 = vmatmul.mubr.f32.gmra.mxu0 %v636
  %v707 = vpop.f32.mrf.mxu0
  %v708 = vadd.f32 0.0, %v707
  %v709 = vpop.f32.mrf.mxu0
  %710 = vmatprep.mubr.f32.mxu0 0.0
  %711 = vmatmul.mubr.f32.gmra.mxu0 %v639
  %v712 = vpop.f32.mrf.mxu0
  %v713 = vadd.f32 0.0, %v712
  %v714 = vpop.f32.mrf.mxu0
  %715 = vdwg.mxu0
  %v716 = vsel %vm298, %v627, 0.0
  %717 = vadd.xlane.f32.xlu0 %v716
  %v718 = vpop.xlane.xlu0 %717
  %v719 = vsel %vm298, %v628, 0.0
  %720 = vadd.xlane.f32.xlu0 %v719
  %v721 = vpop.xlane.xlu0 %720
  %v722 = vadd.f32 %v718, 1e-06
  %v723 = vadd.f32 %v721, 1e-06
  %v724 = vrcp.pop %v722
  %v725 = vmul.f32 %v708, %v724
  %v726 = vrcp.pop %v723
  %v727 = vmul.f32 %v713, %v726
  %730 = vrot.lane.b32.xlu0 %v725, 16
  %v731 = vpop.permute.xlu0 %730
  %732 = vrot.lane.b32.xlu0 %v727, 16
  %v733 = vpop.permute.xlu0 %732
  %vm736 = vcmask 195712
  %737 = vst.msk [vmem:[#allocation2] sm:$0xff] %vm736, %v731
  %738 = vst.msk [vmem:[#allocation2 + $0x8] sm:$0xff] %vm736, %v733
  %739 = vrot.lane.b32.xlu0 %v188, 104
  %v740 = vpop.permute.xlu0 %739
  %v742 = vrot.slane %v230, 4
  %v744 = vsel %vm231, %v740, 0
  %v747 = vsel %vm235, %v742, 0
  %749 = vmatprep.subr.bf16.mxu0 0
  %750 = vmatpush1.bf16.msra.mxu0 0
  %751 = vmatprep.subr.bf16.mxu0 0
  %752 = vmatpush1.bf16.msra.mxu0 0
  %753 = vmatprep.subr.bf16.mxu0 0
  %754 = vmatpush1.bf16.msra.mxu0 0
  %755 = vmatprep.subr.bf16.mxu0 0
  %756 = vmatpush1.bf16.msra.mxu0 0
  %757 = vmatprep.subr.bf16.mxu0 0
  %758 = vmatpush1.bf16.msra.mxu0 0
  %759 = vmatprep.subr.bf16.mxu0 0
  %760 = vmatpush1.bf16.msra.mxu0 0
  %761 = vmatprep.subr.bf16.mxu0 0
  %762 = vmatpush1.bf16.msra.mxu0 0
  %763 = vmatprep.subr.bf16.mxu0 0
  %764 = vmatpush1.bf16.msra.mxu0 %v747
  %765 = vmatprep.subr.bf16.mxu0 0
  %766 = vmatpush2.bf16.msra.mxu0 0
  %767 = vmatprep.subr.bf16.mxu0 0
  %768 = vmatpush2.bf16.msra.mxu0 0
  %769 = vmatprep.subr.bf16.mxu0 0
  %770 = vmatpush2.bf16.msra.mxu0 0
  %771 = vmatprep.subr.bf16.mxu0 0
  %772 = vmatpush2.bf16.msra.mxu0 0
  %773 = vmatprep.subr.bf16.mxu0 0
  %774 = vmatpush2.bf16.msra.mxu0 0
  %775 = vmatprep.subr.bf16.mxu0 0
  %776 = vmatpush2.bf16.msra.mxu0 0
  %777 = vmatprep.subr.bf16.mxu0 0
  %778 = vmatpush2.bf16.msra.mxu0 0
  %779 = vmatprep.subr.bf16.mxu0 0
  %780 = vmatpush2.bf16.msra.mxu0 0
  %781 = vmatprep.mubr.bf16.mxu0 0
  %782 = vmatmul.mubr.bf16.gmra.mxu0 %v744
  %v783 = vpop.f32.mrf.mxu0
  %v784 = vadd.f32 0.0, %v783
  %v785 = vpop.f32.mrf.mxu0
  %v786 = vpop.f32.mrf.mxu0
  %v787 = vadd.f32 0.0, %v786
  %v788 = vpop.f32.mrf.mxu0
  %789 = vdwg.mxu0
  %v790 = vmul.f32 %v784, 0.35355338
  %v791 = vmul.f32 %v787, 0.35355338
  %v792 = vmax.f32 %v790, -5.0
  %v793 = vmax.f32 %v791, -5.0
  %v794 = vmin.f32 %v792, 5.0
  %v795 = vmin.f32 %v793, 5.0
  %v796 = vmul.f32 %v794, 1.442695
  %v797 = vpow.pop %v796
  %v798 = vmul.f32 %v795, 1.442695
  %v799 = vpow.pop %v798
  %v800 = vmul.f32 %v797, %v42
  %v801 = vmul.f32 %v799, %v43
  %802 = vrot.lane.b32.xlu0 %v182, 40
  %v803 = vpop.permute.xlu0 %802
  %804 = vrot.lane.b32.xlu0 %v185, 40
  %v805 = vpop.permute.xlu0 %804
  %v809 = vsel %vm298, %v800, 0
  %v812 = vsel %vm298, %v801, 0
  %814 = vmatprep.subr.mxu0 0.0
  %815 = vmatpush1.msra.mxu0 0.0
  %816 = vmatprep.subr.mxu0 0.0
  %817 = vmatpush1.msra.mxu0 0.0
  %818 = vmatprep.subr.mxu0 0.0
  %819 = vmatpush1.msra.mxu0 0.0
  %820 = vmatprep.subr.mxu0 0.0
  %821 = vmatpush1.msra.mxu0 0.0
  %822 = vmatprep.subr.mxu0 0.0
  %823 = vmatpush1.msra.mxu0 0.0
  %824 = vmatprep.subr.mxu0 0.0
  %825 = vmatpush1.msra.mxu0 0.0
  %826 = vmatprep.subr.mxu0 0.0
  %827 = vmatpush1.msra.mxu0 0.0
  %828 = vmatprep.subr.mxu0 0.0
  %829 = vmatpush1.msra.mxu0 0.0
  %830 = vmatprep.subr.mxu0 0.0
  %831 = vmatpush1.msra.mxu0 0.0
  %832 = vmatprep.subr.mxu0 0.0
  %833 = vmatpush1.msra.mxu0 0.0
  %834 = vmatprep.subr.mxu0 0.0
  %835 = vmatpush1.msra.mxu0 0.0
  %836 = vmatprep.subr.mxu0 0.0
  %837 = vmatpush1.msra.mxu0 0.0
  %838 = vmatprep.subr.mxu0 0.0
  %839 = vmatpush1.msra.mxu0 0.0
  %840 = vmatprep.subr.mxu0 0.0
  %841 = vmatpush1.msra.mxu0 0.0
  %842 = vmatprep.subr.mxu0 0.0
  %843 = vmatpush1.msra.mxu0 %v805
  %844 = vmatprep.subr.mxu0 0.0
  %845 = vmatpush1.msra.mxu0 %v803
  %846 = vmatprep.subr.mxu0 0.0
  %847 = vmatpush2.msra.mxu0 0.0
  %848 = vmatprep.subr.mxu0 0.0
  %849 = vmatpush2.msra.mxu0 0.0
  %850 = vmatprep.subr.mxu0 0.0
  %851 = vmatpush2.msra.mxu0 0.0
  %852 = vmatprep.subr.mxu0 0.0
  %853 = vmatpush2.msra.mxu0 0.0
  %854 = vmatprep.subr.mxu0 0.0
  %855 = vmatpush2.msra.mxu0 0.0
  %856 = vmatprep.subr.mxu0 0.0
  %857 = vmatpush2.msra.mxu0 0.0
  %858 = vmatprep.subr.mxu0 0.0
  %859 = vmatpush2.msra.mxu0 0.0
  %860 = vmatprep.subr.mxu0 0.0
  %861 = vmatpush2.msra.mxu0 0.0
  %862 = vmatprep.subr.mxu0 0.0
  %863 = vmatpush2.msra.mxu0 0.0
  %864 = vmatprep.subr.mxu0 0.0
  %865 = vmatpush2.msra.mxu0 0.0
  %866 = vmatprep.subr.mxu0 0.0
  %867 = vmatpush2.msra.mxu0 0.0
  %868 = vmatprep.subr.mxu0 0.0
  %869 = vmatpush2.msra.mxu0 0.0
  %870 = vmatprep.subr.mxu0 0.0
  %871 = vmatpush2.msra.mxu0 0.0
  %872 = vmatprep.subr.mxu0 0.0
  %873 = vmatpush2.msra.mxu0 0.0
  %874 = vmatprep.subr.mxu0 0.0
  %875 = vmatpush2.msra.mxu0 0.0
  %876 = vmatprep.subr.mxu0 0.0
  %877 = vmatpush2.msra.mxu0 0.0
  %878 = vmatprep.mubr.f32.mxu0 0.0
  %879 = vmatmul.mubr.f32.gmra.mxu0 %v809
  %v880 = vpop.f32.mrf.mxu0
  %v881 = vadd.f32 0.0, %v880
  %v882 = vpop.f32.mrf.mxu0
  %883 = vmatprep.mubr.f32.mxu0 0.0
  %884 = vmatmul.mubr.f32.gmra.mxu0 %v812
  %v885 = vpop.f32.mrf.mxu0
  %v886 = vadd.f32 0.0, %v885
  %v887 = vpop.f32.mrf.mxu0
  %888 = vdwg.mxu0
  %v889 = vsel %vm298, %v800, 0.0
  %890 = vadd.xlane.f32.xlu0 %v889
  %v891 = vpop.xlane.xlu0 %890
  %v892 = vsel %vm298, %v801, 0.0
  %893 = vadd.xlane.f32.xlu0 %v892
  %v894 = vpop.xlane.xlu0 %893
  %v895 = vadd.f32 %v891, 1e-06
  %v896 = vadd.f32 %v894, 1e-06
  %v897 = vrcp.pop %v895
  %v898 = vmul.f32 %v881, %v897
  %v899 = vrcp.pop %v896
  %v900 = vmul.f32 %v886, %v899
  %903 = vrot.lane.b32.xlu0 %v898, 24
  %v904 = vpop.permute.xlu0 %903
  %905 = vrot.lane.b32.xlu0 %v900, 24
  %v906 = vpop.permute.xlu0 %905
  %vm909 = vcmask 261312
  %910 = vst.msk [vmem:[#allocation2] sm:$0xff] %vm909, %v904
  %911 = vst.msk [vmem:[#allocation2 + $0x8] sm:$0xff] %vm909, %v906
  %v912 = vld [vmem:[#allocation2] sm:$0xff]
  %v913 = vld [vmem:[#allocation2 + $0x8] sm:$0xff]
  %v914 = vpack.c.bf16 %v913, %v912
  %v915 = vlaneseq
  %v916 = vshrl.u32 %v915, 7
  %v917 = vsub.s32 0, %v916
  %v918 = vrot.slane %v119, %v917
  %919 = vrot.lane.b32.xlu0 %v139, 32
  %v920 = vpop.permute.xlu0 %919
  %921 = vrot.lane.b32.xlu0 %v140, 32
  %v922 = vpop.permute.xlu0 %921
  %v926 = vsel %vm143, %v914, 0
  %928 = vmatprep.subr.bf16.mxu0 0
  %929 = vmatpush1.bf16.msra.mxu0 0
  %930 = vmatprep.subr.bf16.mxu0 0
  %931 = vmatpush1.bf16.msra.mxu0 0
  %932 = vmatprep.subr.bf16.mxu0 0
  %933 = vmatpush1.bf16.msra.mxu0 0
  %934 = vmatprep.subr.bf16.mxu0 0
  %935 = vmatpush1.bf16.msra.mxu0 0
  %936 = vmatprep.subr.bf16.mxu0 0
  %937 = vmatpush1.bf16.msra.mxu0 0
  %938 = vmatprep.subr.bf16.mxu0 0
  %939 = vmatpush1.bf16.msra.mxu0 0
  %940 = vmatprep.subr.bf16.mxu0 0
  %941 = vmatpush1.bf16.msra.mxu0 %v922
  %942 = vmatprep.subr.bf16.mxu0 0
  %943 = vmatpush1.bf16.msra.mxu0 %v920
  %944 = vmatprep.subr.bf16.mxu0 0
  %945 = vmatpush2.bf16.msra.mxu0 0
  %946 = vmatprep.subr.bf16.mxu0 0
  %947 = vmatpush2.bf16.msra.mxu0 0
  %948 = vmatprep.subr.bf16.mxu0 0
  %949 = vmatpush2.bf16.msra.mxu0 0
  %950 = vmatprep.subr.bf16.mxu0 0
  %951 = vmatpush2.bf16.msra.mxu0 0
  %952 = vmatprep.subr.bf16.mxu0 0
  %953 = vmatpush2.bf16.msra.mxu0 0
  %954 = vmatprep.subr.bf16.mxu0 0
  %955 = vmatpush2.bf16.msra.mxu0 0
  %956 = vmatprep.subr.bf16.mxu0 0
  %957 = vmatpush2.bf16.msra.mxu0 0
  %958 = vmatprep.subr.bf16.mxu0 0
  %959 = vmatpush2.bf16.msra.mxu0 0
  %960 = vmatprep.mubr.bf16.mxu0 0
  %961 = vmatmul.mubr.bf16.gmra.mxu0 %v926
  %v962 = vpop.f32.mrf.mxu0
  %v963 = vadd.f32 %v918, %v962
  %v964 = vpop.f32.mrf.mxu0
  %v965 = vpop.f32.mrf.mxu0
  %v966 = vadd.f32 %v918, %v965
  %v967 = vpop.f32.mrf.mxu0
  %968 = vdwg.mxu0
  %v969 = vadd.f32 %v104, %v963
  %v970 = vadd.f32 %v107, %v966
  %v971 = vsel %vm143, %v969, 0.0
  %972 = vadd.xlane.f32.xlu0 %v971
  %v973 = vpop.xlane.xlu0 %972
  %v974 = vsel %vm143, %v970, 0.0
  %975 = vadd.xlane.f32.xlu0 %v974
  %v976 = vpop.xlane.xlu0 %975
  %v977 = vrcp.pop 32.0
  %v978 = vmul.f32 %v973, %v977
  %v979 = vmul.f32 %v976, %v977
  %v980 = vsub.f32 %v969, %v978
  %v981 = vsub.f32 %v970, %v979
  %v982 = vmul.f32 %v980, %v980
  %v983 = vmul.f32 %v981, %v981
  %v984 = vsel %vm143, %v982, 0.0
  %985 = vadd.xlane.f32.xlu0 %v984
  %v986 = vpop.xlane.xlu0 %985
  %v987 = vsel %vm143, %v983, 0.0
  %988 = vadd.xlane.f32.xlu0 %v987
  %v989 = vpop.xlane.xlu0 %988
  %v990 = vmul.f32 %v986, %v977
  %v991 = vmul.f32 %v989, %v977
  %v992 = vadd.f32 %v990, 1e-05
  %v993 = vadd.f32 %v991, 1e-05
  %v994 = vrsqrt.pop %v992
  %v995 = vrsqrt.pop %v993
  %v996 = vmul.f32 %v980, %v994
  %v997 = vmul.f32 %v981, %v995
  %v998 = vlaneseq
  %v999 = vshrl.u32 %v998, 7
  %v1000 = vsub.s32 0, %v999
  %v1001 = vrot.slane %v122, %v1000
  %v1002 = vmul.f32 %v996, %v1001
  %v1003 = vmul.f32 %v997, %v1001
  %v1004 = vlaneseq
  %v1005 = vshrl.u32 %v1004, 7
  %v1006 = vsub.s32 0, %v1005
  %v1007 = vrot.slane %v123, %v1006
  %v1008 = vadd.f32 %v1002, %v1007
  %v1009 = vadd.f32 %v1003, %v1007
  %v1010 = vpack.c.bf16 %v1009, %v1008
  %v1011 = vlaneseq
  %v1012 = vshrl.u32 %v1011, 7
  %v1013 = vsub.s32 0, %v1012
  %v1014 = vrot.slane %v120, %v1013
  %v1019 = vunpack.c.l.b16 %v114
  %v1020 = vunpack.c.l.b16 %v115
  %v1021 = vunpack.c.l.b16 %v116
  %v1022 = vunpack.c.l.b16 %v117
  %v1023 = vpack.c.b16 %v1020, %v1019
  %v1024 = vpack.c.b16 %v1022, %v1021
  %v1028 = vsel %vm143, %v1010, 0
  %1030 = vmatprep.subr.bf16.mxu0 0
  %1031 = vmatpush1.bf16.msra.mxu0 0
  %1032 = vmatprep.subr.bf16.mxu0 0
  %1033 = vmatpush1.bf16.msra.mxu0 0
  %1034 = vmatprep.subr.bf16.mxu0 0
  %1035 = vmatpush1.bf16.msra.mxu0 0
  %1036 = vmatprep.subr.bf16.mxu0 0
  %1037 = vmatpush1.bf16.msra.mxu0 0
  %1038 = vmatprep.subr.bf16.mxu0 0
  %1039 = vmatpush1.bf16.msra.mxu0 0
  %1040 = vmatprep.subr.bf16.mxu0 0
  %1041 = vmatpush1.bf16.msra.mxu0 0
  %1042 = vmatprep.subr.bf16.mxu0 0
  %1043 = vmatpush1.bf16.msra.mxu0 %v1024
  %1044 = vmatprep.subr.bf16.mxu0 0
  %1045 = vmatpush1.bf16.msra.mxu0 %v1023
  %1046 = vmatprep.subr.bf16.mxu0 0
  %1047 = vmatpush2.bf16.msra.mxu0 0
  %1048 = vmatprep.subr.bf16.mxu0 0
  %1049 = vmatpush2.bf16.msra.mxu0 0
  %1050 = vmatprep.subr.bf16.mxu0 0
  %1051 = vmatpush2.bf16.msra.mxu0 0
  %1052 = vmatprep.subr.bf16.mxu0 0
  %1053 = vmatpush2.bf16.msra.mxu0 0
  %1054 = vmatprep.subr.bf16.mxu0 0
  %1055 = vmatpush2.bf16.msra.mxu0 0
  %1056 = vmatprep.subr.bf16.mxu0 0
  %1057 = vmatpush2.bf16.msra.mxu0 0
  %1058 = vmatprep.subr.bf16.mxu0 0
  %1059 = vmatpush2.bf16.msra.mxu0 0
  %1060 = vmatprep.subr.bf16.mxu0 0
  %1061 = vmatpush2.bf16.msra.mxu0 0
  %1062 = vmatprep.mubr.bf16.mxu0 0
  %1063 = vmatmul.mubr.bf16.gmra.mxu0 %v1028
  %v1064 = vpop.f32.mrf.mxu0
  %v1065 = vadd.f32 %v1014, %v1064
  %v1066 = vpop.f32.mrf.mxu0
  %v1067 = vpop.f32.mrf.mxu0
  %v1068 = vadd.f32 %v1014, %v1067
  %v1069 = vpop.f32.mrf.mxu0
  %1070 = vdwg.mxu0
  %v1071 = vmax.f32 %v1065, 0.0
  %v1072 = vmax.f32 %v1068, 0.0
  %v1073 = vpack.c.bf16 %v1072, %v1071
  %v1074 = vld [vmem:[%s5] sm:$0xf]
  %v1075 = vld [vmem:[%s5 + $0x4] sm:$0xf]
  %v1076 = vld [vmem:[%s5 + $0x8] sm:$0xf]
  %v1077 = vld [vmem:[%s5 + $0xc] sm:$0xf]
  %v1078 = vld [vmem:[%s5 + $0x10] sm:$0xf]
  %v1079 = vld [vmem:[%s5 + $0x14] sm:$0xf]
  %v1080 = vld [vmem:[%s5 + $0x18] sm:$0xf]
  %v1081 = vld [vmem:[%s5 + $0x1c] sm:$0xf]
  %v1082 = vlaneseq
  %v1083 = vshrl.u32 %v1082, 7
  %v1084 = vsub.s32 0, %v1083
  %v1085 = vrot.slane %v121, %v1084
  %v1094 = vunpack.c.l.b16 %v1074
  %v1095 = vunpack.c.l.b16 %v1075
  %v1096 = vunpack.c.l.b16 %v1076
  %v1097 = vunpack.c.l.b16 %v1077
  %v1098 = vunpack.c.l.b16 %v1078
  %v1099 = vunpack.c.l.b16 %v1079
  %v1100 = vunpack.c.l.b16 %v1080
  %v1101 = vunpack.c.l.b16 %v1081
  %v1102 = vpack.c.b16 %v1095, %v1094
  %v1103 = vpack.c.b16 %v1097, %v1096
  %v1104 = vpack.c.b16 %v1099, %v1098
  %v1105 = vpack.c.b16 %v1101, %v1100
  %vm1110 = vcmask 523264
  %v1112 = vsel %vm1110, %v1073, 0
  %1114 = vmatprep.subr.bf16.mxu0 0
  %1115 = vmatpush1.bf16.msra.mxu0 0
  %1116 = vmatprep.subr.bf16.mxu0 0
  %1117 = vmatpush1.bf16.msra.mxu0 0
  %1118 = vmatprep.subr.bf16.mxu0 0
  %1119 = vmatpush1.bf16.msra.mxu0 0
  %1120 = vmatprep.subr.bf16.mxu0 0
  %1121 = vmatpush1.bf16.msra.mxu0 0
  %1122 = vmatprep.subr.bf16.mxu0 0
  %1123 = vmatpush1.bf16.msra.mxu0 %v1105
  %1124 = vmatprep.subr.bf16.mxu0 0
  %1125 = vmatpush1.bf16.msra.mxu0 %v1104
  %1126 = vmatprep.subr.bf16.mxu0 0
  %1127 = vmatpush1.bf16.msra.mxu0 %v1103
  %1128 = vmatprep.subr.bf16.mxu0 0
  %1129 = vmatpush1.bf16.msra.mxu0 %v1102
  %1130 = vmatprep.subr.bf16.mxu0 0
  %1131 = vmatpush2.bf16.msra.mxu0 0
  %1132 = vmatprep.subr.bf16.mxu0 0
  %1133 = vmatpush2.bf16.msra.mxu0 0
  %1134 = vmatprep.subr.bf16.mxu0 0
  %1135 = vmatpush2.bf16.msra.mxu0 0
  %1136 = vmatprep.subr.bf16.mxu0 0
  %1137 = vmatpush2.bf16.msra.mxu0 0
  %1138 = vmatprep.subr.bf16.mxu0 0
  %1139 = vmatpush2.bf16.msra.mxu0 0
  %1140 = vmatprep.subr.bf16.mxu0 0
  %1141 = vmatpush2.bf16.msra.mxu0 0
  %1142 = vmatprep.subr.bf16.mxu0 0
  %1143 = vmatpush2.bf16.msra.mxu0 0
  %1144 = vmatprep.subr.bf16.mxu0 0
  %1145 = vmatpush2.bf16.msra.mxu0 0
  %1146 = vmatprep.mubr.bf16.mxu0 0
  %1147 = vmatmul.mubr.bf16.gmra.mxu0 %v1112
  %v1148 = vpop.f32.mrf.mxu0
  %v1149 = vadd.f32 %v1085, %v1148
  %v1150 = vpop.f32.mrf.mxu0
  %v1151 = vpop.f32.mrf.mxu0
  %v1152 = vadd.f32 %v1085, %v1151
  %v1153 = vpop.f32.mrf.mxu0
  %1154 = vdwg.mxu0
  %v1155 = vadd.f32 %v1008, %v1149
  %v1156 = vadd.f32 %v1009, %v1152
  %v1157 = vsel %vm143, %v1155, 0.0
  %1158 = vadd.xlane.f32.xlu0 %v1157
  %v1159 = vpop.xlane.xlu0 %1158
  %v1160 = vsel %vm143, %v1156, 0.0
  %1161 = vadd.xlane.f32.xlu0 %v1160
  %v1162 = vpop.xlane.xlu0 %1161
  %v1163 = vmul.f32 %v1159, %v977
  %v1164 = vmul.f32 %v1162, %v977
  %v1165 = vsub.f32 %v1155, %v1163
  %v1166 = vsub.f32 %v1156, %v1164
  %v1167 = vmul.f32 %v1165, %v1165
  %v1168 = vmul.f32 %v1166, %v1166
  %v1169 = vsel %vm143, %v1167, 0.0
  %1170 = vadd.xlane.f32.xlu0 %v1169
  %v1171 = vpop.xlane.xlu0 %1170
  %v1172 = vsel %vm143, %v1168, 0.0
  %1173 = vadd.xlane.f32.xlu0 %v1172
  %v1174 = vpop.xlane.xlu0 %1173
  %v1175 = vmul.f32 %v1171, %v977
  %v1176 = vmul.f32 %v1174, %v977
  %v1177 = vadd.f32 %v1175, 1e-05
  %v1178 = vadd.f32 %v1176, 1e-05
  %v1179 = vrsqrt.pop %v1177
  %v1180 = vrsqrt.pop %v1178
  %v1181 = vmul.f32 %v1165, %v1179
  %v1182 = vmul.f32 %v1166, %v1180
  %v1183 = vlaneseq
  %v1184 = vshrl.u32 %v1183, 7
  %v1185 = vsub.s32 0, %v1184
  %v1186 = vrot.slane %v124, %v1185
  %v1187 = vmul.f32 %v1181, %v1186
  %v1188 = vmul.f32 %v1182, %v1186
  %v1189 = vlaneseq
  %v1190 = vshrl.u32 %v1189, 7
  %v1191 = vsub.s32 0, %v1190
  %v1192 = vrot.slane %v125, %v1191
  %v1193 = vadd.f32 %v1187, %v1192
  %v1194 = vadd.f32 %v1188, %v1192
  %v1195 = vmax.f32 %v1193, 0.0
  %v1196 = vmax.f32 %v1194, 0.0
  %v1197 = vld [vmem:[%s7] sm:$0xf]
  %v1198 = vld [vmem:[%s7 + $0x8] sm:$0xf]
  %v1199 = vld [vmem:[%s7 + $0x10] sm:$0xf]
  %v1200 = vld [vmem:[%s7 + $0x18] sm:$0xf]
  %v1201 = vld [vmem:[%s7 + $0x4] sm:$0xf]
  %v1202 = vld [vmem:[%s7 + $0xc] sm:$0xf]
  %v1203 = vld [vmem:[%s7 + $0x14] sm:$0xf]
  %v1204 = vld [vmem:[%s7 + $0x1c] sm:$0xf]
  %v1205 = vld [vmem:[%s9] sm:$0x1]
  %v1206 = vld [vmem:[%s9 + $0x1] sm:$0x1]
  %v1207 = vld [vmem:[%s9 + $0x2] sm:$0x1]
  %v1208 = vld [vmem:[%s9 + $0x3] sm:$0x1]
  %v1209 = vld [vmem:[%s9 + $0x4] sm:$0x1]
  %v1210 = vld [vmem:[%s9 + $0x5] sm:$0x1]
  %v1211 = vld [vmem:[%s9 + $0x6] sm:$0x1]
  %v1212 = vld [vmem:[%s9 + $0x7] sm:$0x1]
  %v1213 = vpack.c.bf16 %v1196, %v1195
  %v1214 = vlaneseq
  %v1215 = vshrl.u32 %v1214, 7
  %v1216 = vsub.s32 0, %v1215
  %v1217 = vrot.slane %v1205, %v1216
  %v1222 = vunpack.c.l.b16 %v1197
  %v1223 = vunpack.c.l.b16 %v1198
  %v1224 = vunpack.c.l.b16 %v1199
  %v1225 = vunpack.c.l.b16 %v1200
  %v1226 = vpack.c.b16 %v1223, %v1222
  %v1227 = vpack.c.b16 %v1225, %v1224
  %v1231 = vsel %vm143, %v1213, 0
  %1233 = vmatprep.subr.bf16.mxu0 0
  %1234 = vmatpush1.bf16.msra.mxu0 0
  %1235 = vmatprep.subr.bf16.mxu0 0
  %1236 = vmatpush1.bf16.msra.mxu0 0
  %1237 = vmatprep.subr.bf16.mxu0 0
  %1238 = vmatpush1.bf16.msra.mxu0 0
  %1239 = vmatprep.subr.bf16.mxu0 0
  %1240 = vmatpush1.bf16.msra.mxu0 0
  %1241 = vmatprep.subr.bf16.mxu0 0
  %1242 = vmatpush1.bf16.msra.mxu0 0
  %1243 = vmatprep.subr.bf16.mxu0 0
  %1244 = vmatpush1.bf16.msra.mxu0 0
  %1245 = vmatprep.subr.bf16.mxu0 0
  %1246 = vmatpush1.bf16.msra.mxu0 %v1227
  %1247 = vmatprep.subr.bf16.mxu0 0
  %1248 = vmatpush1.bf16.msra.mxu0 %v1226
  %1249 = vmatprep.subr.bf16.mxu0 0
  %1250 = vmatpush2.bf16.msra.mxu0 0
  %1251 = vmatprep.subr.bf16.mxu0 0
  %1252 = vmatpush2.bf16.msra.mxu0 0
  %1253 = vmatprep.subr.bf16.mxu0 0
  %1254 = vmatpush2.bf16.msra.mxu0 0
  %1255 = vmatprep.subr.bf16.mxu0 0
  %1256 = vmatpush2.bf16.msra.mxu0 0
  %1257 = vmatprep.subr.bf16.mxu0 0
  %1258 = vmatpush2.bf16.msra.mxu0 0
  %1259 = vmatprep.subr.bf16.mxu0 0
  %1260 = vmatpush2.bf16.msra.mxu0 0
  %1261 = vmatprep.subr.bf16.mxu0 0
  %1262 = vmatpush2.bf16.msra.mxu0 0
  %1263 = vmatprep.subr.bf16.mxu0 0
  %1264 = vmatpush2.bf16.msra.mxu0 0
  %1265 = vmatprep.mubr.bf16.mxu0 0
  %1266 = vmatmul.mubr.bf16.gmra.mxu0 %v1231
  %v1267 = vpop.f32.mrf.mxu0
  %v1268 = vadd.f32 %v1217, %v1267
  %v1269 = vpop.f32.mrf.mxu0
  %v1270 = vpop.f32.mrf.mxu0
  %v1271 = vadd.f32 %v1217, %v1270
  %v1272 = vpop.f32.mrf.mxu0
  %1273 = vdwg.mxu0
  %v1274 = vpack.c.bf16 %v1271, %v1268
  %1277 = vrot.lane.b32.xlu0 %v1268, 96
  %v1278 = vpop.permute.xlu0 %1277
  %1279 = vrot.lane.b32.xlu0 %v1271, 96
  %v1280 = vpop.permute.xlu0 %1279
  %1283 = vxpose.xlu0.b32.start [1/16] %v1278, 128
  %1284 = vxpose.xlu0.b32.cont [2/16] %v1280, 128
  %1285 = vxpose.xlu0.b32.cont [3/16] 0.0, 128
  %1286 = vxpose.xlu0.b32.cont [4/16] 0.0, 128
  %1287 = vxpose.xlu0.b32.cont [5/16] 0.0, 128
  %1288 = vxpose.xlu0.b32.cont [6/16] 0.0, 128
  %1289 = vxpose.xlu0.b32.cont [7/16] 0.0, 128
  %1290 = vxpose.xlu0.b32.cont [8/16] 0.0, 128
  %1291 = vxpose.xlu0.b32.cont [9/16] 0.0, 128
  %1292 = vxpose.xlu0.b32.cont [10/16] 0.0, 128
  %1293 = vxpose.xlu0.b32.cont [11/16] 0.0, 128
  %1294 = vxpose.xlu0.b32.cont [12/16] 0.0, 128
  %1295 = vxpose.xlu0.b32.cont [13/16] 0.0, 128
  %1296 = vxpose.xlu0.b32.cont [14/16] 0.0, 128
  %1297 = vxpose.xlu0.b32.cont [15/16] 0.0, 128
  %1298 = vxpose.xlu0.b32.end [16/16] 0.0, 128
  %v1299 = vpop.trf.xlu0
  %v1300 = vpop.trf.xlu0
  %v1301 = vpop.trf.xlu0
  %v1302 = vpop.trf.xlu0
  %v1303 = vpop.trf.xlu0
  %v1304 = vpop.trf.xlu0
  %v1305 = vpop.trf.xlu0
  %v1306 = vpop.trf.xlu0
  %v1307 = vpop.trf.xlu0
  %v1308 = vpop.trf.xlu0
  %v1309 = vpop.trf.xlu0
  %v1310 = vpop.trf.xlu0
  %v1311 = vpop.trf.xlu0
  %v1312 = vpop.trf.xlu0
  %v1313 = vpop.trf.xlu0
  %v1314 = vpop.trf.xlu0
  %v1315 = vpack.c.bf16 %v1300, %v1299
  %v1316 = vpack.c.bf16 %v1302, %v1301
  %v1318 = vsel %vm231, %v1274, 0
  %v1321 = vsel %vm235, %v1315, 0
  %1323 = vmatprep.subr.bf16.mxu0 0
  %1324 = vmatpush1.bf16.msra.mxu0 0
  %1325 = vmatprep.subr.bf16.mxu0 0
  %1326 = vmatpush1.bf16.msra.mxu0 0
  %1327 = vmatprep.subr.bf16.mxu0 0
  %1328 = vmatpush1.bf16.msra.mxu0 0
  %1329 = vmatprep.subr.bf16.mxu0 0
  %1330 = vmatpush1.bf16.msra.mxu0 0
  %1331 = vmatprep.subr.bf16.mxu0 0
  %1332 = vmatpush1.bf16.msra.mxu0 0
  %1333 = vmatprep.subr.bf16.mxu0 0
  %1334 = vmatpush1.bf16.msra.mxu0 0
  %1335 = vmatprep.subr.bf16.mxu0 0
  %1336 = vmatpush1.bf16.msra.mxu0 0
  %1337 = vmatprep.subr.bf16.mxu0 0
  %1338 = vmatpush1.bf16.msra.mxu0 %v1321
  %1339 = vmatprep.subr.bf16.mxu0 0
  %1340 = vmatpush2.bf16.msra.mxu0 0
  %1341 = vmatprep.subr.bf16.mxu0 0
  %1342 = vmatpush2.bf16.msra.mxu0 0
  %1343 = vmatprep.subr.bf16.mxu0 0
  %1344 = vmatpush2.bf16.msra.mxu0 0
  %1345 = vmatprep.subr.bf16.mxu0 0
  %1346 = vmatpush2.bf16.msra.mxu0 0
  %1347 = vmatprep.subr.bf16.mxu0 0
  %1348 = vmatpush2.bf16.msra.mxu0 0
  %1349 = vmatprep.subr.bf16.mxu0 0
  %1350 = vmatpush2.bf16.msra.mxu0 0
  %1351 = vmatprep.subr.bf16.mxu0 0
  %1352 = vmatpush2.bf16.msra.mxu0 0
  %1353 = vmatprep.subr.bf16.mxu0 0
  %1354 = vmatpush2.bf16.msra.mxu0 0
  %1355 = vmatprep.mubr.bf16.mxu0 0
  %1356 = vmatmul.mubr.bf16.gmra.mxu0 %v1318
  %v1357 = vpop.f32.mrf.mxu0
  %v1358 = vadd.f32 0.0, %v1357
  %v1359 = vpop.f32.mrf.mxu0
  %v1360 = vpop.f32.mrf.mxu0
  %v1361 = vadd.f32 0.0, %v1360
  %v1362 = vpop.f32.mrf.mxu0
  %1363 = vdwg.mxu0
  %v1364 = vmul.f32 %v1358, 0.35355338
  %v1365 = vmul.f32 %v1361, 0.35355338
  %v1366 = vmax.f32 %v1364, -5.0
  %v1367 = vmax.f32 %v1365, -5.0
  %v1368 = vmin.f32 %v1366, 5.0
  %v1369 = vmin.f32 %v1367, 5.0
  %v1370 = vmul.f32 %v1368, 1.442695
  %v1371 = vpow.pop %v1370
  %v1372 = vmul.f32 %v1369, 1.442695
  %v1373 = vpow.pop %v1372
  %v1374 = vmul.f32 %v1371, %v42
  %v1375 = vmul.f32 %v1373, %v43
  %1376 = vrot.lane.b32.xlu0 %v1268, 64
  %v1377 = vpop.permute.xlu0 %1376
  %1378 = vrot.lane.b32.xlu0 %v1271, 64
  %v1379 = vpop.permute.xlu0 %1378
  %v1383 = vsel %vm298, %v1374, 0
  %v1386 = vsel %vm298, %v1375, 0
  %1388 = vmatprep.subr.mxu0 0.0
  %1389 = vmatpush1.msra.mxu0 0.0
  %1390 = vmatprep.subr.mxu0 0.0
  %1391 = vmatpush1.msra.mxu0 0.0
  %1392 = vmatprep.subr.mxu0 0.0
  %1393 = vmatpush1.msra.mxu0 0.0
  %1394 = vmatprep.subr.mxu0 0.0
  %1395 = vmatpush1.msra.mxu0 0.0
  %1396 = vmatprep.subr.mxu0 0.0
  %1397 = vmatpush1.msra.mxu0 0.0
  %1398 = vmatprep.subr.mxu0 0.0
  %1399 = vmatpush1.msra.mxu0 0.0
  %1400 = vmatprep.subr.mxu0 0.0
  %1401 = vmatpush1.msra.mxu0 0.0
  %1402 = vmatprep.subr.mxu0 0.0
  %1403 = vmatpush1.msra.mxu0 0.0
  %1404 = vmatprep.subr.mxu0 0.0
  %1405 = vmatpush1.msra.mxu0 0.0
  %1406 = vmatprep.subr.mxu0 0.0
  %1407 = vmatpush1.msra.mxu0 0.0
  %1408 = vmatprep.subr.mxu0 0.0
  %1409 = vmatpush1.msra.mxu0 0.0
  %1410 = vmatprep.subr.mxu0 0.0
  %1411 = vmatpush1.msra.mxu0 0.0
  %1412 = vmatprep.subr.mxu0 0.0
  %1413 = vmatpush1.msra.mxu0 0.0
  %1414 = vmatprep.subr.mxu0 0.0
  %1415 = vmatpush1.msra.mxu0 0.0
  %1416 = vmatprep.subr.mxu0 0.0
  %1417 = vmatpush1.msra.mxu0 %v1379
  %1418 = vmatprep.subr.mxu0 0.0
  %1419 = vmatpush1.msra.mxu0 %v1377
  %1420 = vmatprep.subr.mxu0 0.0
  %1421 = vmatpush2.msra.mxu0 0.0
  %1422 = vmatprep.subr.mxu0 0.0
  %1423 = vmatpush2.msra.mxu0 0.0
  %1424 = vmatprep.subr.mxu0 0.0
  %1425 = vmatpush2.msra.mxu0 0.0
  %1426 = vmatprep.subr.mxu0 0.0
  %1427 = vmatpush2.msra.mxu0 0.0
  %1428 = vmatprep.subr.mxu0 0.0
  %1429 = vmatpush2.msra.mxu0 0.0
  %1430 = vmatprep.subr.mxu0 0.0
  %1431 = vmatpush2.msra.mxu0 0.0
  %1432 = vmatprep.subr.mxu0 0.0
  %1433 = vmatpush2.msra.mxu0 0.0
  %1434 = vmatprep.subr.mxu0 0.0
  %1435 = vmatpush2.msra.mxu0 0.0
  %1436 = vmatprep.subr.mxu0 0.0
  %1437 = vmatpush2.msra.mxu0 0.0
  %1438 = vmatprep.subr.mxu0 0.0
  %1439 = vmatpush2.msra.mxu0 0.0
  %1440 = vmatprep.subr.mxu0 0.0
  %1441 = vmatpush2.msra.mxu0 0.0
  %1442 = vmatprep.subr.mxu0 0.0
  %1443 = vmatpush2.msra.mxu0 0.0
  %1444 = vmatprep.subr.mxu0 0.0
  %1445 = vmatpush2.msra.mxu0 0.0
  %1446 = vmatprep.subr.mxu0 0.0
  %1447 = vmatpush2.msra.mxu0 0.0
  %1448 = vmatprep.subr.mxu0 0.0
  %1449 = vmatpush2.msra.mxu0 0.0
  %1450 = vmatprep.subr.mxu0 0.0
  %1451 = vmatpush2.msra.mxu0 0.0
  %1452 = vmatprep.mubr.f32.mxu0 0.0
  %1453 = vmatmul.mubr.f32.gmra.mxu0 %v1383
  %v1454 = vpop.f32.mrf.mxu0
  %v1455 = vadd.f32 0.0, %v1454
  %v1456 = vpop.f32.mrf.mxu0
  %1457 = vmatprep.mubr.f32.mxu0 0.0
  %1458 = vmatmul.mubr.f32.gmra.mxu0 %v1386
  %v1459 = vpop.f32.mrf.mxu0
  %v1460 = vadd.f32 0.0, %v1459
  %v1461 = vpop.f32.mrf.mxu0
  %1462 = vdwg.mxu0
  %v1463 = vsel %vm298, %v1374, 0.0
  %1464 = vadd.xlane.f32.xlu0 %v1463
  %v1465 = vpop.xlane.xlu0 %1464
  %v1466 = vsel %vm298, %v1375, 0.0
  %1467 = vadd.xlane.f32.xlu0 %v1466
  %v1468 = vpop.xlane.xlu0 %1467
  %v1469 = vadd.f32 %v1465, 1e-06
  %v1470 = vadd.f32 %v1468, 1e-06
  %v1471 = vrcp.pop %v1469
  %v1472 = vmul.f32 %v1455, %v1471
  %v1473 = vrcp.pop %v1470
  %v1474 = vmul.f32 %v1460, %v1473
  %1475 = vst.msk [vmem:[#allocation2] sm:$0xff] %vm231, %v1472
  %1476 = vst.msk [vmem:[#allocation2 + $0x8] sm:$0xff] %vm231, %v1474
  %1478 = vrot.lane.b32.xlu0 %v1274, 120
  %v1479 = vpop.permute.xlu0 %1478
  %v1481 = vrot.slane %v1315, 4
  %v1483 = vsel %vm231, %v1479, 0
  %v1486 = vsel %vm235, %v1481, 0
  %1488 = vmatprep.subr.bf16.mxu0 0
  %1489 = vmatpush1.bf16.msra.mxu0 0
  %1490 = vmatprep.subr.bf16.mxu0 0
  %1491 = vmatpush1.bf16.msra.mxu0 0
  %1492 = vmatprep.subr.bf16.mxu0 0
  %1493 = vmatpush1.bf16.msra.mxu0 0
  %1494 = vmatprep.subr.bf16.mxu0 0
  %1495 = vmatpush1.bf16.msra.mxu0 0
  %1496 = vmatprep.subr.bf16.mxu0 0
  %1497 = vmatpush1.bf16.msra.mxu0 0
  %1498 = vmatprep.subr.bf16.mxu0 0
  %1499 = vmatpush1.bf16.msra.mxu0 0
  %1500 = vmatprep.subr.bf16.mxu0 0
  %1501 = vmatpush1.bf16.msra.mxu0 0
  %1502 = vmatprep.subr.bf16.mxu0 0
  %1503 = vmatpush1.bf16.msra.mxu0 %v1486
  %1504 = vmatprep.subr.bf16.mxu0 0
  %1505 = vmatpush2.bf16.msra.mxu0 0
  %1506 = vmatprep.subr.bf16.mxu0 0
  %1507 = vmatpush2.bf16.msra.mxu0 0
  %1508 = vmatprep.subr.bf16.mxu0 0
  %1509 = vmatpush2.bf16.msra.mxu0 0
  %1510 = vmatprep.subr.bf16.mxu0 0
  %1511 = vmatpush2.bf16.msra.mxu0 0
  %1512 = vmatprep.subr.bf16.mxu0 0
  %1513 = vmatpush2.bf16.msra.mxu0 0
  %1514 = vmatprep.subr.bf16.mxu0 0
  %1515 = vmatpush2.bf16.msra.mxu0 0
  %1516 = vmatprep.subr.bf16.mxu0 0
  %1517 = vmatpush2.bf16.msra.mxu0 0
  %1518 = vmatprep.subr.bf16.mxu0 0
  %1519 = vmatpush2.bf16.msra.mxu0 0
  %1520 = vmatprep.mubr.bf16.mxu0 0
  %1521 = vmatmul.mubr.bf16.gmra.mxu0 %v1483
  %v1522 = vpop.f32.mrf.mxu0
  %v1523 = vadd.f32 0.0, %v1522
  %v1524 = vpop.f32.mrf.mxu0
  %v1525 = vpop.f32.mrf.mxu0
  %v1526 = vadd.f32 0.0, %v1525
  %v1527 = vpop.f32.mrf.mxu0
  %1528 = vdwg.mxu0
  %v1529 = vmul.f32 %v1523, 0.35355338
  %v1530 = vmul.f32 %v1526, 0.35355338
  %v1531 = vmax.f32 %v1529, -5.0
  %v1532 = vmax.f32 %v1530, -5.0
  %v1533 = vmin.f32 %v1531, 5.0
  %v1534 = vmin.f32 %v1532, 5.0
  %v1535 = vmul.f32 %v1533, 1.442695
  %v1536 = vpow.pop %v1535
  %v1537 = vmul.f32 %v1534, 1.442695
  %v1538 = vpow.pop %v1537
  %v1539 = vmul.f32 %v1536, %v42
  %v1540 = vmul.f32 %v1538, %v43
  %1541 = vrot.lane.b32.xlu0 %v1268, 56
  %v1542 = vpop.permute.xlu0 %1541
  %1543 = vrot.lane.b32.xlu0 %v1271, 56
  %v1544 = vpop.permute.xlu0 %1543
  %v1548 = vsel %vm298, %v1539, 0
  %v1551 = vsel %vm298, %v1540, 0
  %1553 = vmatprep.subr.mxu0 0.0
  %1554 = vmatpush1.msra.mxu0 0.0
  %1555 = vmatprep.subr.mxu0 0.0
  %1556 = vmatpush1.msra.mxu0 0.0
  %1557 = vmatprep.subr.mxu0 0.0
  %1558 = vmatpush1.msra.mxu0 0.0
  %1559 = vmatprep.subr.mxu0 0.0
  %1560 = vmatpush1.msra.mxu0 0.0
  %1561 = vmatprep.subr.mxu0 0.0
  %1562 = vmatpush1.msra.mxu0 0.0
  %1563 = vmatprep.subr.mxu0 0.0
  %1564 = vmatpush1.msra.mxu0 0.0
  %1565 = vmatprep.subr.mxu0 0.0
  %1566 = vmatpush1.msra.mxu0 0.0
  %1567 = vmatprep.subr.mxu0 0.0
  %1568 = vmatpush1.msra.mxu0 0.0
  %1569 = vmatprep.subr.mxu0 0.0
  %1570 = vmatpush1.msra.mxu0 0.0
  %1571 = vmatprep.subr.mxu0 0.0
  %1572 = vmatpush1.msra.mxu0 0.0
  %1573 = vmatprep.subr.mxu0 0.0
  %1574 = vmatpush1.msra.mxu0 0.0
  %1575 = vmatprep.subr.mxu0 0.0
  %1576 = vmatpush1.msra.mxu0 0.0
  %1577 = vmatprep.subr.mxu0 0.0
  %1578 = vmatpush1.msra.mxu0 0.0
  %1579 = vmatprep.subr.mxu0 0.0
  %1580 = vmatpush1.msra.mxu0 0.0
  %1581 = vmatprep.subr.mxu0 0.0
  %1582 = vmatpush1.msra.mxu0 %v1544
  %1583 = vmatprep.subr.mxu0 0.0
  %1584 = vmatpush1.msra.mxu0 %v1542
  %1585 = vmatprep.subr.mxu0 0.0
  %1586 = vmatpush2.msra.mxu0 0.0
  %1587 = vmatprep.subr.mxu0 0.0
  %1588 = vmatpush2.msra.mxu0 0.0
  %1589 = vmatprep.subr.mxu0 0.0
  %1590 = vmatpush2.msra.mxu0 0.0
  %1591 = vmatprep.subr.mxu0 0.0
  %1592 = vmatpush2.msra.mxu0 0.0
  %1593 = vmatprep.subr.mxu0 0.0
  %1594 = vmatpush2.msra.mxu0 0.0
  %1595 = vmatprep.subr.mxu0 0.0
  %1596 = vmatpush2.msra.mxu0 0.0
  %1597 = vmatprep.subr.mxu0 0.0
  %1598 = vmatpush2.msra.mxu0 0.0
  %1599 = vmatprep.subr.mxu0 0.0
  %1600 = vmatpush2.msra.mxu0 0.0
  %1601 = vmatprep.subr.mxu0 0.0
  %1602 = vmatpush2.msra.mxu0 0.0
  %1603 = vmatprep.subr.mxu0 0.0
  %1604 = vmatpush2.msra.mxu0 0.0
  %1605 = vmatprep.subr.mxu0 0.0
  %1606 = vmatpush2.msra.mxu0 0.0
  %1607 = vmatprep.subr.mxu0 0.0
  %1608 = vmatpush2.msra.mxu0 0.0
  %1609 = vmatprep.subr.mxu0 0.0
  %1610 = vmatpush2.msra.mxu0 0.0
  %1611 = vmatprep.subr.mxu0 0.0
  %1612 = vmatpush2.msra.mxu0 0.0
  %1613 = vmatprep.subr.mxu0 0.0
  %1614 = vmatpush2.msra.mxu0 0.0
  %1615 = vmatprep.subr.mxu0 0.0
  %1616 = vmatpush2.msra.mxu0 0.0
  %1617 = vmatprep.mubr.f32.mxu0 0.0
  %1618 = vmatmul.mubr.f32.gmra.mxu0 %v1548
  %v1619 = vpop.f32.mrf.mxu0
  %v1620 = vadd.f32 0.0, %v1619
  %v1621 = vpop.f32.mrf.mxu0
  %1622 = vmatprep.mubr.f32.mxu0 0.0
  %1623 = vmatmul.mubr.f32.gmra.mxu0 %v1551
  %v1624 = vpop.f32.mrf.mxu0
  %v1625 = vadd.f32 0.0, %v1624
  %v1626 = vpop.f32.mrf.mxu0
  %1627 = vdwg.mxu0
  %v1628 = vsel %vm298, %v1539, 0.0
  %1629 = vadd.xlane.f32.xlu0 %v1628
  %v1630 = vpop.xlane.xlu0 %1629
  %v1631 = vsel %vm298, %v1540, 0.0
  %1632 = vadd.xlane.f32.xlu0 %v1631
  %v1633 = vpop.xlane.xlu0 %1632
  %v1634 = vadd.f32 %v1630, 1e-06
  %v1635 = vadd.f32 %v1633, 1e-06
  %v1636 = vrcp.pop %v1634
  %v1637 = vmul.f32 %v1620, %v1636
  %v1638 = vrcp.pop %v1635
  %v1639 = vmul.f32 %v1625, %v1638
  %1642 = vrot.lane.b32.xlu0 %v1637, 8
  %v1643 = vpop.permute.xlu0 %1642
  %1644 = vrot.lane.b32.xlu0 %v1639, 8
  %v1645 = vpop.permute.xlu0 %1644
  %1648 = vst.msk [vmem:[#allocation2] sm:$0xff] %vm565, %v1643
  %1649 = vst.msk [vmem:[#allocation2 + $0x8] sm:$0xff] %vm565, %v1645
  %1650 = vrot.lane.b32.xlu0 %v1274, 112
  %v1651 = vpop.permute.xlu0 %1650
  %v1653 = vsel %vm231, %v1651, 0
  %v1656 = vsel %vm235, %v1316, 0
  %1658 = vmatprep.subr.bf16.mxu0 0
  %1659 = vmatpush1.bf16.msra.mxu0 0
  %1660 = vmatprep.subr.bf16.mxu0 0
  %1661 = vmatpush1.bf16.msra.mxu0 0
  %1662 = vmatprep.subr.bf16.mxu0 0
  %1663 = vmatpush1.bf16.msra.mxu0 0
  %1664 = vmatprep.subr.bf16.mxu0 0
  %1665 = vmatpush1.bf16.msra.mxu0 0
  %1666 = vmatprep.subr.bf16.mxu0 0
  %1667 = vmatpush1.bf16.msra.mxu0 0
  %1668 = vmatprep.subr.bf16.mxu0 0
  %1669 = vmatpush1.bf16.msra.mxu0 0
  %1670 = vmatprep.subr.bf16.mxu0 0
  %1671 = vmatpush1.bf16.msra.mxu0 0
  %1672 = vmatprep.subr.bf16.mxu0 0
  %1673 = vmatpush1.bf16.msra.mxu0 %v1656
  %1674 = vmatprep.subr.bf16.mxu0 0
  %1675 = vmatpush2.bf16.msra.mxu0 0
  %1676 = vmatprep.subr.bf16.mxu0 0
  %1677 = vmatpush2.bf16.msra.mxu0 0
  %1678 = vmatprep.subr.bf16.mxu0 0
  %1679 = vmatpush2.bf16.msra.mxu0 0
  %1680 = vmatprep.subr.bf16.mxu0 0
  %1681 = vmatpush2.bf16.msra.mxu0 0
  %1682 = vmatprep.subr.bf16.mxu0 0
  %1683 = vmatpush2.bf16.msra.mxu0 0
  %1684 = vmatprep.subr.bf16.mxu0 0
  %1685 = vmatpush2.bf16.msra.mxu0 0
  %1686 = vmatprep.subr.bf16.mxu0 0
  %1687 = vmatpush2.bf16.msra.mxu0 0
  %1688 = vmatprep.subr.bf16.mxu0 0
  %1689 = vmatpush2.bf16.msra.mxu0 0
  %1690 = vmatprep.mubr.bf16.mxu0 0
  %1691 = vmatmul.mubr.bf16.gmra.mxu0 %v1653
  %v1692 = vpop.f32.mrf.mxu0
  %v1693 = vadd.f32 0.0, %v1692
  %v1694 = vpop.f32.mrf.mxu0
  %v1695 = vpop.f32.mrf.mxu0
  %v1696 = vadd.f32 0.0, %v1695
  %v1697 = vpop.f32.mrf.mxu0
  %1698 = vdwg.mxu0
  %v1699 = vmul.f32 %v1693, 0.35355338
  %v1700 = vmul.f32 %v1696, 0.35355338
  %v1701 = vmax.f32 %v1699, -5.0
  %v1702 = vmax.f32 %v1700, -5.0
  %v1703 = vmin.f32 %v1701, 5.0
  %v1704 = vmin.f32 %v1702, 5.0
  %v1705 = vmul.f32 %v1703, 1.442695
  %v1706 = vpow.pop %v1705
  %v1707 = vmul.f32 %v1704, 1.442695
  %v1708 = vpow.pop %v1707
  %v1709 = vmul.f32 %v1706, %v42
  %v1710 = vmul.f32 %v1708, %v43
  %1711 = vrot.lane.b32.xlu0 %v1268, 48
  %v1712 = vpop.permute.xlu0 %1711
  %1713 = vrot.lane.b32.xlu0 %v1271, 48
  %v1714 = vpop.permute.xlu0 %1713
  %v1718 = vsel %vm298, %v1709, 0
  %v1721 = vsel %vm298, %v1710, 0
  %1723 = vmatprep.subr.mxu0 0.0
  %1724 = vmatpush1.msra.mxu0 0.0
  %1725 = vmatprep.subr.mxu0 0.0
  %1726 = vmatpush1.msra.mxu0 0.0
  %1727 = vmatprep.subr.mxu0 0.0
  %1728 = vmatpush1.msra.mxu0 0.0
  %1729 = vmatprep.subr.mxu0 0.0
  %1730 = vmatpush1.msra.mxu0 0.0
  %1731 = vmatprep.subr.mxu0 0.0
  %1732 = vmatpush1.msra.mxu0 0.0
  %1733 = vmatprep.subr.mxu0 0.0
  %1734 = vmatpush1.msra.mxu0 0.0
  %1735 = vmatprep.subr.mxu0 0.0
  %1736 = vmatpush1.msra.mxu0 0.0
  %1737 = vmatprep.subr.mxu0 0.0
  %1738 = vmatpush1.msra.mxu0 0.0
  %1739 = vmatprep.subr.mxu0 0.0
  %1740 = vmatpush1.msra.mxu0 0.0
  %1741 = vmatprep.subr.mxu0 0.0
  %1742 = vmatpush1.msra.mxu0 0.0
  %1743 = vmatprep.subr.mxu0 0.0
  %1744 = vmatpush1.msra.mxu0 0.0
  %1745 = vmatprep.subr.mxu0 0.0
  %1746 = vmatpush1.msra.mxu0 0.0
  %1747 = vmatprep.subr.mxu0 0.0
  %1748 = vmatpush1.msra.mxu0 0.0
  %1749 = vmatprep.subr.mxu0 0.0
  %1750 = vmatpush1.msra.mxu0 0.0
  %1751 = vmatprep.subr.mxu0 0.0
  %1752 = vmatpush1.msra.mxu0 %v1714
  %1753 = vmatprep.subr.mxu0 0.0
  %1754 = vmatpush1.msra.mxu0 %v1712
  %1755 = vmatprep.subr.mxu0 0.0
  %1756 = vmatpush2.msra.mxu0 0.0
  %1757 = vmatprep.subr.mxu0 0.0
  %1758 = vmatpush2.msra.mxu0 0.0
  %1759 = vmatprep.subr.mxu0 0.0
  %1760 = vmatpush2.msra.mxu0 0.0
  %1761 = vmatprep.subr.mxu0 0.0
  %1762 = vmatpush2.msra.mxu0 0.0
  %1763 = vmatprep.subr.mxu0 0.0
  %1764 = vmatpush2.msra.mxu0 0.0
  %1765 = vmatprep.subr.mxu0 0.0
  %1766 = vmatpush2.msra.mxu0 0.0
  %1767 = vmatprep.subr.mxu0 0.0
  %1768 = vmatpush2.msra.mxu0 0.0
  %1769 = vmatprep.subr.mxu0 0.0
  %1770 = vmatpush2.msra.mxu0 0.0
  %1771 = vmatprep.subr.mxu0 0.0
  %1772 = vmatpush2.msra.mxu0 0.0
  %1773 = vmatprep.subr.mxu0 0.0
  %1774 = vmatpush2.msra.mxu0 0.0
  %1775 = vmatprep.subr.mxu0 0.0
  %1776 = vmatpush2.msra.mxu0 0.0
  %1777 = vmatprep.subr.mxu0 0.0
  %1778 = vmatpush2.msra.mxu0 0.0
  %1779 = vmatprep.subr.mxu0 0.0
  %1780 = vmatpush2.msra.mxu0 0.0
  %1781 = vmatprep.subr.mxu0 0.0
  %1782 = vmatpush2.msra.mxu0 0.0
  %1783 = vmatprep.subr.mxu0 0.0
  %1784 = vmatpush2.msra.mxu0 0.0
  %1785 = vmatprep.subr.mxu0 0.0
  %1786 = vmatpush2.msra.mxu0 0.0
  %1787 = vmatprep.mubr.f32.mxu0 0.0
  %1788 = vmatmul.mubr.f32.gmra.mxu0 %v1718
  %v1789 = vpop.f32.mrf.mxu0
  %v1790 = vadd.f32 0.0, %v1789
  %v1791 = vpop.f32.mrf.mxu0
  %1792 = vmatprep.mubr.f32.mxu0 0.0
  %1793 = vmatmul.mubr.f32.gmra.mxu0 %v1721
  %v1794 = vpop.f32.mrf.mxu0
  %v1795 = vadd.f32 0.0, %v1794
  %v1796 = vpop.f32.mrf.mxu0
  %1797 = vdwg.mxu0
  %v1798 = vsel %vm298, %v1709, 0.0
  %1799 = vadd.xlane.f32.xlu0 %v1798
  %v1800 = vpop.xlane.xlu0 %1799
  %v1801 = vsel %vm298, %v1710, 0.0
  %1802 = vadd.xlane.f32.xlu0 %v1801
  %v1803 = vpop.xlane.xlu0 %1802
  %v1804 = vadd.f32 %v1800, 1e-06
  %v1805 = vadd.f32 %v1803, 1e-06
  %v1806 = vrcp.pop %v1804
  %v1807 = vmul.f32 %v1790, %v1806
  %v1808 = vrcp.pop %v1805
  %v1809 = vmul.f32 %v1795, %v1808
  %1812 = vrot.lane.b32.xlu0 %v1807, 16
  %v1813 = vpop.permute.xlu0 %1812
  %1814 = vrot.lane.b32.xlu0 %v1809, 16
  %v1815 = vpop.permute.xlu0 %1814
  %1818 = vst.msk [vmem:[#allocation2] sm:$0xff] %vm736, %v1813
  %1819 = vst.msk [vmem:[#allocation2 + $0x8] sm:$0xff] %vm736, %v1815
  %1820 = vrot.lane.b32.xlu0 %v1274, 104
  %v1821 = vpop.permute.xlu0 %1820
  %v1823 = vrot.slane %v1316, 4
  %v1825 = vsel %vm231, %v1821, 0
  %v1828 = vsel %vm235, %v1823, 0
  %1830 = vmatprep.subr.bf16.mxu0 0
  %1831 = vmatpush1.bf16.msra.mxu0 0
  %1832 = vmatprep.subr.bf16.mxu0 0
  %1833 = vmatpush1.bf16.msra.mxu0 0
  %1834 = vmatprep.subr.bf16.mxu0 0
  %1835 = vmatpush1.bf16.msra.mxu0 0
  %1836 = vmatprep.subr.bf16.mxu0 0
  %1837 = vmatpush1.bf16.msra.mxu0 0
  %1838 = vmatprep.subr.bf16.mxu0 0
  %1839 = vmatpush1.bf16.msra.mxu0 0
  %1840 = vmatprep.subr.bf16.mxu0 0
  %1841 = vmatpush1.bf16.msra.mxu0 0
  %1842 = vmatprep.subr.bf16.mxu0 0
  %1843 = vmatpush1.bf16.msra.mxu0 0
  %1844 = vmatprep.subr.bf16.mxu0 0
  %1845 = vmatpush1.bf16.msra.mxu0 %v1828
  %1846 = vmatprep.subr.bf16.mxu0 0
  %1847 = vmatpush2.bf16.msra.mxu0 0
  %1848 = vmatprep.subr.bf16.mxu0 0
  %1849 = vmatpush2.bf16.msra.mxu0 0
  %1850 = vmatprep.subr.bf16.mxu0 0
  %1851 = vmatpush2.bf16.msra.mxu0 0
  %1852 = vmatprep.subr.bf16.mxu0 0
  %1853 = vmatpush2.bf16.msra.mxu0 0
  %1854 = vmatprep.subr.bf16.mxu0 0
  %1855 = vmatpush2.bf16.msra.mxu0 0
  %1856 = vmatprep.subr.bf16.mxu0 0
  %1857 = vmatpush2.bf16.msra.mxu0 0
  %1858 = vmatprep.subr.bf16.mxu0 0
  %1859 = vmatpush2.bf16.msra.mxu0 0
  %1860 = vmatprep.subr.bf16.mxu0 0
  %1861 = vmatpush2.bf16.msra.mxu0 0
  %1862 = vmatprep.mubr.bf16.mxu0 0
  %1863 = vmatmul.mubr.bf16.gmra.mxu0 %v1825
  %v1864 = vpop.f32.mrf.mxu0
  %v1865 = vadd.f32 0.0, %v1864
  %v1866 = vpop.f32.mrf.mxu0
  %v1867 = vpop.f32.mrf.mxu0
  %v1868 = vadd.f32 0.0, %v1867
  %v1869 = vpop.f32.mrf.mxu0
  %1870 = vdwg.mxu0
  %v1871 = vmul.f32 %v1865, 0.35355338
  %v1872 = vmul.f32 %v1868, 0.35355338
  %v1873 = vmax.f32 %v1871, -5.0
  %v1874 = vmax.f32 %v1872, -5.0
  %v1875 = vmin.f32 %v1873, 5.0
  %v1876 = vmin.f32 %v1874, 5.0
  %v1877 = vmul.f32 %v1875, 1.442695
  %v1878 = vpow.pop %v1877
  %v1879 = vmul.f32 %v1876, 1.442695
  %v1880 = vpow.pop %v1879
  %v1881 = vmul.f32 %v1878, %v42
  %v1882 = vmul.f32 %v1880, %v43
  %1883 = vrot.lane.b32.xlu0 %v1268, 40
  %v1884 = vpop.permute.xlu0 %1883
  %1885 = vrot.lane.b32.xlu0 %v1271, 40
  %v1886 = vpop.permute.xlu0 %1885
  %v1890 = vsel %vm298, %v1881, 0
  %v1893 = vsel %vm298, %v1882, 0
  %1895 = vmatprep.subr.mxu0 0.0
  %1896 = vmatpush1.msra.mxu0 0.0
  %1897 = vmatprep.subr.mxu0 0.0
  %1898 = vmatpush1.msra.mxu0 0.0
  %1899 = vmatprep.subr.mxu0 0.0
  %1900 = vmatpush1.msra.mxu0 0.0
  %1901 = vmatprep.subr.mxu0 0.0
  %1902 = vmatpush1.msra.mxu0 0.0
  %1903 = vmatprep.subr.mxu0 0.0
  %1904 = vmatpush1.msra.mxu0 0.0
  %1905 = vmatprep.subr.mxu0 0.0
  %1906 = vmatpush1.msra.mxu0 0.0
  %1907 = vmatprep.subr.mxu0 0.0
  %1908 = vmatpush1.msra.mxu0 0.0
  %1909 = vmatprep.subr.mxu0 0.0
  %1910 = vmatpush1.msra.mxu0 0.0
  %1911 = vmatprep.subr.mxu0 0.0
  %1912 = vmatpush1.msra.mxu0 0.0
  %1913 = vmatprep.subr.mxu0 0.0
  %1914 = vmatpush1.msra.mxu0 0.0
  %1915 = vmatprep.subr.mxu0 0.0
  %1916 = vmatpush1.msra.mxu0 0.0
  %1917 = vmatprep.subr.mxu0 0.0
  %1918 = vmatpush1.msra.mxu0 0.0
  %1919 = vmatprep.subr.mxu0 0.0
  %1920 = vmatpush1.msra.mxu0 0.0
  %1921 = vmatprep.subr.mxu0 0.0
  %1922 = vmatpush1.msra.mxu0 0.0
  %1923 = vmatprep.subr.mxu0 0.0
  %1924 = vmatpush1.msra.mxu0 %v1886
  %1925 = vmatprep.subr.mxu0 0.0
  %1926 = vmatpush1.msra.mxu0 %v1884
  %1927 = vmatprep.subr.mxu0 0.0
  %1928 = vmatpush2.msra.mxu0 0.0
  %1929 = vmatprep.subr.mxu0 0.0
  %1930 = vmatpush2.msra.mxu0 0.0
  %1931 = vmatprep.subr.mxu0 0.0
  %1932 = vmatpush2.msra.mxu0 0.0
  %1933 = vmatprep.subr.mxu0 0.0
  %1934 = vmatpush2.msra.mxu0 0.0
  %1935 = vmatprep.subr.mxu0 0.0
  %1936 = vmatpush2.msra.mxu0 0.0
  %1937 = vmatprep.subr.mxu0 0.0
  %1938 = vmatpush2.msra.mxu0 0.0
  %1939 = vmatprep.subr.mxu0 0.0
  %1940 = vmatpush2.msra.mxu0 0.0
  %1941 = vmatprep.subr.mxu0 0.0
  %1942 = vmatpush2.msra.mxu0 0.0
  %1943 = vmatprep.subr.mxu0 0.0
  %1944 = vmatpush2.msra.mxu0 0.0
  %1945 = vmatprep.subr.mxu0 0.0
  %1946 = vmatpush2.msra.mxu0 0.0
  %1947 = vmatprep.subr.mxu0 0.0
  %1948 = vmatpush2.msra.mxu0 0.0
  %1949 = vmatprep.subr.mxu0 0.0
  %1950 = vmatpush2.msra.mxu0 0.0
  %1951 = vmatprep.subr.mxu0 0.0
  %1952 = vmatpush2.msra.mxu0 0.0
  %1953 = vmatprep.subr.mxu0 0.0
  %1954 = vmatpush2.msra.mxu0 0.0
  %1955 = vmatprep.subr.mxu0 0.0
  %1956 = vmatpush2.msra.mxu0 0.0
  %1957 = vmatprep.subr.mxu0 0.0
  %1958 = vmatpush2.msra.mxu0 0.0
  %1959 = vmatprep.mubr.f32.mxu0 0.0
  %1960 = vmatmul.mubr.f32.gmra.mxu0 %v1890
  %v1961 = vpop.f32.mrf.mxu0
  %v1962 = vadd.f32 0.0, %v1961
  %v1963 = vpop.f32.mrf.mxu0
  %1964 = vmatprep.mubr.f32.mxu0 0.0
  %1965 = vmatmul.mubr.f32.gmra.mxu0 %v1893
  %v1966 = vpop.f32.mrf.mxu0
  %v1967 = vadd.f32 0.0, %v1966
  %v1968 = vpop.f32.mrf.mxu0
  %1969 = vdwg.mxu0
  %v1970 = vsel %vm298, %v1881, 0.0
  %1971 = vadd.xlane.f32.xlu0 %v1970
  %v1972 = vpop.xlane.xlu0 %1971
  %v1973 = vsel %vm298, %v1882, 0.0
  %1974 = vadd.xlane.f32.xlu0 %v1973
  %v1975 = vpop.xlane.xlu0 %1974
  %v1976 = vadd.f32 %v1972, 1e-06
  %v1977 = vadd.f32 %v1975, 1e-06
  %v1978 = vrcp.pop %v1976
  %v1979 = vmul.f32 %v1962, %v1978
  %v1980 = vrcp.pop %v1977
  %v1981 = vmul.f32 %v1967, %v1980
  %1984 = vrot.lane.b32.xlu0 %v1979, 24
  %v1985 = vpop.permute.xlu0 %1984
  %1986 = vrot.lane.b32.xlu0 %v1981, 24
  %v1987 = vpop.permute.xlu0 %1986
  %1990 = vst.msk [vmem:[#allocation2] sm:$0xff] %vm909, %v1985
  %1991 = vst.msk [vmem:[#allocation2 + $0x8] sm:$0xff] %vm909, %v1987
  %v1992 = vld [vmem:[#allocation2] sm:$0xff]
  %v1993 = vld [vmem:[#allocation2 + $0x8] sm:$0xff]
  %v1994 = vpack.c.bf16 %v1993, %v1992
  %v1995 = vlaneseq
  %v1996 = vshrl.u32 %v1995, 7
  %v1997 = vsub.s32 0, %v1996
  %v1998 = vrot.slane %v1206, %v1997
  %1999 = vrot.lane.b32.xlu0 %v1226, 32
  %v2000 = vpop.permute.xlu0 %1999
  %2001 = vrot.lane.b32.xlu0 %v1227, 32
  %v2002 = vpop.permute.xlu0 %2001
  %v2006 = vsel %vm143, %v1994, 0
  %2008 = vmatprep.subr.bf16.mxu0 0
  %2009 = vmatpush1.bf16.msra.mxu0 0
  %2010 = vmatprep.subr.bf16.mxu0 0
  %2011 = vmatpush1.bf16.msra.mxu0 0
  %2012 = vmatprep.subr.bf16.mxu0 0
  %2013 = vmatpush1.bf16.msra.mxu0 0
  %2014 = vmatprep.subr.bf16.mxu0 0
  %2015 = vmatpush1.bf16.msra.mxu0 0
  %2016 = vmatprep.subr.bf16.mxu0 0
  %2017 = vmatpush1.bf16.msra.mxu0 0
  %2018 = vmatprep.subr.bf16.mxu0 0
  %2019 = vmatpush1.bf16.msra.mxu0 0
  %2020 = vmatprep.subr.bf16.mxu0 0
  %2021 = vmatpush1.bf16.msra.mxu0 %v2002
  %2022 = vmatprep.subr.bf16.mxu0 0
  %2023 = vmatpush1.bf16.msra.mxu0 %v2000
  %2024 = vmatprep.subr.bf16.mxu0 0
  %2025 = vmatpush2.bf16.msra.mxu0 0
  %2026 = vmatprep.subr.bf16.mxu0 0
  %2027 = vmatpush2.bf16.msra.mxu0 0
  %2028 = vmatprep.subr.bf16.mxu0 0
  %2029 = vmatpush2.bf16.msra.mxu0 0
  %2030 = vmatprep.subr.bf16.mxu0 0
  %2031 = vmatpush2.bf16.msra.mxu0 0
  %2032 = vmatprep.subr.bf16.mxu0 0
  %2033 = vmatpush2.bf16.msra.mxu0 0
  %2034 = vmatprep.subr.bf16.mxu0 0
  %2035 = vmatpush2.bf16.msra.mxu0 0
  %2036 = vmatprep.subr.bf16.mxu0 0
  %2037 = vmatpush2.bf16.msra.mxu0 0
  %2038 = vmatprep.subr.bf16.mxu0 0
  %2039 = vmatpush2.bf16.msra.mxu0 0
  %2040 = vmatprep.mubr.bf16.mxu0 0
  %2041 = vmatmul.mubr.bf16.gmra.mxu0 %v2006
  %v2042 = vpop.f32.mrf.mxu0
  %v2043 = vadd.f32 %v1998, %v2042
  %v2044 = vpop.f32.mrf.mxu0
  %v2045 = vpop.f32.mrf.mxu0
  %v2046 = vadd.f32 %v1998, %v2045
  %v2047 = vpop.f32.mrf.mxu0
  %2048 = vdwg.mxu0
  %v2049 = vadd.f32 %v1195, %v2043
  %v2050 = vadd.f32 %v1196, %v2046
  %v2051 = vsel %vm143, %v2049, 0.0
  %2052 = vadd.xlane.f32.xlu0 %v2051
  %v2053 = vpop.xlane.xlu0 %2052
  %v2054 = vsel %vm143, %v2050, 0.0
  %2055 = vadd.xlane.f32.xlu0 %v2054
  %v2056 = vpop.xlane.xlu0 %2055
  %v2057 = vmul.f32 %v2053, %v977
  %v2058 = vmul.f32 %v2056, %v977
  %v2059 = vsub.f32 %v2049, %v2057
  %v2060 = vsub.f32 %v2050, %v2058
  %v2061 = vmul.f32 %v2059, %v2059
  %v2062 = vmul.f32 %v2060, %v2060
  %v2063 = vsel %vm143, %v2061, 0.0
  %2064 = vadd.xlane.f32.xlu0 %v2063
  %v2065 = vpop.xlane.xlu0 %2064
  %v2066 = vsel %vm143, %v2062, 0.0
  %2067 = vadd.xlane.f32.xlu0 %v2066
  %v2068 = vpop.xlane.xlu0 %2067
  %v2069 = vmul.f32 %v2065, %v977
  %v2070 = vmul.f32 %v2068, %v977
  %v2071 = vadd.f32 %v2069, 1e-05
  %v2072 = vadd.f32 %v2070, 1e-05
  %v2073 = vrsqrt.pop %v2071
  %v2074 = vrsqrt.pop %v2072
  %v2075 = vmul.f32 %v2059, %v2073
  %v2076 = vmul.f32 %v2060, %v2074
  %v2077 = vlaneseq
  %v2078 = vshrl.u32 %v2077, 7
  %v2079 = vsub.s32 0, %v2078
  %v2080 = vrot.slane %v1209, %v2079
  %v2081 = vmul.f32 %v2075, %v2080
  %v2082 = vmul.f32 %v2076, %v2080
  %v2083 = vlaneseq
  %v2084 = vshrl.u32 %v2083, 7
  %v2085 = vsub.s32 0, %v2084
  %v2086 = vrot.slane %v1210, %v2085
  %v2087 = vadd.f32 %v2081, %v2086
  %v2088 = vadd.f32 %v2082, %v2086
  %v2089 = vpack.c.bf16 %v2088, %v2087
  %v2090 = vlaneseq
  %v2091 = vshrl.u32 %v2090, 7
  %v2092 = vsub.s32 0, %v2091
  %v2093 = vrot.slane %v1207, %v2092
  %v2098 = vunpack.c.l.b16 %v1201
  %v2099 = vunpack.c.l.b16 %v1202
  %v2100 = vunpack.c.l.b16 %v1203
  %v2101 = vunpack.c.l.b16 %v1204
  %v2102 = vpack.c.b16 %v2099, %v2098
  %v2103 = vpack.c.b16 %v2101, %v2100
  %v2107 = vsel %vm143, %v2089, 0
  %2109 = vmatprep.subr.bf16.mxu0 0
  %2110 = vmatpush1.bf16.msra.mxu0 0
  %2111 = vmatprep.subr.bf16.mxu0 0
  %2112 = vmatpush1.bf16.msra.mxu0 0
  %2113 = vmatprep.subr.bf16.mxu0 0
  %2114 = vmatpush1.bf16.msra.mxu0 0
  %2115 = vmatprep.subr.bf16.mxu0 0
  %2116 = vmatpush1.bf16.msra.mxu0 0
  %2117 = vmatprep.subr.bf16.mxu0 0
  %2118 = vmatpush1.bf16.msra.mxu0 0
  %2119 = vmatprep.subr.bf16.mxu0 0
  %2120 = vmatpush1.bf16.msra.mxu0 0
  %2121 = vmatprep.subr.bf16.mxu0 0
  %2122 = vmatpush1.bf16.msra.mxu0 %v2103
  %2123 = vmatprep.subr.bf16.mxu0 0
  %2124 = vmatpush1.bf16.msra.mxu0 %v2102
  %2125 = vmatprep.subr.bf16.mxu0 0
  %2126 = vmatpush2.bf16.msra.mxu0 0
  %2127 = vmatprep.subr.bf16.mxu0 0
  %2128 = vmatpush2.bf16.msra.mxu0 0
  %2129 = vmatprep.subr.bf16.mxu0 0
  %2130 = vmatpush2.bf16.msra.mxu0 0
  %2131 = vmatprep.subr.bf16.mxu0 0
  %2132 = vmatpush2.bf16.msra.mxu0 0
  %2133 = vmatprep.subr.bf16.mxu0 0
  %2134 = vmatpush2.bf16.msra.mxu0 0
  %2135 = vmatprep.subr.bf16.mxu0 0
  %2136 = vmatpush2.bf16.msra.mxu0 0
  %2137 = vmatprep.subr.bf16.mxu0 0
  %2138 = vmatpush2.bf16.msra.mxu0 0
  %2139 = vmatprep.subr.bf16.mxu0 0
  %2140 = vmatpush2.bf16.msra.mxu0 0
  %2141 = vmatprep.mubr.bf16.mxu0 0
  %2142 = vmatmul.mubr.bf16.gmra.mxu0 %v2107
  %v2143 = vpop.f32.mrf.mxu0
  %v2144 = vadd.f32 %v2093, %v2143
  %v2145 = vpop.f32.mrf.mxu0
  %v2146 = vpop.f32.mrf.mxu0
  %v2147 = vadd.f32 %v2093, %v2146
  %v2148 = vpop.f32.mrf.mxu0
  %2149 = vdwg.mxu0
  %v2150 = vmax.f32 %v2144, 0.0
  %v2151 = vmax.f32 %v2147, 0.0
  %v2152 = vpack.c.bf16 %v2151, %v2150
  %v2153 = vld [vmem:[%s8] sm:$0xf]
  %v2154 = vld [vmem:[%s8 + $0x4] sm:$0xf]
  %v2155 = vld [vmem:[%s8 + $0x8] sm:$0xf]
  %v2156 = vld [vmem:[%s8 + $0xc] sm:$0xf]
  %v2157 = vld [vmem:[%s8 + $0x10] sm:$0xf]
  %v2158 = vld [vmem:[%s8 + $0x14] sm:$0xf]
  %v2159 = vld [vmem:[%s8 + $0x18] sm:$0xf]
  %v2160 = vld [vmem:[%s8 + $0x1c] sm:$0xf]
  %v2161 = vlaneseq
  %v2162 = vshrl.u32 %v2161, 7
  %v2163 = vsub.s32 0, %v2162
  %v2164 = vrot.slane %v1208, %v2163
  %v2173 = vunpack.c.l.b16 %v2153
  %v2174 = vunpack.c.l.b16 %v2154
  %v2175 = vunpack.c.l.b16 %v2155
  %v2176 = vunpack.c.l.b16 %v2156
  %v2177 = vunpack.c.l.b16 %v2157
  %v2178 = vunpack.c.l.b16 %v2158
  %v2179 = vunpack.c.l.b16 %v2159
  %v2180 = vunpack.c.l.b16 %v2160
  %v2181 = vpack.c.b16 %v2174, %v2173
  %v2182 = vpack.c.b16 %v2176, %v2175
  %v2183 = vpack.c.b16 %v2178, %v2177
  %v2184 = vpack.c.b16 %v2180, %v2179
  %v2190 = vsel %vm1110, %v2152, 0
  %2192 = vmatprep.subr.bf16.mxu0 0
  %2193 = vmatpush1.bf16.msra.mxu0 0
  %2194 = vmatprep.subr.bf16.mxu0 0
  %2195 = vmatpush1.bf16.msra.mxu0 0
  %2196 = vmatprep.subr.bf16.mxu0 0
  %2197 = vmatpush1.bf16.msra.mxu0 0
  %2198 = vmatprep.subr.bf16.mxu0 0
  %2199 = vmatpush1.bf16.msra.mxu0 0
  %2200 = vmatprep.subr.bf16.mxu0 0
  %2201 = vmatpush1.bf16.msra.mxu0 %v2184
  %2202 = vmatprep.subr.bf16.mxu0 0
  %2203 = vmatpush1.bf16.msra.mxu0 %v2183
  %2204 = vmatprep.subr.bf16.mxu0 0
  %2205 = vmatpush1.bf16.msra.mxu0 %v2182
  %2206 = vmatprep.subr.bf16.mxu0 0
  %2207 = vmatpush1.bf16.msra.mxu0 %v2181
  %2208 = vmatprep.subr.bf16.mxu0 0
  %2209 = vmatpush2.bf16.msra.mxu0 0
  %2210 = vmatprep.subr.bf16.mxu0 0
  %2211 = vmatpush2.bf16.msra.mxu0 0
  %2212 = vmatprep.subr.bf16.mxu0 0
  %2213 = vmatpush2.bf16.msra.mxu0 0
  %2214 = vmatprep.subr.bf16.mxu0 0
  %2215 = vmatpush2.bf16.msra.mxu0 0
  %2216 = vmatprep.subr.bf16.mxu0 0
  %2217 = vmatpush2.bf16.msra.mxu0 0
  %2218 = vmatprep.subr.bf16.mxu0 0
  %2219 = vmatpush2.bf16.msra.mxu0 0
  %2220 = vmatprep.subr.bf16.mxu0 0
  %2221 = vmatpush2.bf16.msra.mxu0 0
  %2222 = vmatprep.subr.bf16.mxu0 0
  %2223 = vmatpush2.bf16.msra.mxu0 0
  %2224 = vmatprep.mubr.bf16.mxu0 0
  %2225 = vmatmul.mubr.bf16.gmra.mxu0 %v2190
  %v2226 = vpop.f32.mrf.mxu0
  %v2227 = vadd.f32 %v2164, %v2226
  %v2228 = vpop.f32.mrf.mxu0
  %v2229 = vpop.f32.mrf.mxu0
  %v2230 = vadd.f32 %v2164, %v2229
  %v2231 = vpop.f32.mrf.mxu0
  %2232 = vdwg.mxu0
  %v2233 = vadd.f32 %v2087, %v2227
  %v2234 = vadd.f32 %v2088, %v2230
  %v2235 = vsel %vm143, %v2233, 0.0
  %2236 = vadd.xlane.f32.xlu0 %v2235
  %v2237 = vpop.xlane.xlu0 %2236
  %v2238 = vsel %vm143, %v2234, 0.0
  %2239 = vadd.xlane.f32.xlu0 %v2238
  %v2240 = vpop.xlane.xlu0 %2239
  %v2241 = vmul.f32 %v2237, %v977
  %v2242 = vmul.f32 %v2240, %v977
  %v2243 = vsub.f32 %v2233, %v2241
  %v2244 = vsub.f32 %v2234, %v2242
  %v2245 = vmul.f32 %v2243, %v2243
  %v2246 = vmul.f32 %v2244, %v2244
  %v2247 = vsel %vm143, %v2245, 0.0
  %2248 = vadd.xlane.f32.xlu0 %v2247
  %v2249 = vpop.xlane.xlu0 %2248
  %v2250 = vsel %vm143, %v2246, 0.0
  %2251 = vadd.xlane.f32.xlu0 %v2250
  %v2252 = vpop.xlane.xlu0 %2251
  %v2253 = vmul.f32 %v2249, %v977
  %v2254 = vmul.f32 %v2252, %v977
  %v2255 = vadd.f32 %v2253, 1e-05
  %v2256 = vadd.f32 %v2254, 1e-05
  %v2257 = vrsqrt.pop %v2255
  %v2258 = vrsqrt.pop %v2256
  %v2259 = vmul.f32 %v2243, %v2257
  %v2260 = vmul.f32 %v2244, %v2258
  %v2261 = vlaneseq
  %v2262 = vshrl.u32 %v2261, 7
  %v2263 = vsub.s32 0, %v2262
  %v2264 = vrot.slane %v1211, %v2263
  %v2265 = vmul.f32 %v2259, %v2264
  %v2266 = vmul.f32 %v2260, %v2264
  %v2267 = vlaneseq
  %v2268 = vshrl.u32 %v2267, 7
  %v2269 = vsub.s32 0, %v2268
  %v2270 = vrot.slane %v1212, %v2269
  %v2271 = vadd.f32 %v2265, %v2270
  %v2272 = vadd.f32 %v2266, %v2270
  %v2273 = vmax.f32 %v2271, 0.0
  %v2274 = vmax.f32 %v2272, 0.0
  %v2275 = vpack.c.bf16 %v2274, %v2273
  %v2276 = vld [vmem:[%s10] sm:$0xf]
  %v2277 = vld [vmem:[%s10 + $0x4] sm:$0xf]
  %v2278 = vld [vmem:[%s10 + $0x8] sm:$0xf]
  %v2279 = vld [vmem:[%s10 + $0xc] sm:$0xf]
  %v2280 = vld [vmem:[%s11] sm:$0x1]
  %v2281 = vlaneseq
  %v2282 = vshrl.u32 %v2281, 7
  %v2283 = vsub.s32 0, %v2282
  %v2284 = vrot.slane %v2280, %v2283
  %v2289 = vunpack.c.l.b16 %v2276
  %v2290 = vunpack.c.l.b16 %v2277
  %v2291 = vunpack.c.l.b16 %v2278
  %v2292 = vunpack.c.l.b16 %v2279
  %v2293 = vpack.c.b16 %v2290, %v2289
  %v2294 = vpack.c.b16 %v2292, %v2291
  %v2298 = vsel %vm143, %v2275, 0
  %2300 = vmatprep.subr.bf16.mxu0 0
  %2301 = vmatpush1.bf16.msra.mxu0 0
  %2302 = vmatprep.subr.bf16.mxu0 0
  %2303 = vmatpush1.bf16.msra.mxu0 0
  %2304 = vmatprep.subr.bf16.mxu0 0
  %2305 = vmatpush1.bf16.msra.mxu0 0
  %2306 = vmatprep.subr.bf16.mxu0 0
  %2307 = vmatpush1.bf16.msra.mxu0 0
  %2308 = vmatprep.subr.bf16.mxu0 0
  %2309 = vmatpush1.bf16.msra.mxu0 0
  %2310 = vmatprep.subr.bf16.mxu0 0
  %2311 = vmatpush1.bf16.msra.mxu0 0
  %2312 = vmatprep.subr.bf16.mxu0 0
  %2313 = vmatpush1.bf16.msra.mxu0 %v2294
  %2314 = vmatprep.subr.bf16.mxu0 0
  %2315 = vmatpush1.bf16.msra.mxu0 %v2293
  %2316 = vmatprep.subr.bf16.mxu0 0
  %2317 = vmatpush2.bf16.msra.mxu0 0
  %2318 = vmatprep.subr.bf16.mxu0 0
  %2319 = vmatpush2.bf16.msra.mxu0 0
  %2320 = vmatprep.subr.bf16.mxu0 0
  %2321 = vmatpush2.bf16.msra.mxu0 0
  %2322 = vmatprep.subr.bf16.mxu0 0
  %2323 = vmatpush2.bf16.msra.mxu0 0
  %2324 = vmatprep.subr.bf16.mxu0 0
  %2325 = vmatpush2.bf16.msra.mxu0 0
  %2326 = vmatprep.subr.bf16.mxu0 0
  %2327 = vmatpush2.bf16.msra.mxu0 0
  %2328 = vmatprep.subr.bf16.mxu0 0
  %2329 = vmatpush2.bf16.msra.mxu0 0
  %2330 = vmatprep.subr.bf16.mxu0 0
  %2331 = vmatpush2.bf16.msra.mxu0 0
  %2332 = vmatprep.mubr.bf16.mxu0 0
  %2333 = vmatmul.mubr.bf16.gmra.mxu0 %v2298
  %v2334 = vpop.f32.mrf.mxu0
  %v2335 = vadd.f32 %v2284, %v2334
  %v2336 = vpop.f32.mrf.mxu0
  %v2337 = vpop.f32.mrf.mxu0
  %v2338 = vadd.f32 %v2284, %v2337
  %v2339 = vpop.f32.mrf.mxu0
  %2340 = vdwg.mxu0
  %v2341 = vmax.f32 %v2335, 0.0
  %v2342 = vmax.f32 %v2338, 0.0
  %v2343 = vpack.c.bf16 %v2342, %v2341
  %v2344 = vld [vmem:[%s10] sm:$0xf]
  %v2345 = vld [vmem:[%s10 + $0x4] sm:$0xf]
  %v2346 = vld [vmem:[%s11 + $0x1] sm:$0x1]
  %v2347 = vlaneseq
  %v2348 = vshrl.u32 %v2347, 7
  %v2349 = vsub.s32 0, %v2348
  %v2350 = vrot.slane %v2346, %v2349
  %v2353 = vunpack.c.l.b16 %v2344
  %v2354 = vunpack.c.l.b16 %v2345
  %v2355 = vpack.c.b16 %v2354, %v2353
  %2356 = vrot.lane.b32.xlu0 %v2355, 112
  %v2357 = vpop.permute.xlu0 %2356
  %v2360 = vsel %vm298, %v2343, 0
  %2362 = vmatprep.subr.bf16.mxu0 0
  %2363 = vmatpush1.bf16.msra.mxu0 0
  %2364 = vmatprep.subr.bf16.mxu0 0
  %2365 = vmatpush1.bf16.msra.mxu0 0
  %2366 = vmatprep.subr.bf16.mxu0 0
  %2367 = vmatpush1.bf16.msra.mxu0 0
  %2368 = vmatprep.subr.bf16.mxu0 0
  %2369 = vmatpush1.bf16.msra.mxu0 0
  %2370 = vmatprep.subr.bf16.mxu0 0
  %2371 = vmatpush1.bf16.msra.mxu0 0
  %2372 = vmatprep.subr.bf16.mxu0 0
  %2373 = vmatpush1.bf16.msra.mxu0 0
  %2374 = vmatprep.subr.bf16.mxu0 0
  %2375 = vmatpush1.bf16.msra.mxu0 0
  %2376 = vmatprep.subr.bf16.mxu0 0
  %2377 = vmatpush1.bf16.msra.mxu0 %v2357
  %2378 = vmatprep.subr.bf16.mxu0 0
  %2379 = vmatpush2.bf16.msra.mxu0 0
  %2380 = vmatprep.subr.bf16.mxu0 0
  %2381 = vmatpush2.bf16.msra.mxu0 0
  %2382 = vmatprep.subr.bf16.mxu0 0
  %2383 = vmatpush2.bf16.msra.mxu0 0
  %2384 = vmatprep.subr.bf16.mxu0 0
  %2385 = vmatpush2.bf16.msra.mxu0 0
  %2386 = vmatprep.subr.bf16.mxu0 0
  %2387 = vmatpush2.bf16.msra.mxu0 0
  %2388 = vmatprep.subr.bf16.mxu0 0
  %2389 = vmatpush2.bf16.msra.mxu0 0
  %2390 = vmatprep.subr.bf16.mxu0 0
  %2391 = vmatpush2.bf16.msra.mxu0 0
  %2392 = vmatprep.subr.bf16.mxu0 0
  %2393 = vmatpush2.bf16.msra.mxu0 0
  %2394 = vmatprep.mubr.bf16.mxu0 0
  %2395 = vmatmul.mubr.bf16.gmra.mxu0 %v2360
  %v2396 = vpop.f32.mrf.mxu0
  %v2397 = vadd.f32 %v2350, %v2396
  %v2398 = vpop.f32.mrf.mxu0
  %v2399 = vpop.f32.mrf.mxu0
  %v2400 = vadd.f32 %v2350, %v2399
  %v2401 = vpop.f32.mrf.mxu0
  %2402 = vdwg.mxu0
  %v2403 = vmax.f32 %v2397, 0.0
  %v2404 = vmax.f32 %v2400, 0.0
  %v2405 = vpack.c.bf16 %v2404, %v2403
  %v2406 = vld [vmem:[%s10] sm:$0xf]
  %v2407 = vld [vmem:[%s11 + $0x2] sm:$0x1]
  %v2408 = vlaneseq
  %v2409 = vshrl.u32 %v2408, 7
  %v2410 = vsub.s32 0, %v2409
  %v2411 = vrot.slane %v2407, %v2410
  %v2413 = vunpack.c.l.b16 %v2406
  %v2414 = vpack.c.b16 %v2413, %v2413
  %2415 = vrot.lane.b32.xlu0 %v2414, 104
  %v2416 = vpop.permute.xlu0 %2415
  %v2418 = vsel %vm231, %v2405, 0
  %v2421 = vsel %vm235, %v2416, 0
  %2423 = vmatprep.subr.bf16.mxu0 0
  %2424 = vmatpush1.bf16.msra.mxu0 0
  %2425 = vmatprep.subr.bf16.mxu0 0
  %2426 = vmatpush1.bf16.msra.mxu0 0
  %2427 = vmatprep.subr.bf16.mxu0 0
  %2428 = vmatpush1.bf16.msra.mxu0 0
  %2429 = vmatprep.subr.bf16.mxu0 0
  %2430 = vmatpush1.bf16.msra.mxu0 0
  %2431 = vmatprep.subr.bf16.mxu0 0
  %2432 = vmatpush1.bf16.msra.mxu0 0
  %2433 = vmatprep.subr.bf16.mxu0 0
  %2434 = vmatpush1.bf16.msra.mxu0 0
  %2435 = vmatprep.subr.bf16.mxu0 0
  %2436 = vmatpush1.bf16.msra.mxu0 0
  %2437 = vmatprep.subr.bf16.mxu0 0
  %2438 = vmatpush1.bf16.msra.mxu0 %v2421
  %2439 = vmatprep.subr.bf16.mxu0 0
  %2440 = vmatpush2.bf16.msra.mxu0 0
  %2441 = vmatprep.subr.bf16.mxu0 0
  %2442 = vmatpush2.bf16.msra.mxu0 0
  %2443 = vmatprep.subr.bf16.mxu0 0
  %2444 = vmatpush2.bf16.msra.mxu0 0
  %2445 = vmatprep.subr.bf16.mxu0 0
  %2446 = vmatpush2.bf16.msra.mxu0 0
  %2447 = vmatprep.subr.bf16.mxu0 0
  %2448 = vmatpush2.bf16.msra.mxu0 0
  %2449 = vmatprep.subr.bf16.mxu0 0
  %2450 = vmatpush2.bf16.msra.mxu0 0
  %2451 = vmatprep.subr.bf16.mxu0 0
  %2452 = vmatpush2.bf16.msra.mxu0 0
  %2453 = vmatprep.subr.bf16.mxu0 0
  %2454 = vmatpush2.bf16.msra.mxu0 0
  %2455 = vmatprep.mubr.bf16.mxu0 0
  %2456 = vmatmul.mubr.bf16.gmra.mxu0 %v2418
  %v2457 = vpop.f32.mrf.mxu0
  %v2458 = vadd.f32 %v2411, %v2457
  %v2459 = vpop.f32.mrf.mxu0
  %v2460 = vpop.f32.mrf.mxu0
  %v2461 = vadd.f32 %v2411, %v2460
  %v2462 = vpop.f32.mrf.mxu0
  %2463 = vdwg.mxu0
  %vm2464 = vcmask 39936
  %2465 = vst.msk [vmem:[%s12] sm:$0xff] %vm2464, %v2458
  %2466 = vst.msk [vmem:[%s12 + $0x8] sm:$0xff] %vm2464, %v2461
  // Predicated region
  $region50: #{graph_transformer_net_forward.1} parent=0 // pred_check
    _
  $region51: #{graph_transformer_net_forward.1} parent=0 // pred_check_branch
    %2468 = sbr.rel (0) target = $region53
  $region52: #{graph_transformer_net_forward.1} parent=0 // pred_region
    _
  $region53: #{graph_transformer_net_forward.1} parent=0 // pred_fallthru
    _
  // Predicated region
  $region54: #{graph_transformer_net_forward.1} parent=0 // pred_check
    _
  $region55: #{graph_transformer_net_forward.1} parent=0 // pred_check_branch
    %2470 = sbr.rel (0) target = $region57
  $region56: #{graph_transformer_net_forward.1} parent=0 // pred_region
    _
  $region57: #{graph_transformer_net_forward.1} parent=0 // pred_fallthru
    _

</llo_original>
